<compile_context>
chip_gen: v5e
topology: v5e:2x2
jax: 0.10.0
libtpu: 0.0.40
codegen_flags: <defaults>
</compile_context>

<pallas_src>
import jax
import jax.numpy as jnp
from jax import lax
from jax.experimental import pallas as pl
from jax.experimental.pallas import tpu as pltpu


def make_skconv_kernel(H, W, C, M, kmax, TH, n_strips, compute_dtype):
    """Fused per-batch SKConv kernel for static shapes."""
    HW = H * W
    THW = TH * W
    MC = M * C
    KKC = kmax * kmax * C

    def kernel(xpad_ref, wpack_ref, convb_ref, fcw_ref, fcb_ref,
               fcsw_ref, fcsb_ref, o_ref, feas_ref):
        # ---- phase 1: strip-tiled im2col + one packed matmul per strip -----
        #      (all M branches along the N axis); GAP accumulated on the fly,
        #      so fea_U is never materialized.
        def strip_body(s, gap):
            base = pl.multiple_of(s * TH, TH)
            cols = []
            for kh in range(kmax):
                for kw in range(kmax):
                    # Per-tap ref slice (view) of the padded slab.
                    cols.append(xpad_ref[0, pl.ds(base + kh, TH), kw:kw + W, :])
            patches = jnp.concatenate(cols, axis=-1).reshape(THW, KKC)
            fea = jnp.dot(patches, wpack_ref[...],
                          preferred_element_type=jnp.float32)     # (THW, M*C)
            fea = jnp.maximum(fea + convb_ref[...], 0.0)          # bias + ReLU
            feas_ref[s] = fea.astype(feas_ref.dtype)
            return gap + jnp.sum(fea, axis=0, keepdims=True)      # (1, M*C)

        gap = lax.fori_loop(0, n_strips, strip_body,
                            jnp.zeros((1, MC), jnp.float32))

        # ---- phase 2: squeeze -- GAP over branches + HW, then fc -----------
        fea_s = gap[:, 0:C]
        for m in range(1, M):
            fea_s = fea_s + gap[:, m * C:(m + 1) * C]
        fea_s = fea_s * (1.0 / HW)                                 # (1, C)
        fea_z = (jnp.dot(fea_s.astype(compute_dtype), fcw_ref[...],
                         preferred_element_type=jnp.float32)
                 + fcb_ref[...])                                   # (1, d)

        # ---- phase 3: excitation -- all branch logits in one matmul,
        #      softmax over the branch axis (EUP recip + one Newton step). ---
        logits = (jnp.dot(fea_z.astype(compute_dtype), fcsw_ref[...],
                          preferred_element_type=jnp.float32)
                  + fcsb_ref[...])                                 # (1, M*C)
        vmax = logits[:, 0:C]
        for m in range(1, M):
            vmax = jnp.maximum(vmax, logits[:, m * C:(m + 1) * C])
        exps = [jnp.exp(logits[:, m * C:(m + 1) * C] - vmax) for m in range(M)]
        denom = exps[0]
        for m in range(1, M):
            denom = denom + exps[m]
        inv = pl.reciprocal(denom, approx=True)       # EUP
        inv = inv * (2.0 - denom * inv)               # Newton step -> f32 acc

        # ---- phase 4: select -- single accumulated output store ------------
        acc = feas_ref[:, :, 0:C].astype(jnp.float32) * (exps[0] * inv)
        for m in range(1, M):
            acc = acc + (feas_ref[:, :, m * C:(m + 1) * C].astype(jnp.float32)
                         * (exps[m] * inv))
        o_ref[0] = acc.astype(o_ref.dtype)

    return kernel


def skconv_forward_pallas(x_nchw, params, *, G, M, compute_dtype=jnp.bfloat16):
    """SKConv forward. Input/output NCHW (PyTorch convention).

    compute_dtype=jnp.bfloat16 (default) uses the bf16 MXU path with f32
    accumulation; pass jnp.float32 for tight-tolerance validation.
    """
    B, C, H, W = x_nchw.shape
    assert C % G == 0
    cg = C // G
    d = params["fc_w"].shape[1]
    ksizes = tuple(3 + 2 * i for i in range(M))
    kmax = ksizes[-1]
    pad = kmax // 2

    x = jnp.transpose(x_nchw, (0, 2, 3, 1))                        # -> NHWC
    xpad = jnp.pad(x, ((0, 0), (pad, pad), (pad, pad), (0, 0))
                   ).astype(compute_dtype)
    Hp, Wp = H + 2 * pad, W + 2 * pad

    # ---- strip size: largest divisor of H whose im2col temp fits ~4 MiB ----
    itemsize = jnp.dtype(compute_dtype).itemsize
    TH = 1
    for cand in range(1, H + 1):
        if H % cand == 0 and cand * W * kmax * kmax * C * itemsize <= (4 << 20):
            TH = cand
    n_strips = H // TH
    THW = TH * W

    # ---- packed im2col weight (kmax^2*C, M*C): groups densified block-diag,
    #      branch m's k x k taps embedded centered in the kmax x kmax grid,
    #      branches stacked along the output (N) axis. -----------------------
    # TODO(synk): for cg >= 128 switch to a per-group contraction instead of
    # the block-diagonal densification (it wastes a G-fold factor of MXU
    # FLOPs / weight VMEM; acceptable here because cg is tiny).
    w_pack = jnp.zeros((kmax, kmax, C, M * C), jnp.float32)
    for m in range(M):
        k = ksizes[m]
        off = (kmax - k) // 2
        w = params["conv_w"][m].astype(jnp.float32)                # (k,k,cg,C)
        dense = jnp.zeros((k, k, C, C), jnp.float32)
        for g in range(G):
            dense = dense.at[:, :, g * cg:(g + 1) * cg,
                             g * cg:(g + 1) * cg].set(
                                 w[:, :, :, g * cg:(g + 1) * cg])
        w_pack = w_pack.at[off:off + k, off:off + k, :,
                           m * C:(m + 1) * C].set(dense)
    w_pack = w_pack.reshape(kmax * kmax * C, M * C).astype(compute_dtype)

    conv_b = jnp.concatenate([params["conv_b"][m].reshape(1, C)
                              for m in range(M)], axis=1).astype(jnp.float32)
    fc_w = params["fc_w"].astype(compute_dtype)                    # (C, d)
    fc_b = params["fc_b"].reshape(1, d).astype(jnp.float32)
    fcs_w = jnp.concatenate([params["fcs_w"][m] for m in range(M)],
                            axis=1).astype(compute_dtype)          # (d, M*C)
    fcs_b = jnp.concatenate([params["fcs_b"][m].reshape(1, C)
                             for m in range(M)], axis=1).astype(jnp.float32)
    weight_args = (w_pack, conv_b, fc_w, fc_b, fcs_w, fcs_b)

    # ---- VMEM budget: ~3/4 of physical (96 MiB v5e/v6e, 48 MiB v7x) --------
    try:
        vmem_limit = int(pltpu.get_tpu_info().vmem_capacity_bytes * 3 // 4)
    except Exception:
        vmem_limit = 48 * 1024 * 1024
    vmem_limit = max(32 * 1024 * 1024, min(vmem_limit, 100 * 1024 * 1024))

    kernel = make_skconv_kernel(H, W, C, M, kmax, TH, n_strips, compute_dtype)

    def _run(single_buffer_weights):
        in_specs = [pl.BlockSpec((1, Hp, Wp, C), lambda b: (b, 0, 0, 0))]
        for arr in weight_args:
            idx = lambda b, n=arr.ndim: (0,) * n                   # resident
            if single_buffer_weights:
                spec = pl.BlockSpec(arr.shape, idx,
                                    pipeline_mode=pl.Buffered(1))
            else:
                spec = pl.BlockSpec(arr.shape, idx)
            in_specs.append(spec)
        return pl.pallas_call(
            kernel,
            out_shape=jax.ShapeDtypeStruct((B, n_strips, THW, C), jnp.float32),
            grid_spec=pltpu.PrefetchScalarGridSpec(
                num_scalar_prefetch=0,
                grid=(B,),                                         # per-batch steps
                in_specs=in_specs,
                out_specs=pl.BlockSpec((1, n_strips, THW, C),
                                       lambda b: (b, 0, 0, 0)),
                scratch_shapes=[pltpu.VMEM((n_strips, THW, M * C),
                                           compute_dtype)],        # branch feas
            ),
            compiler_params=pltpu.CompilerParams(
                # TODO(synk): consider pltpu.CORE_PARALLEL on a v7x-only build
                # to explicitly balance the two TensorCores for odd B.
                dimension_semantics=("parallel",),
                vmem_limit_bytes=vmem_limit,
            ),
        )(xpad, *weight_args)

    try:
        out = _run(single_buffer_weights=True)
    except Exception:
        # pipeline_mode=pl.Buffered(1) unsupported on this JAX build; constant
        # index_maps still keep the weights resident (just double-buffered).
        out = _run(single_buffer_weights=False)

    # TODO(synk): for C < 128 present a lane-dense output slab (e.g. flatten
    # W*C when it is a multiple of 128) to avoid masked vst in the epilogue.
    out = out.reshape(B, H, W, C)
    return jnp.transpose(out, (0, 3, 1, 2))                        # -> NCHW


def skconv_forward_reference(x_nchw, params, *, G, M):
    """Pure-JAX reference (mirrors the PyTorch module)."""
    x = jnp.transpose(x_nchw, (0, 2, 3, 1))                        # NHWC
    ksizes = tuple(3 + 2 * i for i in range(M))
    feas = []
    for m in range(M):
        k = ksizes[m]
        p = k // 2
        y = lax.conv_general_dilated(
            x, params["conv_w"][m], window_strides=(1, 1),
            padding=[(p, p), (p, p)],
            dimension_numbers=("NHWC", "HWIO", "NHWC"),
            feature_group_count=G)
        feas.append(jax.nn.relu(y + params["conv_b"][m]))
    feas = jnp.stack(feas, axis=1)                                 # (B,M,H,W,C)
    fea_U = feas.sum(axis=1)
    fea_s = fea_U.mean(axis=(1, 2))                                # (B,C)
    fea_z = fea_s @ params["fc_w"] + params["fc_b"]
    vecs = jnp.stack([fea_z @ params["fcs_w"][m] + params["fcs_b"][m]
                      for m in range(M)], axis=1)                  # (B,M,C)
    attn = jax.nn.softmax(vecs, axis=1)
    fea_v = (feas * attn[:, :, None, None, :]).sum(axis=1)         # (B,H,W,C)
    return jnp.transpose(fea_v, (0, 3, 1, 2))


if __name__ == "__main__":
    # Small shapes consistent with the module: features=16, G=4, M=2, r=2, L=8
    B, C, H, W = 2, 16, 8, 8
    G, M, r, L = 4, 2, 2, 8
    d = max(C // r, L)
    cg = C // G
    ksizes = tuple(3 + 2 * i for i in range(M))

    key = jax.random.PRNGKey(0)
    keys = jax.random.split(key, 3 + 4 * M)
    ki = iter(range(len(keys)))

    params = {
        "conv_w": [0.1 * jax.random.normal(keys[next(ki)], (k, k, cg, C),
                                           jnp.float32) for k in ksizes],
        "conv_b": [0.1 * jax.random.normal(keys[next(ki)], (C,), jnp.float32)
                   for _ in range(M)],
        "fc_w": 0.1 * jax.random.normal(keys[next(ki)], (C, d), jnp.float32),
        "fc_b": 0.1 * jax.random.normal(keys[next(ki)], (d,), jnp.float32),
        "fcs_w": [0.1 * jax.random.normal(keys[next(ki)], (d, C), jnp.float32)
                  for _ in range(M)],
        "fcs_b": [0.1 * jax.random.normal(keys[next(ki)], (C,), jnp.float32)
                  for _ in range(M)],
    }
    x = jax.random.normal(keys[next(ki)], (B, C, H, W), jnp.float32)

    ref = skconv_forward_reference(x, params, G=G, M=M)

    # f32 path: tight-tolerance correctness check.
    out_f32 = skconv_forward_pallas(x, params, G=G, M=M,
                                    compute_dtype=jnp.float32)
    out_f32 = jax.block_until_ready(out_f32)
    assert out_f32.shape == (B, C, H, W), out_f32.shape
    if not jnp.allclose(out_f32, ref, atol=1e-3, rtol=1e-3):
        max_err = jnp.max(jnp.abs(out_f32 - ref))
        raise AssertionError(f"Pallas SKConv (f32) mismatch, max abs err = {max_err}")

    # Default bf16 MXU path (f32 accumulation): looser tolerance.
    out_bf16 = skconv_forward_pallas(x, params, G=G, M=M)
    out_bf16 = jax.block_until_ready(out_bf16)
    assert out_bf16.shape == (B, C, H, W), out_bf16.shape
    if not jnp.allclose(out_bf16, ref, atol=7e-2, rtol=5e-2):
        max_err = jnp.max(jnp.abs(out_bf16 - ref))
        raise AssertionError(f"Pallas SKConv (bf16) mismatch, max abs err = {max_err}")

    print("KERNEL_OK")
</pallas_src>

<mosaic_0001>
module attributes {stable_mosaic.version = 11 : i64} {
  func.func @kernel(%arg0: i32, %arg1: memref<1x12x12x16xf32, #tpu.memory_space<vmem>>, %arg2: memref<400x32xf32, #tpu.memory_space<vmem>>, %arg3: memref<1x32xf32, #tpu.memory_space<vmem>>, %arg4: memref<16x8xf32, #tpu.memory_space<vmem>>, %arg5: memref<1x8xf32, #tpu.memory_space<vmem>>, %arg6: memref<8x32xf32, #tpu.memory_space<vmem>>, %arg7: memref<1x32xf32, #tpu.memory_space<vmem>>, %arg8: memref<1x1x64x16xf32, #tpu.memory_space<vmem>>, %arg9: memref<1x64x32xf32, #tpu.memory_space<vmem>>) attributes {dimension_semantics = [#tpu.dimension_semantics<parallel>], iteration_bounds = array<i64: 2>, scalar_prefetch = 0 : i64, scratch_operands = 1 : i64, tpu.core_type = #tpu.core_type<tc>, window_params = [{transform_indices = @transform_0, window_bounds = array<i64: 1, 12, 12, 16>}, {pipeline_mode = #tpu.pipeline_mode<synchronous>, transform_indices = @transform_1, window_bounds = array<i64: 400, 32>}, {pipeline_mode = #tpu.pipeline_mode<synchronous>, transform_indices = @transform_2, window_bounds = array<i64: 1, 32>}, {pipeline_mode = #tpu.pipeline_mode<synchronous>, transform_indices = @transform_3, window_bounds = array<i64: 16, 8>}, {pipeline_mode = #tpu.pipeline_mode<synchronous>, transform_indices = @transform_4, window_bounds = array<i64: 1, 8>}, {pipeline_mode = #tpu.pipeline_mode<synchronous>, transform_indices = @transform_5, window_bounds = array<i64: 8, 32>}, {pipeline_mode = #tpu.pipeline_mode<synchronous>, transform_indices = @transform_6, window_bounds = array<i64: 1, 32>}, {transform_indices = @transform_7, window_bounds = array<i64: 1, 1, 64, 16>}]} {
    %cst = arith.constant 0.000000e+00 : f32
    %0 = vector.broadcast %cst : f32 to vector<1x32xf32>
    %c0_i32 = arith.constant 0 : i32
    %c8_i32 = arith.constant 8 : i32
    %1 = arith.muli %c0_i32, %c8_i32 : i32
    %2 = tpu.assume_multiple %1, 8 : i32
    %c0_i32_0 = arith.constant 0 : i32
    %3 = arith.addi %2, %c0_i32_0 : i32
    %c0 = arith.constant 0 : index
    %4 = arith.index_cast %3 : i32 to index
    %c0_1 = arith.constant 0 : index
    %c0_2 = arith.constant 0 : index
    %5 = vector.load %arg1[%c0, %4, %c0_1, %c0_2] : memref<1x12x12x16xf32, #tpu.memory_space<vmem>>, vector<1x8x8x16xf32>
    %6 = vector.shape_cast %5 : vector<1x8x8x16xf32> to vector<8x8x16xf32>
    %c0_i32_3 = arith.constant 0 : i32
    %7 = arith.addi %2, %c0_i32_3 : i32
    %c0_4 = arith.constant 0 : index
    %8 = arith.index_cast %7 : i32 to index
    %c1 = arith.constant 1 : index
    %c0_5 = arith.constant 0 : index
    %9 = vector.load %arg1[%c0_4, %8, %c1, %c0_5] : memref<1x12x12x16xf32, #tpu.memory_space<vmem>>, vector<1x8x8x16xf32>
    %10 = vector.shape_cast %9 : vector<1x8x8x16xf32> to vector<8x8x16xf32>
    %c0_i32_6 = arith.constant 0 : i32
    %11 = arith.addi %2, %c0_i32_6 : i32
    %c0_7 = arith.constant 0 : index
    %12 = arith.index_cast %11 : i32 to index
    %c2 = arith.constant 2 : index
    %c0_8 = arith.constant 0 : index
    %13 = vector.load %arg1[%c0_7, %12, %c2, %c0_8] : memref<1x12x12x16xf32, #tpu.memory_space<vmem>>, vector<1x8x8x16xf32>
    %14 = vector.shape_cast %13 : vector<1x8x8x16xf32> to vector<8x8x16xf32>
    %c0_i32_9 = arith.constant 0 : i32
    %15 = arith.addi %2, %c0_i32_9 : i32
    %c0_10 = arith.constant 0 : index
    %16 = arith.index_cast %15 : i32 to index
    %c3 = arith.constant 3 : index
    %c0_11 = arith.constant 0 : index
    %17 = vector.load %arg1[%c0_10, %16, %c3, %c0_11] : memref<1x12x12x16xf32, #tpu.memory_space<vmem>>, vector<1x8x8x16xf32>
    %18 = vector.shape_cast %17 : vector<1x8x8x16xf32> to vector<8x8x16xf32>
    %c0_i32_12 = arith.constant 0 : i32
    %19 = arith.addi %2, %c0_i32_12 : i32
    %c0_13 = arith.constant 0 : index
    %20 = arith.index_cast %19 : i32 to index
    %c4 = arith.constant 4 : index
    %c0_14 = arith.constant 0 : index
    %21 = vector.load %arg1[%c0_13, %20, %c4, %c0_14] : memref<1x12x12x16xf32, #tpu.memory_space<vmem>>, vector<1x8x8x16xf32>
    %22 = vector.shape_cast %21 : vector<1x8x8x16xf32> to vector<8x8x16xf32>
    %c1_i32 = arith.constant 1 : i32
    %23 = arith.addi %2, %c1_i32 : i32
    %c0_15 = arith.constant 0 : index
    %24 = arith.index_cast %23 : i32 to index
    %c0_16 = arith.constant 0 : index
    %c0_17 = arith.constant 0 : index
    %25 = vector.load %arg1[%c0_15, %24, %c0_16, %c0_17] : memref<1x12x12x16xf32, #tpu.memory_space<vmem>>, vector<1x8x8x16xf32>
    %26 = vector.shape_cast %25 : vector<1x8x8x16xf32> to vector<8x8x16xf32>
    %c1_i32_18 = arith.constant 1 : i32
    %27 = arith.addi %2, %c1_i32_18 : i32
    %c0_19 = arith.constant 0 : index
    %28 = arith.index_cast %27 : i32 to index
    %c1_20 = arith.constant 1 : index
    %c0_21 = arith.constant 0 : index
    %29 = vector.load %arg1[%c0_19, %28, %c1_20, %c0_21] : memref<1x12x12x16xf32, #tpu.memory_space<vmem>>, vector<1x8x8x16xf32>
    %30 = vector.shape_cast %29 : vector<1x8x8x16xf32> to vector<8x8x16xf32>
    %c1_i32_22 = arith.constant 1 : i32
    %31 = arith.addi %2, %c1_i32_22 : i32
    %c0_23 = arith.constant 0 : index
    %32 = arith.index_cast %31 : i32 to index
    %c2_24 = arith.constant 2 : index
    %c0_25 = arith.constant 0 : index
    %33 = vector.load %arg1[%c0_23, %32, %c2_24, %c0_25] : memref<1x12x12x16xf32, #tpu.memory_space<vmem>>, vector<1x8x8x16xf32>
    %34 = vector.shape_cast %33 : vector<1x8x8x16xf32> to vector<8x8x16xf32>
    %c1_i32_26 = arith.constant 1 : i32
    %35 = arith.addi %2, %c1_i32_26 : i32
    %c0_27 = arith.constant 0 : index
    %36 = arith.index_cast %35 : i32 to index
    %c3_28 = arith.constant 3 : index
    %c0_29 = arith.constant 0 : index
    %37 = vector.load %arg1[%c0_27, %36, %c3_28, %c0_29] : memref<1x12x12x16xf32, #tpu.memory_space<vmem>>, vector<1x8x8x16xf32>
    %38 = vector.shape_cast %37 : vector<1x8x8x16xf32> to vector<8x8x16xf32>
    %c1_i32_30 = arith.constant 1 : i32
    %39 = arith.addi %2, %c1_i32_30 : i32
    %c0_31 = arith.constant 0 : index
    %40 = arith.index_cast %39 : i32 to index
    %c4_32 = arith.constant 4 : index
    %c0_33 = arith.constant 0 : index
    %41 = vector.load %arg1[%c0_31, %40, %c4_32, %c0_33] : memref<1x12x12x16xf32, #tpu.memory_space<vmem>>, vector<1x8x8x16xf32>
    %42 = vector.shape_cast %41 : vector<1x8x8x16xf32> to vector<8x8x16xf32>
    %c2_i32 = arith.constant 2 : i32
    %43 = arith.addi %2, %c2_i32 : i32
    %c0_34 = arith.constant 0 : index
    %44 = arith.index_cast %43 : i32 to index
    %c0_35 = arith.constant 0 : index
    %c0_36 = arith.constant 0 : index
    %45 = vector.load %arg1[%c0_34, %44, %c0_35, %c0_36] : memref<1x12x12x16xf32, #tpu.memory_space<vmem>>, vector<1x8x8x16xf32>
    %46 = vector.shape_cast %45 : vector<1x8x8x16xf32> to vector<8x8x16xf32>
    %c2_i32_37 = arith.constant 2 : i32
    %47 = arith.addi %2, %c2_i32_37 : i32
    %c0_38 = arith.constant 0 : index
    %48 = arith.index_cast %47 : i32 to index
    %c1_39 = arith.constant 1 : index
    %c0_40 = arith.constant 0 : index
    %49 = vector.load %arg1[%c0_38, %48, %c1_39, %c0_40] : memref<1x12x12x16xf32, #tpu.memory_space<vmem>>, vector<1x8x8x16xf32>
    %50 = vector.shape_cast %49 : vector<1x8x8x16xf32> to vector<8x8x16xf32>
    %c2_i32_41 = arith.constant 2 : i32
    %51 = arith.addi %2, %c2_i32_41 : i32
    %c0_42 = arith.constant 0 : index
    %52 = arith.index_cast %51 : i32 to index
    %c2_43 = arith.constant 2 : index
    %c0_44 = arith.constant 0 : index
    %53 = vector.load %arg1[%c0_42, %52, %c2_43, %c0_44] : memref<1x12x12x16xf32, #tpu.memory_space<vmem>>, vector<1x8x8x16xf32>
    %54 = vector.shape_cast %53 : vector<1x8x8x16xf32> to vector<8x8x16xf32>
    %c2_i32_45 = arith.constant 2 : i32
    %55 = arith.addi %2, %c2_i32_45 : i32
    %c0_46 = arith.constant 0 : index
    %56 = arith.index_cast %55 : i32 to index
    %c3_47 = arith.constant 3 : index
    %c0_48 = arith.constant 0 : index
    %57 = vector.load %arg1[%c0_46, %56, %c3_47, %c0_48] : memref<1x12x12x16xf32, #tpu.memory_space<vmem>>, vector<1x8x8x16xf32>
    %58 = vector.shape_cast %57 : vector<1x8x8x16xf32> to vector<8x8x16xf32>
    %c2_i32_49 = arith.constant 2 : i32
    %59 = arith.addi %2, %c2_i32_49 : i32
    %c0_50 = arith.constant 0 : index
    %60 = arith.index_cast %59 : i32 to index
    %c4_51 = arith.constant 4 : index
    %c0_52 = arith.constant 0 : index
    %61 = vector.load %arg1[%c0_50, %60, %c4_51, %c0_52] : memref<1x12x12x16xf32, #tpu.memory_space<vmem>>, vector<1x8x8x16xf32>
    %62 = vector.shape_cast %61 : vector<1x8x8x16xf32> to vector<8x8x16xf32>
    %c3_i32 = arith.constant 3 : i32
    %63 = arith.addi %2, %c3_i32 : i32
    %c0_53 = arith.constant 0 : index
    %64 = arith.index_cast %63 : i32 to index
    %c0_54 = arith.constant 0 : index
    %c0_55 = arith.constant 0 : index
    %65 = vector.load %arg1[%c0_53, %64, %c0_54, %c0_55] : memref<1x12x12x16xf32, #tpu.memory_space<vmem>>, vector<1x8x8x16xf32>
    %66 = vector.shape_cast %65 : vector<1x8x8x16xf32> to vector<8x8x16xf32>
    %c3_i32_56 = arith.constant 3 : i32
    %67 = arith.addi %2, %c3_i32_56 : i32
    %c0_57 = arith.constant 0 : index
    %68 = arith.index_cast %67 : i32 to index
    %c1_58 = arith.constant 1 : index
    %c0_59 = arith.constant 0 : index
    %69 = vector.load %arg1[%c0_57, %68, %c1_58, %c0_59] : memref<1x12x12x16xf32, #tpu.memory_space<vmem>>, vector<1x8x8x16xf32>
    %70 = vector.shape_cast %69 : vector<1x8x8x16xf32> to vector<8x8x16xf32>
    %c3_i32_60 = arith.constant 3 : i32
    %71 = arith.addi %2, %c3_i32_60 : i32
    %c0_61 = arith.constant 0 : index
    %72 = arith.index_cast %71 : i32 to index
    %c2_62 = arith.constant 2 : index
    %c0_63 = arith.constant 0 : index
    %73 = vector.load %arg1[%c0_61, %72, %c2_62, %c0_63] : memref<1x12x12x16xf32, #tpu.memory_space<vmem>>, vector<1x8x8x16xf32>
    %74 = vector.shape_cast %73 : vector<1x8x8x16xf32> to vector<8x8x16xf32>
    %c3_i32_64 = arith.constant 3 : i32
    %75 = arith.addi %2, %c3_i32_64 : i32
    %c0_65 = arith.constant 0 : index
    %76 = arith.index_cast %75 : i32 to index
    %c3_66 = arith.constant 3 : index
    %c0_67 = arith.constant 0 : index
    %77 = vector.load %arg1[%c0_65, %76, %c3_66, %c0_67] : memref<1x12x12x16xf32, #tpu.memory_space<vmem>>, vector<1x8x8x16xf32>
    %78 = vector.shape_cast %77 : vector<1x8x8x16xf32> to vector<8x8x16xf32>
    %c3_i32_68 = arith.constant 3 : i32
    %79 = arith.addi %2, %c3_i32_68 : i32
    %c0_69 = arith.constant 0 : index
    %80 = arith.index_cast %79 : i32 to index
    %c4_70 = arith.constant 4 : index
    %c0_71 = arith.constant 0 : index
    %81 = vector.load %arg1[%c0_69, %80, %c4_70, %c0_71] : memref<1x12x12x16xf32, #tpu.memory_space<vmem>>, vector<1x8x8x16xf32>
    %82 = vector.shape_cast %81 : vector<1x8x8x16xf32> to vector<8x8x16xf32>
    %c4_i32 = arith.constant 4 : i32
    %83 = arith.addi %2, %c4_i32 : i32
    %c0_72 = arith.constant 0 : index
    %84 = arith.index_cast %83 : i32 to index
    %c0_73 = arith.constant 0 : index
    %c0_74 = arith.constant 0 : index
    %85 = vector.load %arg1[%c0_72, %84, %c0_73, %c0_74] : memref<1x12x12x16xf32, #tpu.memory_space<vmem>>, vector<1x8x8x16xf32>
    %86 = vector.shape_cast %85 : vector<1x8x8x16xf32> to vector<8x8x16xf32>
    %c4_i32_75 = arith.constant 4 : i32
    %87 = arith.addi %2, %c4_i32_75 : i32
    %c0_76 = arith.constant 0 : index
    %88 = arith.index_cast %87 : i32 to index
    %c1_77 = arith.constant 1 : index
    %c0_78 = arith.constant 0 : index
    %89 = vector.load %arg1[%c0_76, %88, %c1_77, %c0_78] : memref<1x12x12x16xf32, #tpu.memory_space<vmem>>, vector<1x8x8x16xf32>
    %90 = vector.shape_cast %89 : vector<1x8x8x16xf32> to vector<8x8x16xf32>
    %c4_i32_79 = arith.constant 4 : i32
    %91 = arith.addi %2, %c4_i32_79 : i32
    %c0_80 = arith.constant 0 : index
    %92 = arith.index_cast %91 : i32 to index
    %c2_81 = arith.constant 2 : index
    %c0_82 = arith.constant 0 : index
    %93 = vector.load %arg1[%c0_80, %92, %c2_81, %c0_82] : memref<1x12x12x16xf32, #tpu.memory_space<vmem>>, vector<1x8x8x16xf32>
    %94 = vector.shape_cast %93 : vector<1x8x8x16xf32> to vector<8x8x16xf32>
    %c4_i32_83 = arith.constant 4 : i32
    %95 = arith.addi %2, %c4_i32_83 : i32
    %c0_84 = arith.constant 0 : index
    %96 = arith.index_cast %95 : i32 to index
    %c3_85 = arith.constant 3 : index
    %c0_86 = arith.constant 0 : index
    %97 = vector.load %arg1[%c0_84, %96, %c3_85, %c0_86] : memref<1x12x12x16xf32, #tpu.memory_space<vmem>>, vector<1x8x8x16xf32>
    %98 = vector.shape_cast %97 : vector<1x8x8x16xf32> to vector<8x8x16xf32>
    %c4_i32_87 = arith.constant 4 : i32
    %99 = arith.addi %2, %c4_i32_87 : i32
    %c0_88 = arith.constant 0 : index
    %100 = arith.index_cast %99 : i32 to index
    %c4_89 = arith.constant 4 : index
    %c0_90 = arith.constant 0 : index
    %101 = vector.load %arg1[%c0_88, %100, %c4_89, %c0_90] : memref<1x12x12x16xf32, #tpu.memory_space<vmem>>, vector<1x8x8x16xf32>
    %102 = vector.shape_cast %101 : vector<1x8x8x16xf32> to vector<8x8x16xf32>
    %103 = tpu.concatenate %6, %10, %14, %18, %22, %26, %30, %34, %38, %42, %46, %50, %54, %58, %62, %66 in 2 : vector<8x8x16xf32>, vector<8x8x16xf32>, vector<8x8x16xf32>, vector<8x8x16xf32>, vector<8x8x16xf32>, vector<8x8x16xf32>, vector<8x8x16xf32>, vector<8x8x16xf32>, vector<8x8x16xf32>, vector<8x8x16xf32>, vector<8x8x16xf32>, vector<8x8x16xf32>, vector<8x8x16xf32>, vector<8x8x16xf32>, vector<8x8x16xf32>, vector<8x8x16xf32> -> vector<8x8x256xf32>
    %104 = tpu.concatenate %70, %74, %78, %82, %86, %90, %94, %98, %102 in 2 : vector<8x8x16xf32>, vector<8x8x16xf32>, vector<8x8x16xf32>, vector<8x8x16xf32>, vector<8x8x16xf32>, vector<8x8x16xf32>, vector<8x8x16xf32>, vector<8x8x16xf32>, vector<8x8x16xf32> -> vector<8x8x144xf32>
    %105 = tpu.concatenate %103, %104 in 2 : vector<8x8x256xf32>, vector<8x8x144xf32> -> vector<8x8x400xf32>
    %106 = vector.shape_cast %105 : vector<8x8x400xf32> to vector<64x400xf32>
    %c0_91 = arith.constant 0 : index
    %c0_92 = arith.constant 0 : index
    %107 = vector.load %arg2[%c0_91, %c0_92] : memref<400x32xf32, #tpu.memory_space<vmem>>, vector<400x32xf32>
    %cst_93 = arith.constant dense<0.000000e+00> : vector<64x32xf32>
    %108 = tpu.matmul %106, %107, %cst_93 {dimension_numbers = #tpu.dot_dimension_numbers<[1], [0], [0], [1], [0, 0, 1, 1], [], []>} : vector<64x400xf32>, vector<400x32xf32>, vector<64x32xf32> -> vector<64x32xf32>
    %c0_94 = arith.constant 0 : index
    %c0_95 = arith.constant 0 : index
    %109 = vector.load %arg3[%c0_94, %c0_95] : memref<1x32xf32, #tpu.memory_space<vmem>>, vector<1x32xf32>
    %110 = vector.broadcast %109 : vector<1x32xf32> to vector<64x32xf32>
    %111 = arith.addf %108, %110 : vector<64x32xf32>
    %cst_96 = arith.constant 0.000000e+00 : f32
    %112 = vector.broadcast %cst_96 : f32 to vector<64x32xf32>
    %113 = arith.maximumf %111, %112 : vector<64x32xf32>
    %114 = arith.index_cast %c0_i32 : i32 to index
    %c0_97 = arith.constant 0 : index
    %c0_98 = arith.constant 0 : index
    %115 = vector.load %arg9[%114, %c0_97, %c0_98] : memref<1x64x32xf32, #tpu.memory_space<vmem>>, vector<1x64x32xf32>
    %116 = vector.shape_cast %115 : vector<1x64x32xf32> to vector<64x32xf32>
    %117 = vector.shape_cast %113 : vector<64x32xf32> to vector<1x64x32xf32>
    tpu.vector_store %arg9[%114, %c0_97, %c0_98], %117 {strides = array<i32>} : memref<1x64x32xf32, #tpu.memory_space<vmem>>, vector<1x64x32xf32>,
    %cst_99 = arith.constant dense<0.000000e+00> : vector<32xf32>
    %118 = vector.multi_reduction <add>, %113, %cst_99 [0] : vector<64x32xf32> to vector<32xf32>
    %119 = vector.shape_cast %118 : vector<32xf32> to vector<1x32xf32>
    %120 = arith.addf %0, %119 : vector<1x32xf32>
    %c1_i32_100 = arith.constant 1 : i32
    %121 = vector.extract_strided_slice %120 {offsets = [0, 0], sizes = [1, 16], strides = [1, 1]} : vector<1x32xf32> to vector<1x16xf32>
    %122 = vector.extract_strided_slice %120 {offsets = [0, 16], sizes = [1, 16], strides = [1, 1]} : vector<1x32xf32> to vector<1x16xf32>
    %123 = arith.addf %121, %122 : vector<1x16xf32>
    %cst_101 = arith.constant 1.562500e-02 : f32
    %124 = vector.broadcast %cst_101 : f32 to vector<1x16xf32>
    %125 = arith.mulf %123, %124 : vector<1x16xf32>
    %c0_102 = arith.constant 0 : index
    %c0_103 = arith.constant 0 : index
    %126 = vector.load %arg4[%c0_102, %c0_103] : memref<16x8xf32, #tpu.memory_space<vmem>>, vector<16x8xf32>
    %cst_104 = arith.constant dense<0.000000e+00> : vector<1x8xf32>
    %127 = tpu.matmul %125, %126, %cst_104 {dimension_numbers = #tpu.dot_dimension_numbers<[1], [0], [0], [1], [0, 0, 1, 1], [], []>} : vector<1x16xf32>, vector<16x8xf32>, vector<1x8xf32> -> vector<1x8xf32>
    %c0_105 = arith.constant 0 : index
    %c0_106 = arith.constant 0 : index
    %128 = vector.load %arg5[%c0_105, %c0_106] : memref<1x8xf32, #tpu.memory_space<vmem>>, vector<1x8xf32>
    %129 = arith.addf %127, %128 : vector<1x8xf32>
    %c0_107 = arith.constant 0 : index
    %c0_108 = arith.constant 0 : index
    %130 = vector.load %arg6[%c0_107, %c0_108] : memref<8x32xf32, #tpu.memory_space<vmem>>, vector<8x32xf32>
    %cst_109 = arith.constant dense<0.000000e+00> : vector<1x32xf32>
    %131 = tpu.matmul %129, %130, %cst_109 {dimension_numbers = #tpu.dot_dimension_numbers<[1], [0], [0], [1], [0, 0, 1, 1], [], []>} : vector<1x8xf32>, vector<8x32xf32>, vector<1x32xf32> -> vector<1x32xf32>
    %c0_110 = arith.constant 0 : index
    %c0_111 = arith.constant 0 : index
    %132 = vector.load %arg7[%c0_110, %c0_111] : memref<1x32xf32, #tpu.memory_space<vmem>>, vector<1x32xf32>
    %133 = arith.addf %131, %132 : vector<1x32xf32>
    %134 = vector.extract_strided_slice %133 {offsets = [0, 0], sizes = [1, 16], strides = [1, 1]} : vector<1x32xf32> to vector<1x16xf32>
    %135 = vector.extract_strided_slice %133 {offsets = [0, 16], sizes = [1, 16], strides = [1, 1]} : vector<1x32xf32> to vector<1x16xf32>
    %136 = arith.maximumf %134, %135 : vector<1x16xf32>
    %137 = vector.extract_strided_slice %133 {offsets = [0, 0], sizes = [1, 16], strides = [1, 1]} : vector<1x32xf32> to vector<1x16xf32>
    %138 = arith.subf %137, %136 : vector<1x16xf32>
    %139 = math.exp %138 : vector<1x16xf32>
    %140 = vector.extract_strided_slice %133 {offsets = [0, 16], sizes = [1, 16], strides = [1, 1]} : vector<1x32xf32> to vector<1x16xf32>
    %141 = arith.subf %140, %136 : vector<1x16xf32>
    %142 = math.exp %141 : vector<1x16xf32>
    %143 = arith.addf %139, %142 : vector<1x16xf32>
    %144 = tpu.reciprocal %143 {approx = true} : vector<1x16xf32> -> vector<1x16xf32>
    %145 = arith.mulf %143, %144 : vector<1x16xf32>
    %cst_112 = arith.constant 2.000000e+00 : f32
    %146 = vector.broadcast %cst_112 : f32 to vector<1x16xf32>
    %147 = arith.subf %146, %145 : vector<1x16xf32>
    %148 = arith.mulf %144, %147 : vector<1x16xf32>
    %c0_113 = arith.constant 0 : index
    %c0_114 = arith.constant 0 : index
    %c0_115 = arith.constant 0 : index
    %149 = vector.load %arg9[%c0_113, %c0_114, %c0_115] : memref<1x64x32xf32, #tpu.memory_space<vmem>>, vector<1x64x16xf32>
    %150 = arith.mulf %139, %148 : vector<1x16xf32>
    %151 = vector.shape_cast %150 : vector<1x16xf32> to vector<1x1x16xf32>
    %152 = vector.broadcast %151 : vector<1x1x16xf32> to vector<1x64x16xf32>
    %153 = arith.mulf %149, %152 : vector<1x64x16xf32>
    %c0_116 = arith.constant 0 : index
    %c0_117 = arith.constant 0 : index
    %c16 = arith.constant 16 : index
    %154 = vector.load %arg9[%c0_116, %c0_117, %c16] : memref<1x64x32xf32, #tpu.memory_space<vmem>>, vector<1x64x16xf32>
    %155 = arith.mulf %142, %148 : vector<1x16xf32>
    %156 = vector.shape_cast %155 : vector<1x16xf32> to vector<1x1x16xf32>
    %157 = vector.broadcast %156 : vector<1x1x16xf32> to vector<1x64x16xf32>
    %158 = arith.mulf %154, %157 : vector<1x64x16xf32>
    %159 = arith.addf %153, %158 : vector<1x64x16xf32>
    %c0_118 = arith.constant 0 : index
    %c0_119 = arith.constant 0 : index
    %c0_120 = arith.constant 0 : index
    %c0_121 = arith.constant 0 : index
    %160 = vector.load %arg8[%c0_118, %c0_119, %c0_120, %c0_121] : memref<1x1x64x16xf32, #tpu.memory_space<vmem>>, vector<1x1x64x16xf32>
    %161 = vector.shape_cast %160 : vector<1x1x64x16xf32> to vector<1x64x16xf32>
    %162 = vector.shape_cast %159 : vector<1x64x16xf32> to vector<1x1x64x16xf32>
    tpu.vector_store %arg8[%c0_118, %c0_119, %c0_120, %c0_121], %162 {strides = array<i32>} : memref<1x1x64x16xf32, #tpu.memory_space<vmem>>, vector<1x1x64x16xf32>,
    return
  }
  func.func @transform_0(%arg0: i32) -> (i32, i32, i32, i32) {
    %c0_i32 = arith.constant 0 : i32
    %c0_i32_0 = arith.constant 0 : i32
    %c0_i32_1 = arith.constant 0 : i32
    %c0_i32_2 = arith.constant 0 : i32
    return %arg0, %c0_i32, %c0_i32_0, %c0_i32_1 : i32, i32, i32, i32
  }
  func.func @transform_1(%arg0: i32) -> (i32, i32) {
    %c0_i32 = arith.constant 0 : i32
    %c0_i32_0 = arith.constant 0 : i32
    %c0_i32_1 = arith.constant 0 : i32
    return %c0_i32, %c0_i32_0 : i32, i32
  }
  func.func @transform_2(%arg0: i32) -> (i32, i32) {
    %c0_i32 = arith.constant 0 : i32
    %c0_i32_0 = arith.constant 0 : i32
    %c0_i32_1 = arith.constant 0 : i32
    return %c0_i32, %c0_i32_0 : i32, i32
  }
  func.func @transform_3(%arg0: i32) -> (i32, i32) {
    %c0_i32 = arith.constant 0 : i32
    %c0_i32_0 = arith.constant 0 : i32
    %c0_i32_1 = arith.constant 0 : i32
    return %c0_i32, %c0_i32_0 : i32, i32
  }
  func.func @transform_4(%arg0: i32) -> (i32, i32) {
    %c0_i32 = arith.constant 0 : i32
    %c0_i32_0 = arith.constant 0 : i32
    %c0_i32_1 = arith.constant 0 : i32
    return %c0_i32, %c0_i32_0 : i32, i32
  }
  func.func @transform_5(%arg0: i32) -> (i32, i32) {
    %c0_i32 = arith.constant 0 : i32
    %c0_i32_0 = arith.constant 0 : i32
    %c0_i32_1 = arith.constant 0 : i32
    return %c0_i32, %c0_i32_0 : i32, i32
  }
  func.func @transform_6(%arg0: i32) -> (i32, i32) {
    %c0_i32 = arith.constant 0 : i32
    %c0_i32_0 = arith.constant 0 : i32
    %c0_i32_1 = arith.constant 0 : i32
    return %c0_i32, %c0_i32_0 : i32, i32
  }
  func.func @transform_7(%arg0: i32) -> (i32, i32, i32, i32) {
    %c0_i32 = arith.constant 0 : i32
    %c0_i32_0 = arith.constant 0 : i32
    %c0_i32_1 = arith.constant 0 : i32
    %c0_i32_2 = arith.constant 0 : i32
    return %arg0, %c0_i32, %c0_i32_0, %c0_i32_1 : i32, i32, i32, i32
  }
}

module attributes {stable_mosaic.version = 11 : i64} {
  func.func @kernel(%arg0: i32, %arg1: memref<1x12x12x16xf32, #tpu.memory_space<vmem>>, %arg2: memref<400x32xf32, #tpu.memory_space<vmem>>, %arg3: memref<1x32xf32, #tpu.memory_space<vmem>>, %arg4: memref<16x8xf32, #tpu.memory_space<vmem>>, %arg5: memref<1x8xf32, #tpu.memory_space<vmem>>, %arg6: memref<8x32xf32, #tpu.memory_space<vmem>>, %arg7: memref<1x32xf32, #tpu.memory_space<vmem>>, %arg8: memref<1x1x64x16xf32, #tpu.memory_space<vmem>>, %arg9: memref<1x64x32xf32, #tpu.memory_space<vmem>>) attributes {dimension_semantics = [#tpu.dimension_semantics<parallel>], iteration_bounds = array<i64: 2>, scalar_prefetch = 0 : i64, scratch_operands = 1 : i64, tpu.core_type = #tpu.core_type<tc>, window_params = [{transform_indices = @transform_0, window_bounds = array<i64: 1, 12, 12, 16>}, {pipeline_mode = #tpu.pipeline_mode<synchronous>, transform_indices = @transform_1, window_bounds = array<i64: 400, 32>}, {pipeline_mode = #tpu.pipeline_mode<synchronous>, transform_indices = @transform_2, window_bounds = array<i64: 1, 32>}, {pipeline_mode = #tpu.pipeline_mode<synchronous>, transform_indices = @transform_3, window_bounds = array<i64: 16, 8>}, {pipeline_mode = #tpu.pipeline_mode<synchronous>, transform_indices = @transform_4, window_bounds = array<i64: 1, 8>}, {pipeline_mode = #tpu.pipeline_mode<synchronous>, transform_indices = @transform_5, window_bounds = array<i64: 8, 32>}, {pipeline_mode = #tpu.pipeline_mode<synchronous>, transform_indices = @transform_6, window_bounds = array<i64: 1, 32>}, {transform_indices = @transform_7, window_bounds = array<i64: 1, 1, 64, 16>}]} {
    %cst = arith.constant 0.000000e+00 : f32
    %0 = vector.broadcast %cst : f32 to vector<1x32xf32>
    %c0_i32 = arith.constant 0 : i32
    %c8_i32 = arith.constant 8 : i32
    %1 = arith.muli %c0_i32, %c8_i32 : i32
    %2 = tpu.assume_multiple %1, 8 : i32
    %c0_i32_0 = arith.constant 0 : i32
    %3 = arith.addi %2, %c0_i32_0 : i32
    %c0 = arith.constant 0 : index
    %4 = arith.index_cast %3 : i32 to index
    %c0_1 = arith.constant 0 : index
    %c0_2 = arith.constant 0 : index
    %5 = vector.load %arg1[%c0, %4, %c0_1, %c0_2] : memref<1x12x12x16xf32, #tpu.memory_space<vmem>>, vector<1x8x8x16xf32>
    %6 = vector.shape_cast %5 : vector<1x8x8x16xf32> to vector<8x8x16xf32>
    %c0_i32_3 = arith.constant 0 : i32
    %7 = arith.addi %2, %c0_i32_3 : i32
    %c0_4 = arith.constant 0 : index
    %8 = arith.index_cast %7 : i32 to index
    %c1 = arith.constant 1 : index
    %c0_5 = arith.constant 0 : index
    %9 = vector.load %arg1[%c0_4, %8, %c1, %c0_5] : memref<1x12x12x16xf32, #tpu.memory_space<vmem>>, vector<1x8x8x16xf32>
    %10 = vector.shape_cast %9 : vector<1x8x8x16xf32> to vector<8x8x16xf32>
    %c0_i32_6 = arith.constant 0 : i32
    %11 = arith.addi %2, %c0_i32_6 : i32
    %c0_7 = arith.constant 0 : index
    %12 = arith.index_cast %11 : i32 to index
    %c2 = arith.constant 2 : index
    %c0_8 = arith.constant 0 : index
    %13 = vector.load %arg1[%c0_7, %12, %c2, %c0_8] : memref<1x12x12x16xf32, #tpu.memory_space<vmem>>, vector<1x8x8x16xf32>
    %14 = vector.shape_cast %13 : vector<1x8x8x16xf32> to vector<8x8x16xf32>
    %c0_i32_9 = arith.constant 0 : i32
    %15 = arith.addi %2, %c0_i32_9 : i32
    %c0_10 = arith.constant 0 : index
    %16 = arith.index_cast %15 : i32 to index
    %c3 = arith.constant 3 : index
    %c0_11 = arith.constant 0 : index
    %17 = vector.load %arg1[%c0_10, %16, %c3, %c0_11] : memref<1x12x12x16xf32, #tpu.memory_space<vmem>>, vector<1x8x8x16xf32>
    %18 = vector.shape_cast %17 : vector<1x8x8x16xf32> to vector<8x8x16xf32>
    %c0_i32_12 = arith.constant 0 : i32
    %19 = arith.addi %2, %c0_i32_12 : i32
    %c0_13 = arith.constant 0 : index
    %20 = arith.index_cast %19 : i32 to index
    %c4 = arith.constant 4 : index
    %c0_14 = arith.constant 0 : index
    %21 = vector.load %arg1[%c0_13, %20, %c4, %c0_14] : memref<1x12x12x16xf32, #tpu.memory_space<vmem>>, vector<1x8x8x16xf32>
    %22 = vector.shape_cast %21 : vector<1x8x8x16xf32> to vector<8x8x16xf32>
    %c1_i32 = arith.constant 1 : i32
    %23 = arith.addi %2, %c1_i32 : i32
    %c0_15 = arith.constant 0 : index
    %24 = arith.index_cast %23 : i32 to index
    %c0_16 = arith.constant 0 : index
    %c0_17 = arith.constant 0 : index
    %25 = vector.load %arg1[%c0_15, %24, %c0_16, %c0_17] : memref<1x12x12x16xf32, #tpu.memory_space<vmem>>, vector<1x8x8x16xf32>
    %26 = vector.shape_cast %25 : vector<1x8x8x16xf32> to vector<8x8x16xf32>
    %c1_i32_18 = arith.constant 1 : i32
    %27 = arith.addi %2, %c1_i32_18 : i32
    %c0_19 = arith.constant 0 : index
    %28 = arith.index_cast %27 : i32 to index
    %c1_20 = arith.constant 1 : index
    %c0_21 = arith.constant 0 : index
    %29 = vector.load %arg1[%c0_19, %28, %c1_20, %c0_21] : memref<1x12x12x16xf32, #tpu.memory_space<vmem>>, vector<1x8x8x16xf32>
    %30 = vector.shape_cast %29 : vector<1x8x8x16xf32> to vector<8x8x16xf32>
    %c1_i32_22 = arith.constant 1 : i32
    %31 = arith.addi %2, %c1_i32_22 : i32
    %c0_23 = arith.constant 0 : index
    %32 = arith.index_cast %31 : i32 to index
    %c2_24 = arith.constant 2 : index
    %c0_25 = arith.constant 0 : index
    %33 = vector.load %arg1[%c0_23, %32, %c2_24, %c0_25] : memref<1x12x12x16xf32, #tpu.memory_space<vmem>>, vector<1x8x8x16xf32>
    %34 = vector.shape_cast %33 : vector<1x8x8x16xf32> to vector<8x8x16xf32>
    %c1_i32_26 = arith.constant 1 : i32
    %35 = arith.addi %2, %c1_i32_26 : i32
    %c0_27 = arith.constant 0 : index
    %36 = arith.index_cast %35 : i32 to index
    %c3_28 = arith.constant 3 : index
    %c0_29 = arith.constant 0 : index
    %37 = vector.load %arg1[%c0_27, %36, %c3_28, %c0_29] : memref<1x12x12x16xf32, #tpu.memory_space<vmem>>, vector<1x8x8x16xf32>
    %38 = vector.shape_cast %37 : vector<1x8x8x16xf32> to vector<8x8x16xf32>
    %c1_i32_30 = arith.constant 1 : i32
    %39 = arith.addi %2, %c1_i32_30 : i32
    %c0_31 = arith.constant 0 : index
    %40 = arith.index_cast %39 : i32 to index
    %c4_32 = arith.constant 4 : index
    %c0_33 = arith.constant 0 : index
    %41 = vector.load %arg1[%c0_31, %40, %c4_32, %c0_33] : memref<1x12x12x16xf32, #tpu.memory_space<vmem>>, vector<1x8x8x16xf32>
    %42 = vector.shape_cast %41 : vector<1x8x8x16xf32> to vector<8x8x16xf32>
    %c2_i32 = arith.constant 2 : i32
    %43 = arith.addi %2, %c2_i32 : i32
    %c0_34 = arith.constant 0 : index
    %44 = arith.index_cast %43 : i32 to index
    %c0_35 = arith.constant 0 : index
    %c0_36 = arith.constant 0 : index
    %45 = vector.load %arg1[%c0_34, %44, %c0_35, %c0_36] : memref<1x12x12x16xf32, #tpu.memory_space<vmem>>, vector<1x8x8x16xf32>
    %46 = vector.shape_cast %45 : vector<1x8x8x16xf32> to vector<8x8x16xf32>
    %c2_i32_37 = arith.constant 2 : i32
    %47 = arith.addi %2, %c2_i32_37 : i32
    %c0_38 = arith.constant 0 : index
    %48 = arith.index_cast %47 : i32 to index
    %c1_39 = arith.constant 1 : index
    %c0_40 = arith.constant 0 : index
    %49 = vector.load %arg1[%c0_38, %48, %c1_39, %c0_40] : memref<1x12x12x16xf32, #tpu.memory_space<vmem>>, vector<1x8x8x16xf32>
    %50 = vector.shape_cast %49 : vector<1x8x8x16xf32> to vector<8x8x16xf32>
    %c2_i32_41 = arith.constant 2 : i32
    %51 = arith.addi %2, %c2_i32_41 : i32
    %c0_42 = arith.constant 0 : index
    %52 = arith.index_cast %51 : i32 to index
    %c2_43 = arith.constant 2 : index
    %c0_44 = arith.constant 0 : index
    %53 = vector.load %arg1[%c0_42, %52, %c2_43, %c0_44] : memref<1x12x12x16xf32, #tpu.memory_space<vmem>>, vector<1x8x8x16xf32>
    %54 = vector.shape_cast %53 : vector<1x8x8x16xf32> to vector<8x8x16xf32>
    %c2_i32_45 = arith.constant 2 : i32
    %55 = arith.addi %2, %c2_i32_45 : i32
    %c0_46 = arith.constant 0 : index
    %56 = arith.index_cast %55 : i32 to index
    %c3_47 = arith.constant 3 : index
    %c0_48 = arith.constant 0 : index
    %57 = vector.load %arg1[%c0_46, %56, %c3_47, %c0_48] : memref<1x12x12x16xf32, #tpu.memory_space<vmem>>, vector<1x8x8x16xf32>
    %58 = vector.shape_cast %57 : vector<1x8x8x16xf32> to vector<8x8x16xf32>
    %c2_i32_49 = arith.constant 2 : i32
    %59 = arith.addi %2, %c2_i32_49 : i32
    %c0_50 = arith.constant 0 : index
    %60 = arith.index_cast %59 : i32 to index
    %c4_51 = arith.constant 4 : index
    %c0_52 = arith.constant 0 : index
    %61 = vector.load %arg1[%c0_50, %60, %c4_51, %c0_52] : memref<1x12x12x16xf32, #tpu.memory_space<vmem>>, vector<1x8x8x16xf32>
    %62 = vector.shape_cast %61 : vector<1x8x8x16xf32> to vector<8x8x16xf32>
    %c3_i32 = arith.constant 3 : i32
    %63 = arith.addi %2, %c3_i32 : i32
    %c0_53 = arith.constant 0 : index
    %64 = arith.index_cast %63 : i32 to index
    %c0_54 = arith.constant 0 : index
    %c0_55 = arith.constant 0 : index
    %65 = vector.load %arg1[%c0_53, %64, %c0_54, %c0_55] : memref<1x12x12x16xf32, #tpu.memory_space<vmem>>, vector<1x8x8x16xf32>
    %66 = vector.shape_cast %65 : vector<1x8x8x16xf32> to vector<8x8x16xf32>
    %c3_i32_56 = arith.constant 3 : i32
    %67 = arith.addi %2, %c3_i32_56 : i32
    %c0_57 = arith.constant 0 : index
    %68 = arith.index_cast %67 : i32 to index
    %c1_58 = arith.constant 1 : index
    %c0_59 = arith.constant 0 : index
    %69 = vector.load %arg1[%c0_57, %68, %c1_58, %c0_59] : memref<1x12x12x16xf32, #tpu.memory_space<vmem>>, vector<1x8x8x16xf32>
    %70 = vector.shape_cast %69 : vector<1x8x8x16xf32> to vector<8x8x16xf32>
    %c3_i32_60 = arith.constant 3 : i32
    %71 = arith.addi %2, %c3_i32_60 : i32
    %c0_61 = arith.constant 0 : index
    %72 = arith.index_cast %71 : i32 to index
    %c2_62 = arith.constant 2 : index
    %c0_63 = arith.constant 0 : index
    %73 = vector.load %arg1[%c0_61, %72, %c2_62, %c0_63] : memref<1x12x12x16xf32, #tpu.memory_space<vmem>>, vector<1x8x8x16xf32>
    %74 = vector.shape_cast %73 : vector<1x8x8x16xf32> to vector<8x8x16xf32>
    %c3_i32_64 = arith.constant 3 : i32
    %75 = arith.addi %2, %c3_i32_64 : i32
    %c0_65 = arith.constant 0 : index
    %76 = arith.index_cast %75 : i32 to index
    %c3_66 = arith.constant 3 : index
    %c0_67 = arith.constant 0 : index
    %77 = vector.load %arg1[%c0_65, %76, %c3_66, %c0_67] : memref<1x12x12x16xf32, #tpu.memory_space<vmem>>, vector<1x8x8x16xf32>
    %78 = vector.shape_cast %77 : vector<1x8x8x16xf32> to vector<8x8x16xf32>
    %c3_i32_68 = arith.constant 3 : i32
    %79 = arith.addi %2, %c3_i32_68 : i32
    %c0_69 = arith.constant 0 : index
    %80 = arith.index_cast %79 : i32 to index
    %c4_70 = arith.constant 4 : index
    %c0_71 = arith.constant 0 : index
    %81 = vector.load %arg1[%c0_69, %80, %c4_70, %c0_71] : memref<1x12x12x16xf32, #tpu.memory_space<vmem>>, vector<1x8x8x16xf32>
    %82 = vector.shape_cast %81 : vector<1x8x8x16xf32> to vector<8x8x16xf32>
    %c4_i32 = arith.constant 4 : i32
    %83 = arith.addi %2, %c4_i32 : i32
    %c0_72 = arith.constant 0 : index
    %84 = arith.index_cast %83 : i32 to index
    %c0_73 = arith.constant 0 : index
    %c0_74 = arith.constant 0 : index
    %85 = vector.load %arg1[%c0_72, %84, %c0_73, %c0_74] : memref<1x12x12x16xf32, #tpu.memory_space<vmem>>, vector<1x8x8x16xf32>
    %86 = vector.shape_cast %85 : vector<1x8x8x16xf32> to vector<8x8x16xf32>
    %c4_i32_75 = arith.constant 4 : i32
    %87 = arith.addi %2, %c4_i32_75 : i32
    %c0_76 = arith.constant 0 : index
    %88 = arith.index_cast %87 : i32 to index
    %c1_77 = arith.constant 1 : index
    %c0_78 = arith.constant 0 : index
    %89 = vector.load %arg1[%c0_76, %88, %c1_77, %c0_78] : memref<1x12x12x16xf32, #tpu.memory_space<vmem>>, vector<1x8x8x16xf32>
    %90 = vector.shape_cast %89 : vector<1x8x8x16xf32> to vector<8x8x16xf32>
    %c4_i32_79 = arith.constant 4 : i32
    %91 = arith.addi %2, %c4_i32_79 : i32
    %c0_80 = arith.constant 0 : index
    %92 = arith.index_cast %91 : i32 to index
    %c2_81 = arith.constant 2 : index
    %c0_82 = arith.constant 0 : index
    %93 = vector.load %arg1[%c0_80, %92, %c2_81, %c0_82] : memref<1x12x12x16xf32, #tpu.memory_space<vmem>>, vector<1x8x8x16xf32>
    %94 = vector.shape_cast %93 : vector<1x8x8x16xf32> to vector<8x8x16xf32>
    %c4_i32_83 = arith.constant 4 : i32
    %95 = arith.addi %2, %c4_i32_83 : i32
    %c0_84 = arith.constant 0 : index
    %96 = arith.index_cast %95 : i32 to index
    %c3_85 = arith.constant 3 : index
    %c0_86 = arith.constant 0 : index
    %97 = vector.load %arg1[%c0_84, %96, %c3_85, %c0_86] : memref<1x12x12x16xf32, #tpu.memory_space<vmem>>, vector<1x8x8x16xf32>
    %98 = vector.shape_cast %97 : vector<1x8x8x16xf32> to vector<8x8x16xf32>
    %c4_i32_87 = arith.constant 4 : i32
    %99 = arith.addi %2, %c4_i32_87 : i32
    %c0_88 = arith.constant 0 : index
    %100 = arith.index_cast %99 : i32 to index
    %c4_89 = arith.constant 4 : index
    %c0_90 = arith.constant 0 : index
    %101 = vector.load %arg1[%c0_88, %100, %c4_89, %c0_90] : memref<1x12x12x16xf32, #tpu.memory_space<vmem>>, vector<1x8x8x16xf32>
    %102 = vector.shape_cast %101 : vector<1x8x8x16xf32> to vector<8x8x16xf32>
    %103 = tpu.concatenate %6, %10, %14, %18, %22, %26, %30, %34, %38, %42, %46, %50, %54, %58, %62, %66 in 2 : vector<8x8x16xf32>, vector<8x8x16xf32>, vector<8x8x16xf32>, vector<8x8x16xf32>, vector<8x8x16xf32>, vector<8x8x16xf32>, vector<8x8x16xf32>, vector<8x8x16xf32>, vector<8x8x16xf32>, vector<8x8x16xf32>, vector<8x8x16xf32>, vector<8x8x16xf32>, vector<8x8x16xf32>, vector<8x8x16xf32>, vector<8x8x16xf32>, vector<8x8x16xf32> -> vector<8x8x256xf32>
    %104 = tpu.concatenate %70, %74, %78, %82, %86, %90, %94, %98, %102 in 2 : vector<8x8x16xf32>, vector<8x8x16xf32>, vector<8x8x16xf32>, vector<8x8x16xf32>, vector<8x8x16xf32>, vector<8x8x16xf32>, vector<8x8x16xf32>, vector<8x8x16xf32>, vector<8x8x16xf32> -> vector<8x8x144xf32>
    %105 = tpu.concatenate %103, %104 in 2 : vector<8x8x256xf32>, vector<8x8x144xf32> -> vector<8x8x400xf32>
    %106 = vector.shape_cast %105 : vector<8x8x400xf32> to vector<64x400xf32>
    %c0_91 = arith.constant 0 : index
    %c0_92 = arith.constant 0 : index
    %107 = vector.load %arg2[%c0_91, %c0_92] : memref<400x32xf32, #tpu.memory_space<vmem>>, vector<400x32xf32>
    %cst_93 = arith.constant dense<0.000000e+00> : vector<64x32xf32>
    %108 = tpu.matmul %106, %107, %cst_93 {dimension_numbers = #tpu.dot_dimension_numbers<[1], [0], [0], [1], [0, 0, 1, 1], [], []>} : vector<64x400xf32>, vector<400x32xf32>, vector<64x32xf32> -> vector<64x32xf32>
    %c0_94 = arith.constant 0 : index
    %c0_95 = arith.constant 0 : index
    %109 = vector.load %arg3[%c0_94, %c0_95] : memref<1x32xf32, #tpu.memory_space<vmem>>, vector<1x32xf32>
    %110 = vector.broadcast %109 : vector<1x32xf32> to vector<64x32xf32>
    %111 = arith.addf %108, %110 : vector<64x32xf32>
    %cst_96 = arith.constant 0.000000e+00 : f32
    %112 = vector.broadcast %cst_96 : f32 to vector<64x32xf32>
    %113 = arith.maximumf %111, %112 : vector<64x32xf32>
    %114 = arith.index_cast %c0_i32 : i32 to index
    %c0_97 = arith.constant 0 : index
    %c0_98 = arith.constant 0 : index
    %115 = vector.load %arg9[%114, %c0_97, %c0_98] : memref<1x64x32xf32, #tpu.memory_space<vmem>>, vector<1x64x32xf32>
    %116 = vector.shape_cast %115 : vector<1x64x32xf32> to vector<64x32xf32>
    %117 = vector.shape_cast %113 : vector<64x32xf32> to vector<1x64x32xf32>
    tpu.vector_store %arg9[%114, %c0_97, %c0_98], %117 {strides = array<i32>} : memref<1x64x32xf32, #tpu.memory_space<vmem>>, vector<1x64x32xf32>,
    %cst_99 = arith.constant dense<0.000000e+00> : vector<32xf32>
    %118 = vector.multi_reduction <add>, %113, %cst_99 [0] : vector<64x32xf32> to vector<32xf32>
    %119 = vector.shape_cast %118 : vector<32xf32> to vector<1x32xf32>
    %120 = arith.addf %0, %119 : vector<1x32xf32>
    %c1_i32_100 = arith.constant 1 : i32
    %121 = vector.extract_strided_slice %120 {offsets = [0, 0], sizes = [1, 16], strides = [1, 1]} : vector<1x32xf32> to vector<1x16xf32>
    %122 = vector.extract_strided_slice %120 {offsets = [0, 16], sizes = [1, 16], strides = [1, 1]} : vector<1x32xf32> to vector<1x16xf32>
    %123 = arith.addf %121, %122 : vector<1x16xf32>
    %cst_101 = arith.constant 1.562500e-02 : f32
    %124 = vector.broadcast %cst_101 : f32 to vector<1x16xf32>
    %125 = arith.mulf %123, %124 : vector<1x16xf32>
    %c0_102 = arith.constant 0 : index
    %c0_103 = arith.constant 0 : index
    %126 = vector.load %arg4[%c0_102, %c0_103] : memref<16x8xf32, #tpu.memory_space<vmem>>, vector<16x8xf32>
    %cst_104 = arith.constant dense<0.000000e+00> : vector<1x8xf32>
    %127 = tpu.matmul %125, %126, %cst_104 {dimension_numbers = #tpu.dot_dimension_numbers<[1], [0], [0], [1], [0, 0, 1, 1], [], []>} : vector<1x16xf32>, vector<16x8xf32>, vector<1x8xf32> -> vector<1x8xf32>
    %c0_105 = arith.constant 0 : index
    %c0_106 = arith.constant 0 : index
    %128 = vector.load %arg5[%c0_105, %c0_106] : memref<1x8xf32, #tpu.memory_space<vmem>>, vector<1x8xf32>
    %129 = arith.addf %127, %128 : vector<1x8xf32>
    %c0_107 = arith.constant 0 : index
    %c0_108 = arith.constant 0 : index
    %130 = vector.load %arg6[%c0_107, %c0_108] : memref<8x32xf32, #tpu.memory_space<vmem>>, vector<8x32xf32>
    %cst_109 = arith.constant dense<0.000000e+00> : vector<1x32xf32>
    %131 = tpu.matmul %129, %130, %cst_109 {dimension_numbers = #tpu.dot_dimension_numbers<[1], [0], [0], [1], [0, 0, 1, 1], [], []>} : vector<1x8xf32>, vector<8x32xf32>, vector<1x32xf32> -> vector<1x32xf32>
    %c0_110 = arith.constant 0 : index
    %c0_111 = arith.constant 0 : index
    %132 = vector.load %arg7[%c0_110, %c0_111] : memref<1x32xf32, #tpu.memory_space<vmem>>, vector<1x32xf32>
    %133 = arith.addf %131, %132 : vector<1x32xf32>
    %134 = vector.extract_strided_slice %133 {offsets = [0, 0], sizes = [1, 16], strides = [1, 1]} : vector<1x32xf32> to vector<1x16xf32>
    %135 = vector.extract_strided_slice %133 {offsets = [0, 16], sizes = [1, 16], strides = [1, 1]} : vector<1x32xf32> to vector<1x16xf32>
    %136 = arith.maximumf %134, %135 : vector<1x16xf32>
    %137 = vector.extract_strided_slice %133 {offsets = [0, 0], sizes = [1, 16], strides = [1, 1]} : vector<1x32xf32> to vector<1x16xf32>
    %138 = arith.subf %137, %136 : vector<1x16xf32>
    %139 = math.exp %138 : vector<1x16xf32>
    %140 = vector.extract_strided_slice %133 {offsets = [0, 16], sizes = [1, 16], strides = [1, 1]} : vector<1x32xf32> to vector<1x16xf32>
    %141 = arith.subf %140, %136 : vector<1x16xf32>
    %142 = math.exp %141 : vector<1x16xf32>
    %143 = arith.addf %139, %142 : vector<1x16xf32>
    %144 = tpu.reciprocal %143 {approx = true} : vector<1x16xf32> -> vector<1x16xf32>
    %145 = arith.mulf %143, %144 : vector<1x16xf32>
    %cst_112 = arith.constant 2.000000e+00 : f32
    %146 = vector.broadcast %cst_112 : f32 to vector<1x16xf32>
    %147 = arith.subf %146, %145 : vector<1x16xf32>
    %148 = arith.mulf %144, %147 : vector<1x16xf32>
    %c0_113 = arith.constant 0 : index
    %c0_114 = arith.constant 0 : index
    %c0_115 = arith.constant 0 : index
    %149 = vector.load %arg9[%c0_113, %c0_114, %c0_115] : memref<1x64x32xf32, #tpu.memory_space<vmem>>, vector<1x64x16xf32>
    %150 = arith.mulf %139, %148 : vector<1x16xf32>
    %151 = vector.shape_cast %150 : vector<1x16xf32> to vector<1x1x16xf32>
    %152 = vector.broadcast %151 : vector<1x1x16xf32> to vector<1x64x16xf32>
    %153 = arith.mulf %149, %152 : vector<1x64x16xf32>
    %c0_116 = arith.constant 0 : index
    %c0_117 = arith.constant 0 : index
    %c16 = arith.constant 16 : index
    %154 = vector.load %arg9[%c0_116, %c0_117, %c16] : memref<1x64x32xf32, #tpu.memory_space<vmem>>, vector<1x64x16xf32>
    %155 = arith.mulf %142, %148 : vector<1x16xf32>
    %156 = vector.shape_cast %155 : vector<1x16xf32> to vector<1x1x16xf32>
    %157 = vector.broadcast %156 : vector<1x1x16xf32> to vector<1x64x16xf32>
    %158 = arith.mulf %154, %157 : vector<1x64x16xf32>
    %159 = arith.addf %153, %158 : vector<1x64x16xf32>
    %c0_118 = arith.constant 0 : index
    %c0_119 = arith.constant 0 : index
    %c0_120 = arith.constant 0 : index
    %c0_121 = arith.constant 0 : index
    %160 = vector.load %arg8[%c0_118, %c0_119, %c0_120, %c0_121] : memref<1x1x64x16xf32, #tpu.memory_space<vmem>>, vector<1x1x64x16xf32>
    %161 = vector.shape_cast %160 : vector<1x1x64x16xf32> to vector<1x64x16xf32>
    %162 = vector.shape_cast %159 : vector<1x64x16xf32> to vector<1x1x64x16xf32>
    tpu.vector_store %arg8[%c0_118, %c0_119, %c0_120, %c0_121], %162 {strides = array<i32>} : memref<1x1x64x16xf32, #tpu.memory_space<vmem>>, vector<1x1x64x16xf32>,
    return
  }
  func.func @transform_0(%arg0: i32) -> (i32, i32, i32, i32) {
    %c0_i32 = arith.constant 0 : i32
    %c0_i32_0 = arith.constant 0 : i32
    %c0_i32_1 = arith.constant 0 : i32
    %c0_i32_2 = arith.constant 0 : i32
    return %arg0, %c0_i32, %c0_i32_0, %c0_i32_1 : i32, i32, i32, i32
  }
  func.func @transform_1(%arg0: i32) -> (i32, i32) {
    %c0_i32 = arith.constant 0 : i32
    %c0_i32_0 = arith.constant 0 : i32
    %c0_i32_1 = arith.constant 0 : i32
    return %c0_i32, %c0_i32_0 : i32, i32
  }
  func.func @transform_2(%arg0: i32) -> (i32, i32) {
    %c0_i32 = arith.constant 0 : i32
    %c0_i32_0 = arith.constant 0 : i32
    %c0_i32_1 = arith.constant 0 : i32
    return %c0_i32, %c0_i32_0 : i32, i32
  }
  func.func @transform_3(%arg0: i32) -> (i32, i32) {
    %c0_i32 = arith.constant 0 : i32
    %c0_i32_0 = arith.constant 0 : i32
    %c0_i32_1 = arith.constant 0 : i32
    return %c0_i32, %c0_i32_0 : i32, i32
  }
  func.func @transform_4(%arg0: i32) -> (i32, i32) {
    %c0_i32 = arith.constant 0 : i32
    %c0_i32_0 = arith.constant 0 : i32
    %c0_i32_1 = arith.constant 0 : i32
    return %c0_i32, %c0_i32_0 : i32, i32
  }
  func.func @transform_5(%arg0: i32) -> (i32, i32) {
    %c0_i32 = arith.constant 0 : i32
    %c0_i32_0 = arith.constant 0 : i32
    %c0_i32_1 = arith.constant 0 : i32
    return %c0_i32, %c0_i32_0 : i32, i32
  }
  func.func @transform_6(%arg0: i32) -> (i32, i32) {
    %c0_i32 = arith.constant 0 : i32
    %c0_i32_0 = arith.constant 0 : i32
    %c0_i32_1 = arith.constant 0 : i32
    return %c0_i32, %c0_i32_0 : i32, i32
  }
  func.func @transform_7(%arg0: i32) -> (i32, i32, i32, i32) {
    %c0_i32 = arith.constant 0 : i32
    %c0_i32_0 = arith.constant 0 : i32
    %c0_i32_1 = arith.constant 0 : i32
    %c0_i32_2 = arith.constant 0 : i32
    return %arg0, %c0_i32, %c0_i32_0, %c0_i32_1 : i32, i32, i32, i32
  }
}

</mosaic_0001>

<llo_original>
// kernel: tpu_custom_call.1
$region0: #{tpu_custom_call.1}
  #allocation0 [shape = 'u32[]', space=smem, size = 0x4, offset = 0x4, fixed_abs, tag = 'smem constant byte address 0x4 - core index']
  #allocation1 [shape = 'u32[72,128]{1,0:T(1,128)}', space=vmem, size = 0x9000, scoped, tag = 'internal scratch']
  #allocation2 [shape = 'f32[1,64,32]{2,1,0:T(8,128)}', space=vmem, size = 0x8000, scoped, tag = 'scratch operand']
  %s0 = inlined_call_operand.vmem [shape: f32[2,12,12,16], index: 0, kind: input, shape index: {}]
  %s1 = inlined_call_operand.vmem [shape: f32[400,32], index: 1, kind: input, shape index: {}]
  %s2 = inlined_call_operand.vmem [shape: f32[1,32], index: 2, kind: input, shape index: {}]
  %s3 = inlined_call_operand.vmem [shape: f32[16,8], index: 3, kind: input, shape index: {}]
  %s4 = inlined_call_operand.vmem [shape: f32[1,8], index: 4, kind: input, shape index: {}]
  %s5 = inlined_call_operand.vmem [shape: f32[8,32], index: 5, kind: input, shape index: {}]
  %s6 = inlined_call_operand.vmem [shape: f32[1,32], index: 6, kind: input, shape index: {}]
  %s7 = inlined_call_operand.vmem [shape: f32[2,1,64,16], index: 7, kind: output, shape index: {}]
  %s8 = sld [smem:[#allocation0]]
  $region61: #{tpu_custom_call.1} parent=0
    _
  %s10 = ssub.s32 1, %s8
  %s11 = scalar_select 0, %s10, %s8
  loop: start=0, step=1, limit=4
  $region2: #{tpu_custom_call.1} parent=0 // loop_pre_header
    _
  $region3: #{tpu_custom_call.1} parent=0 // loop_header
    %s13 = sphi 0, %s17
    %p14 = scmp.ge.s32.totalorder %s13, 4
    %s23 = sphi 0, %s25
    %s26 = sphi 0, %s23
    %s27 = sphi 0, %s26
    %s43 = sphi 0, %s27
    %s47 = sphi 0, %s47
    %s49 = sphi 0, %s47
    %s50 = sphi 0, %s49
    %s64 = sphi 0, %s50
    %s68 = sphi 0, %s68
    %s70 = sphi 0, %s68
    %s71 = sphi 0, %s70
    %s85 = sphi 0, %s71
    %s89 = sphi 0, %s89
    %s91 = sphi 0, %s89
    %s92 = sphi 0, %s91
    %s106 = sphi 0, %s92
    %s110 = sphi 0, %s110
    %s112 = sphi 0, %s110
    %s113 = sphi 0, %s112
    %s127 = sphi 0, %s113
    %s131 = sphi 0, %s131
    %s133 = sphi 0, %s131
    %s134 = sphi 0, %s133
    %s148 = sphi 0, %s134
    %s152 = sphi 0, %s152
    %s154 = sphi 0, %s152
    %s155 = sphi 0, %s154
    %s169 = sphi 0, %s155
    %s175 = sphi 0, %s177
    %s178 = sphi 0, %s175
    %s179 = sphi 0, %s178
    %s195 = sphi 0, %s179
  $region4: #{tpu_custom_call.1} parent=0 // loop_header_branch
    %16 = sbr.rel (%p14) target = $region8
  $region5: #{tpu_custom_call.1} parent=0 // loop_body
    %s18 = ssub.s32 %s13, 1
    %s19 = ssub.s32 %s13, 2
    %s20 = sadd.s32 %s13, 1
    %s21 = ssub.s32 %s13, %s20
    %p22 = scmp.eq.s32.totalorder %s21, 0
    %s24 = sadd.s32 %s23, 1
    %s25 = scalar_select %p22, %s23, %s24
    %p28 = pneg %p22
    %p29 = scmp.eq.s32.totalorder %s13, 1
    %p30 = por %p28, %p29
    %p31 = scmp.ne.s32.totalorder %s23, %s26
    %p32 = scmp.eq.s32.totalorder %s13, 0
    %p33 = por %p31, %p32
    %p34 = scmp.ne.s32.totalorder %s23, %s26
    %p35 = scmp.eq.s32.totalorder %s18, 1
    %p36 = por %p34, %p35
    %p37 = scmp.ne.s32.totalorder %s26, %s27
    %p38 = scmp.eq.s32.totalorder %s18, 0
    %p39 = por %p37, %p38
    %p40 = scmp.ne.s32.totalorder %s26, %s27
    %p41 = scmp.eq.s32.totalorder %s19, 1
    %p42 = por %p40, %p41
    %p44 = scmp.ne.s32.totalorder %s27, %s43
    %p45 = scmp.eq.s32.totalorder %s19, 0
    %p46 = por %p44, %p45
    %s48 = sadd.s32 %s47, 1
    %p51 = scmp.eq.s32.totalorder %s13, 1
    %p52 = scmp.ne.s32.totalorder %s47, %s49
    %p53 = scmp.eq.s32.totalorder %s13, 0
    %p54 = por %p52, %p53
    %p55 = scmp.ne.s32.totalorder %s47, %s49
    %p56 = scmp.eq.s32.totalorder %s18, 1
    %p57 = por %p55, %p56
    %p58 = scmp.ne.s32.totalorder %s49, %s50
    %p59 = scmp.eq.s32.totalorder %s18, 0
    %p60 = por %p58, %p59
    %p61 = scmp.ne.s32.totalorder %s49, %s50
    %p62 = scmp.eq.s32.totalorder %s19, 1
    %p63 = por %p61, %p62
    %p65 = scmp.ne.s32.totalorder %s50, %s64
    %p66 = scmp.eq.s32.totalorder %s19, 0
    %p67 = por %p65, %p66
    %s69 = sadd.s32 %s68, 1
    %p72 = scmp.eq.s32.totalorder %s13, 1
    %p73 = scmp.ne.s32.totalorder %s68, %s70
    %p74 = scmp.eq.s32.totalorder %s13, 0
    %p75 = por %p73, %p74
    %p76 = scmp.ne.s32.totalorder %s68, %s70
    %p77 = scmp.eq.s32.totalorder %s18, 1
    %p78 = por %p76, %p77
    %p79 = scmp.ne.s32.totalorder %s70, %s71
    %p80 = scmp.eq.s32.totalorder %s18, 0
    %p81 = por %p79, %p80
    %p82 = scmp.ne.s32.totalorder %s70, %s71
    %p83 = scmp.eq.s32.totalorder %s19, 1
    %p84 = por %p82, %p83
    %p86 = scmp.ne.s32.totalorder %s71, %s85
    %p87 = scmp.eq.s32.totalorder %s19, 0
    %p88 = por %p86, %p87
    %s90 = sadd.s32 %s89, 1
    %p93 = scmp.eq.s32.totalorder %s13, 1
    %p94 = scmp.ne.s32.totalorder %s89, %s91
    %p95 = scmp.eq.s32.totalorder %s13, 0
    %p96 = por %p94, %p95
    %p97 = scmp.ne.s32.totalorder %s89, %s91
    %p98 = scmp.eq.s32.totalorder %s18, 1
    %p99 = por %p97, %p98
    %p100 = scmp.ne.s32.totalorder %s91, %s92
    %p101 = scmp.eq.s32.totalorder %s18, 0
    %p102 = por %p100, %p101
    %p103 = scmp.ne.s32.totalorder %s91, %s92
    %p104 = scmp.eq.s32.totalorder %s19, 1
    %p105 = por %p103, %p104
    %p107 = scmp.ne.s32.totalorder %s92, %s106
    %p108 = scmp.eq.s32.totalorder %s19, 0
    %p109 = por %p107, %p108
    %s111 = sadd.s32 %s110, 1
    %p114 = scmp.eq.s32.totalorder %s13, 1
    %p115 = scmp.ne.s32.totalorder %s110, %s112
    %p116 = scmp.eq.s32.totalorder %s13, 0
    %p117 = por %p115, %p116
    %p118 = scmp.ne.s32.totalorder %s110, %s112
    %p119 = scmp.eq.s32.totalorder %s18, 1
    %p120 = por %p118, %p119
    %p121 = scmp.ne.s32.totalorder %s112, %s113
    %p122 = scmp.eq.s32.totalorder %s18, 0
    %p123 = por %p121, %p122
    %p124 = scmp.ne.s32.totalorder %s112, %s113
    %p125 = scmp.eq.s32.totalorder %s19, 1
    %p126 = por %p124, %p125
    %p128 = scmp.ne.s32.totalorder %s113, %s127
    %p129 = scmp.eq.s32.totalorder %s19, 0
    %p130 = por %p128, %p129
    %s132 = sadd.s32 %s131, 1
    %p135 = scmp.eq.s32.totalorder %s13, 1
    %p136 = scmp.ne.s32.totalorder %s131, %s133
    %p137 = scmp.eq.s32.totalorder %s13, 0
    %p138 = por %p136, %p137
    %p139 = scmp.ne.s32.totalorder %s131, %s133
    %p140 = scmp.eq.s32.totalorder %s18, 1
    %p141 = por %p139, %p140
    %p142 = scmp.ne.s32.totalorder %s133, %s134
    %p143 = scmp.eq.s32.totalorder %s18, 0
    %p144 = por %p142, %p143
    %p145 = scmp.ne.s32.totalorder %s133, %s134
    %p146 = scmp.eq.s32.totalorder %s19, 1
    %p147 = por %p145, %p146
    %p149 = scmp.ne.s32.totalorder %s134, %s148
    %p150 = scmp.eq.s32.totalorder %s19, 0
    %p151 = por %p149, %p150
    %s153 = sadd.s32 %s152, 1
    %p156 = scmp.eq.s32.totalorder %s13, 1
    %p157 = scmp.ne.s32.totalorder %s152, %s154
    %p158 = scmp.eq.s32.totalorder %s13, 0
    %p159 = por %p157, %p158
    %p160 = scmp.ne.s32.totalorder %s152, %s154
    %p161 = scmp.eq.s32.totalorder %s18, 1
    %p162 = por %p160, %p161
    %p163 = scmp.ne.s32.totalorder %s154, %s155
    %p164 = scmp.eq.s32.totalorder %s18, 0
    %p165 = por %p163, %p164
    %p166 = scmp.ne.s32.totalorder %s154, %s155
    %p167 = scmp.eq.s32.totalorder %s19, 1
    %p168 = por %p166, %p167
    %p170 = scmp.ne.s32.totalorder %s155, %s169
    %p171 = scmp.eq.s32.totalorder %s19, 0
    %p172 = por %p170, %p171
    %s173 = ssub.s32 %s13, %s20
    %p174 = scmp.eq.s32.totalorder %s173, 0
    %s176 = sadd.s32 %s175, 1
    %s177 = scalar_select %p174, %s175, %s176
    %p180 = pneg %p174
    %p181 = scmp.eq.s32.totalorder %s13, 1
    %p182 = por %p180, %p181
    %p183 = scmp.ne.s32.totalorder %s175, %s178
    %p184 = scmp.eq.s32.totalorder %s13, 0
    %p185 = por %p183, %p184
    %p186 = scmp.ne.s32.totalorder %s175, %s178
    %p187 = scmp.eq.s32.totalorder %s18, 1
    %p188 = por %p186, %p187
    %p189 = scmp.ne.s32.totalorder %s178, %s179
    %p190 = scmp.eq.s32.totalorder %s18, 0
    %p191 = por %p189, %p190
    %p192 = scmp.ne.s32.totalorder %s178, %s179
    %p193 = scmp.eq.s32.totalorder %s19, 1
    %p194 = por %p192, %p193
    %p196 = scmp.ne.s32.totalorder %s179, %s195
    %p197 = scmp.eq.s32.totalorder %s19, 0
    %p198 = por %p196, %p197
    %p199 = scmp.le.s32.totalorder 1, %s13
    %p200 = scmp.lt.s32.totalorder %s13, 3
    %p201 = pnand %p199, %p200
    %p202 = pneg %p201
    // Predicated region
    $region9: #{tpu_custom_call.1} parent=5 // pred_check
      _
    $region10: #{tpu_custom_call.1} parent=5 // pred_check_branch
      %204 = sbr.rel (%p201) target = $region12
    $region11: #{tpu_custom_call.1} parent=5 // pred_region
      %s205 = ssub.s32 %s13, 1
      // Predicated region
      $region13: #{tpu_custom_call.1} parent=11 // pred_check
        %p206 = pneg %p60
      $region14: #{tpu_custom_call.1} parent=11 // pred_check_branch
        %208 = sbr.rel (%p206) target = $region16
      $region15: #{tpu_custom_call.1} parent=11 // pred_region
        _
      $region16: #{tpu_custom_call.1} parent=11 // pred_fallthru
        _
      // Predicated region
      $region17: #{tpu_custom_call.1} parent=11 // pred_check
        %p209 = pneg %p81
      $region18: #{tpu_custom_call.1} parent=11 // pred_check_branch
        %211 = sbr.rel (%p209) target = $region20
      $region19: #{tpu_custom_call.1} parent=11 // pred_region
        _
      $region20: #{tpu_custom_call.1} parent=11 // pred_fallthru
        _
      // Predicated region
      $region21: #{tpu_custom_call.1} parent=11 // pred_check
        %p212 = pneg %p102
      $region22: #{tpu_custom_call.1} parent=11 // pred_check_branch
        %214 = sbr.rel (%p212) target = $region24
      $region23: #{tpu_custom_call.1} parent=11 // pred_region
        _
      $region24: #{tpu_custom_call.1} parent=11 // pred_fallthru
        _
      // Predicated region
      $region25: #{tpu_custom_call.1} parent=11 // pred_check
        %p215 = pneg %p123
      $region26: #{tpu_custom_call.1} parent=11 // pred_check_branch
        %217 = sbr.rel (%p215) target = $region28
      $region27: #{tpu_custom_call.1} parent=11 // pred_region
        _
      $region28: #{tpu_custom_call.1} parent=11 // pred_fallthru
        _
      // Predicated region
      $region29: #{tpu_custom_call.1} parent=11 // pred_check
        %p218 = pneg %p144
      $region30: #{tpu_custom_call.1} parent=11 // pred_check_branch
        %220 = sbr.rel (%p218) target = $region32
      $region31: #{tpu_custom_call.1} parent=11 // pred_region
        _
      $region32: #{tpu_custom_call.1} parent=11 // pred_fallthru
        _
      // Predicated region
      $region33: #{tpu_custom_call.1} parent=11 // pred_check
        %p221 = pneg %p165
      $region34: #{tpu_custom_call.1} parent=11 // pred_check_branch
        %223 = sbr.rel (%p221) target = $region36
      $region35: #{tpu_custom_call.1} parent=11 // pred_region
        _
      $region36: #{tpu_custom_call.1} parent=11 // pred_fallthru
        _
    $region12: #{tpu_custom_call.1} parent=5 // pred_fallthru
      _
    %p224 = scmp.lt.s32.totalorder %s13, 2
    // Predicated region
    $region37: #{tpu_custom_call.1} parent=5 // pred_check
      %p225 = pneg %p224
    $region38: #{tpu_custom_call.1} parent=5 // pred_check_branch
      %227 = sbr.rel (%p225) target = $region40
    $region39: #{tpu_custom_call.1} parent=5 // pred_region
      // Predicated region
      $region41: #{tpu_custom_call.1} parent=39 // pred_check
        %p228 = pneg %p33
      $region42: #{tpu_custom_call.1} parent=39 // pred_check_branch
        %230 = sbr.rel (%p228) target = $region44
      $region43: #{tpu_custom_call.1} parent=39 // pred_region
        %p231 = scmp.lt.s32.totalorder %s13, 1
        %s232 = scalar_select %p231, %s13, 1
        %s233 = smul.addr %s232, 24
        %s234 = smul.addr %s233, 8
        %s235 = scalar_lea.vmem %s0, %s234
      $region44: #{tpu_custom_call.1} parent=39 // pred_fallthru
        _
    $region40: #{tpu_custom_call.1} parent=5 // pred_fallthru
      _
    %p236 = scmp.le.s32.totalorder 1, %s13
    %p237 = scmp.lt.s32.totalorder %s13, 3
    %p238 = pnand %p236, %p237
    %p239 = pneg %p238
    // Predicated region
    $region45: #{tpu_custom_call.1} parent=5 // pred_check
      _
    $region46: #{tpu_custom_call.1} parent=5 // pred_check_branch
      %241 = sbr.rel (%p238) target = $region48
    $region47: #{tpu_custom_call.1} parent=5 // pred_region
      %s242 = ssub.s32 %s13, 1
      %p243 = scmp.lt.s32.totalorder %s18, 1
      %s244 = scalar_select %p243, %s18, 1
      %s245 = smul.addr %s244, 24
      %s246 = smul.addr %s245, 8
      %s247 = scalar_lea.vmem %s0, %s246
      %p248 = pneg %p39
      %p249 = pneg %p36
      %p250 = pneg %p60
      %p251 = pneg %p57
      %p252 = pneg %p81
      %p253 = pneg %p78
      %p254 = pneg %p102
      %p255 = pneg %p99
      %p256 = pneg %p123
      %p257 = pneg %p120
      %p258 = pneg %p144
      %p259 = pneg %p141
      %p260 = pneg %p165
      %p261 = pneg %p162
      %p262 = pneg %p191
      %p263 = pneg %p188
      %p264 = scmp.lt.s32.totalorder %s18, 1
      %s265 = scalar_select %p264, %s18, 1
      %s266 = smul.addr %s265, 8
      %s267 = smul.addr %s266, 8
      %s268 = scalar_lea.vmem %s7, %s267
      %p269 = scmp.lt.s32.totalorder %s18, 1
      %s270 = scalar_select %p269, %s18, 1
      %s271 = smul.addr %s270, 24
      %s272 = smul.addr %s271, 8
      %s273 = scalar_lea.vmem %s0, %s272
      %p274 = scmp.lt.s32.totalorder %s18, 1
      %s275 = scalar_select %p274, %s18, 1
      %s276 = smul.addr %s275, 8
      %s277 = smul.addr %s276, 8
      %s278 = scalar_lea.vmem %s7, %s277
      %s279 = smul.u32 0, 16
      %s280 = scalar_lea.vmem %s273, %s279
      %v281 = vld [vmem:[%s280] sm:$0xff]
      %v282 = vld [vmem:[%s280 + $0x10] sm:$0xff]
      %v283 = vld [vmem:[%s280 + $0x20] sm:$0xff]
      %v284 = vld [vmem:[%s280 + $0x30] sm:$0xff]
      %v285 = vld [vmem:[%s280 + $0x40] sm:$0xff]
      %v286 = vld [vmem:[%s280 + $0x50] sm:$0xff]
      %v287 = vld [vmem:[%s280 + $0x60] sm:$0xff]
      %v288 = vld [vmem:[%s280 + $0x70] sm:$0xff]
      %v289 = vld [vmem:[%s280 + $0x1] sm:$0xff]
      %v290 = vld [vmem:[%s280 + $0x11] sm:$0xff]
      %v291 = vld [vmem:[%s280 + $0x21] sm:$0xff]
      %v292 = vld [vmem:[%s280 + $0x31] sm:$0xff]
      %v293 = vld [vmem:[%s280 + $0x41] sm:$0xff]
      %v294 = vld [vmem:[%s280 + $0x51] sm:$0xff]
      %v295 = vld [vmem:[%s280 + $0x61] sm:$0xff]
      %v296 = vld [vmem:[%s280 + $0x71] sm:$0xff]
      %v297 = vld [vmem:[%s280 + $0x2] sm:$0xff]
      %v298 = vld [vmem:[%s280 + $0x12] sm:$0xff]
      %v299 = vld [vmem:[%s280 + $0x22] sm:$0xff]
      %v300 = vld [vmem:[%s280 + $0x32] sm:$0xff]
      %v301 = vld [vmem:[%s280 + $0x42] sm:$0xff]
      %v302 = vld [vmem:[%s280 + $0x52] sm:$0xff]
      %v303 = vld [vmem:[%s280 + $0x62] sm:$0xff]
      %v304 = vld [vmem:[%s280 + $0x72] sm:$0xff]
      %v305 = vld [vmem:[%s280 + $0x3] sm:$0xff]
      %v306 = vld [vmem:[%s280 + $0x13] sm:$0xff]
      %v307 = vld [vmem:[%s280 + $0x23] sm:$0xff]
      %v308 = vld [vmem:[%s280 + $0x33] sm:$0xff]
      %v309 = vld [vmem:[%s280 + $0x43] sm:$0xff]
      %v310 = vld [vmem:[%s280 + $0x53] sm:$0xff]
      %v311 = vld [vmem:[%s280 + $0x63] sm:$0xff]
      %v312 = vld [vmem:[%s280 + $0x73] sm:$0xff]
      %v313 = vld [vmem:[%s280 + $0x4] sm:$0xff]
      %v314 = vld [vmem:[%s280 + $0x14] sm:$0xff]
      %v315 = vld [vmem:[%s280 + $0x24] sm:$0xff]
      %v316 = vld [vmem:[%s280 + $0x34] sm:$0xff]
      %v317 = vld [vmem:[%s280 + $0x44] sm:$0xff]
      %v318 = vld [vmem:[%s280 + $0x54] sm:$0xff]
      %v319 = vld [vmem:[%s280 + $0x64] sm:$0xff]
      %v320 = vld [vmem:[%s280 + $0x74] sm:$0xff]
      %s321 = sadd.s32 0, 1
      %s322 = smul.u32 %s321, 16
      %s323 = scalar_lea.vmem %s273, %s322
      %v324 = vld [vmem:[%s323] sm:$0xff]
      %v325 = vld [vmem:[%s323 + $0x10] sm:$0xff]
      %v326 = vld [vmem:[%s323 + $0x20] sm:$0xff]
      %v327 = vld [vmem:[%s323 + $0x30] sm:$0xff]
      %v328 = vld [vmem:[%s323 + $0x40] sm:$0xff]
      %v329 = vld [vmem:[%s323 + $0x50] sm:$0xff]
      %v330 = vld [vmem:[%s323 + $0x60] sm:$0xff]
      %v331 = vld [vmem:[%s323 + $0x70] sm:$0xff]
      %v332 = vld [vmem:[%s323 + $0x1] sm:$0xff]
      %v333 = vld [vmem:[%s323 + $0x11] sm:$0xff]
      %v334 = vld [vmem:[%s323 + $0x21] sm:$0xff]
      %v335 = vld [vmem:[%s323 + $0x31] sm:$0xff]
      %v336 = vld [vmem:[%s323 + $0x41] sm:$0xff]
      %v337 = vld [vmem:[%s323 + $0x51] sm:$0xff]
      %v338 = vld [vmem:[%s323 + $0x61] sm:$0xff]
      %v339 = vld [vmem:[%s323 + $0x71] sm:$0xff]
      %v340 = vld [vmem:[%s323 + $0x2] sm:$0xff]
      %v341 = vld [vmem:[%s323 + $0x12] sm:$0xff]
      %v342 = vld [vmem:[%s323 + $0x22] sm:$0xff]
      %v343 = vld [vmem:[%s323 + $0x32] sm:$0xff]
      %v344 = vld [vmem:[%s323 + $0x42] sm:$0xff]
      %v345 = vld [vmem:[%s323 + $0x52] sm:$0xff]
      %v346 = vld [vmem:[%s323 + $0x62] sm:$0xff]
      %v347 = vld [vmem:[%s323 + $0x72] sm:$0xff]
      %v348 = vld [vmem:[%s323 + $0x3] sm:$0xff]
      %v349 = vld [vmem:[%s323 + $0x13] sm:$0xff]
      %v350 = vld [vmem:[%s323 + $0x23] sm:$0xff]
      %v351 = vld [vmem:[%s323 + $0x33] sm:$0xff]
      %v352 = vld [vmem:[%s323 + $0x43] sm:$0xff]
      %v353 = vld [vmem:[%s323 + $0x53] sm:$0xff]
      %v354 = vld [vmem:[%s323 + $0x63] sm:$0xff]
      %v355 = vld [vmem:[%s323 + $0x73] sm:$0xff]
      %v356 = vld [vmem:[%s323 + $0x4] sm:$0xff]
      %v357 = vld [vmem:[%s323 + $0x14] sm:$0xff]
      %v358 = vld [vmem:[%s323 + $0x24] sm:$0xff]
      %v359 = vld [vmem:[%s323 + $0x34] sm:$0xff]
      %v360 = vld [vmem:[%s323 + $0x44] sm:$0xff]
      %v361 = vld [vmem:[%s323 + $0x54] sm:$0xff]
      %v362 = vld [vmem:[%s323 + $0x64] sm:$0xff]
      %v363 = vld [vmem:[%s323 + $0x74] sm:$0xff]
      %s364 = sadd.s32 0, 2
      %s365 = smul.u32 %s364, 16
      %s366 = scalar_lea.vmem %s273, %s365
      %v367 = vld [vmem:[%s366] sm:$0xff]
      %v368 = vld [vmem:[%s366 + $0x10] sm:$0xff]
      %v369 = vld [vmem:[%s366 + $0x20] sm:$0xff]
      %v370 = vld [vmem:[%s366 + $0x30] sm:$0xff]
      %v371 = vld [vmem:[%s366 + $0x40] sm:$0xff]
      %v372 = vld [vmem:[%s366 + $0x50] sm:$0xff]
      %v373 = vld [vmem:[%s366 + $0x60] sm:$0xff]
      %v374 = vld [vmem:[%s366 + $0x70] sm:$0xff]
      %v375 = vld [vmem:[%s366 + $0x1] sm:$0xff]
      %v376 = vld [vmem:[%s366 + $0x11] sm:$0xff]
      %v377 = vld [vmem:[%s366 + $0x21] sm:$0xff]
      %v378 = vld [vmem:[%s366 + $0x31] sm:$0xff]
      %v379 = vld [vmem:[%s366 + $0x41] sm:$0xff]
      %v380 = vld [vmem:[%s366 + $0x51] sm:$0xff]
      %v381 = vld [vmem:[%s366 + $0x61] sm:$0xff]
      %v382 = vld [vmem:[%s366 + $0x71] sm:$0xff]
      %v383 = vld [vmem:[%s366 + $0x2] sm:$0xff]
      %v384 = vld [vmem:[%s366 + $0x12] sm:$0xff]
      %v385 = vld [vmem:[%s366 + $0x22] sm:$0xff]
      %v386 = vld [vmem:[%s366 + $0x32] sm:$0xff]
      %v387 = vld [vmem:[%s366 + $0x42] sm:$0xff]
      %v388 = vld [vmem:[%s366 + $0x52] sm:$0xff]
      %v389 = vld [vmem:[%s366 + $0x62] sm:$0xff]
      %v390 = vld [vmem:[%s366 + $0x72] sm:$0xff]
      %v391 = vld [vmem:[%s366 + $0x3] sm:$0xff]
      %v392 = vld [vmem:[%s366 + $0x13] sm:$0xff]
      %v393 = vld [vmem:[%s366 + $0x23] sm:$0xff]
      %v394 = vld [vmem:[%s366 + $0x33] sm:$0xff]
      %v395 = vld [vmem:[%s366 + $0x43] sm:$0xff]
      %v396 = vld [vmem:[%s366 + $0x53] sm:$0xff]
      %v397 = vld [vmem:[%s366 + $0x63] sm:$0xff]
      %v398 = vld [vmem:[%s366 + $0x73] sm:$0xff]
      %v399 = vld [vmem:[%s366 + $0x4] sm:$0xff]
      %v400 = vld [vmem:[%s366 + $0x14] sm:$0xff]
      %v401 = vld [vmem:[%s366 + $0x24] sm:$0xff]
      %v402 = vld [vmem:[%s366 + $0x34] sm:$0xff]
      %v403 = vld [vmem:[%s366 + $0x44] sm:$0xff]
      %v404 = vld [vmem:[%s366 + $0x54] sm:$0xff]
      %v405 = vld [vmem:[%s366 + $0x64] sm:$0xff]
      %v406 = vld [vmem:[%s366 + $0x74] sm:$0xff]
      %s407 = sadd.s32 0, 3
      %s408 = smul.u32 %s407, 16
      %s409 = scalar_lea.vmem %s273, %s408
      %v410 = vld [vmem:[%s409] sm:$0xff]
      %v411 = vld [vmem:[%s409 + $0x10] sm:$0xff]
      %v412 = vld [vmem:[%s409 + $0x20] sm:$0xff]
      %v413 = vld [vmem:[%s409 + $0x30] sm:$0xff]
      %v414 = vld [vmem:[%s409 + $0x40] sm:$0xff]
      %v415 = vld [vmem:[%s409 + $0x50] sm:$0xff]
      %v416 = vld [vmem:[%s409 + $0x60] sm:$0xff]
      %v417 = vld [vmem:[%s409 + $0x70] sm:$0xff]
      %v418 = vld [vmem:[%s409 + $0x1] sm:$0xff]
      %v419 = vld [vmem:[%s409 + $0x11] sm:$0xff]
      %v420 = vld [vmem:[%s409 + $0x21] sm:$0xff]
      %v421 = vld [vmem:[%s409 + $0x31] sm:$0xff]
      %v422 = vld [vmem:[%s409 + $0x41] sm:$0xff]
      %v423 = vld [vmem:[%s409 + $0x51] sm:$0xff]
      %v424 = vld [vmem:[%s409 + $0x61] sm:$0xff]
      %v425 = vld [vmem:[%s409 + $0x71] sm:$0xff]
      %v426 = vld [vmem:[%s409 + $0x2] sm:$0xff]
      %v427 = vld [vmem:[%s409 + $0x12] sm:$0xff]
      %v428 = vld [vmem:[%s409 + $0x22] sm:$0xff]
      %v429 = vld [vmem:[%s409 + $0x32] sm:$0xff]
      %v430 = vld [vmem:[%s409 + $0x42] sm:$0xff]
      %v431 = vld [vmem:[%s409 + $0x52] sm:$0xff]
      %v432 = vld [vmem:[%s409 + $0x62] sm:$0xff]
      %v433 = vld [vmem:[%s409 + $0x72] sm:$0xff]
      %v434 = vld [vmem:[%s409 + $0x3] sm:$0xff]
      %v435 = vld [vmem:[%s409 + $0x13] sm:$0xff]
      %v436 = vld [vmem:[%s409 + $0x23] sm:$0xff]
      %v437 = vld [vmem:[%s409 + $0x33] sm:$0xff]
      %v438 = vld [vmem:[%s409 + $0x43] sm:$0xff]
      %v439 = vld [vmem:[%s409 + $0x53] sm:$0xff]
      %v440 = vld [vmem:[%s409 + $0x63] sm:$0xff]
      %v441 = vld [vmem:[%s409 + $0x73] sm:$0xff]
      %v442 = vld [vmem:[%s409 + $0x4] sm:$0xff]
      %v443 = vld [vmem:[%s409 + $0x14] sm:$0xff]
      %v444 = vld [vmem:[%s409 + $0x24] sm:$0xff]
      %v445 = vld [vmem:[%s409 + $0x34] sm:$0xff]
      %v446 = vld [vmem:[%s409 + $0x44] sm:$0xff]
      %v447 = vld [vmem:[%s409 + $0x54] sm:$0xff]
      %v448 = vld [vmem:[%s409 + $0x64] sm:$0xff]
      %v449 = vld [vmem:[%s409 + $0x74] sm:$0xff]
      %s450 = sadd.s32 0, 4
      %s451 = smul.u32 %s450, 16
      %s452 = scalar_lea.vmem %s273, %s451
      %v453 = vld [vmem:[%s452] sm:$0xff]
      %v454 = vld [vmem:[%s452 + $0x10] sm:$0xff]
      %v455 = vld [vmem:[%s452 + $0x20] sm:$0xff]
      %v456 = vld [vmem:[%s452 + $0x30] sm:$0xff]
      %v457 = vld [vmem:[%s452 + $0x40] sm:$0xff]
      %v458 = vld [vmem:[%s452 + $0x50] sm:$0xff]
      %v459 = vld [vmem:[%s452 + $0x60] sm:$0xff]
      %v460 = vld [vmem:[%s452 + $0x70] sm:$0xff]
      %v461 = vld [vmem:[%s452 + $0x1] sm:$0xff]
      %v462 = vld [vmem:[%s452 + $0x11] sm:$0xff]
      %v463 = vld [vmem:[%s452 + $0x21] sm:$0xff]
      %v464 = vld [vmem:[%s452 + $0x31] sm:$0xff]
      %v465 = vld [vmem:[%s452 + $0x41] sm:$0xff]
      %v466 = vld [vmem:[%s452 + $0x51] sm:$0xff]
      %v467 = vld [vmem:[%s452 + $0x61] sm:$0xff]
      %v468 = vld [vmem:[%s452 + $0x71] sm:$0xff]
      %v469 = vld [vmem:[%s452 + $0x2] sm:$0xff]
      %v470 = vld [vmem:[%s452 + $0x12] sm:$0xff]
      %v471 = vld [vmem:[%s452 + $0x22] sm:$0xff]
      %v472 = vld [vmem:[%s452 + $0x32] sm:$0xff]
      %v473 = vld [vmem:[%s452 + $0x42] sm:$0xff]
      %v474 = vld [vmem:[%s452 + $0x52] sm:$0xff]
      %v475 = vld [vmem:[%s452 + $0x62] sm:$0xff]
      %v476 = vld [vmem:[%s452 + $0x72] sm:$0xff]
      %v477 = vld [vmem:[%s452 + $0x3] sm:$0xff]
      %v478 = vld [vmem:[%s452 + $0x13] sm:$0xff]
      %v479 = vld [vmem:[%s452 + $0x23] sm:$0xff]
      %v480 = vld [vmem:[%s452 + $0x33] sm:$0xff]
      %v481 = vld [vmem:[%s452 + $0x43] sm:$0xff]
      %v482 = vld [vmem:[%s452 + $0x53] sm:$0xff]
      %v483 = vld [vmem:[%s452 + $0x63] sm:$0xff]
      %v484 = vld [vmem:[%s452 + $0x73] sm:$0xff]
      %v485 = vld [vmem:[%s452 + $0x4] sm:$0xff]
      %v486 = vld [vmem:[%s452 + $0x14] sm:$0xff]
      %v487 = vld [vmem:[%s452 + $0x24] sm:$0xff]
      %v488 = vld [vmem:[%s452 + $0x34] sm:$0xff]
      %v489 = vld [vmem:[%s452 + $0x44] sm:$0xff]
      %v490 = vld [vmem:[%s452 + $0x54] sm:$0xff]
      %v491 = vld [vmem:[%s452 + $0x64] sm:$0xff]
      %v492 = vld [vmem:[%s452 + $0x74] sm:$0xff]
      %501 = vrot.lane.b32.xlu0 %v289, 16
      %v502 = vpop.permute.xlu0 %501
      %503 = vrot.lane.b32.xlu0 %v290, 16
      %v504 = vpop.permute.xlu0 %503
      %505 = vrot.lane.b32.xlu0 %v291, 16
      %v506 = vpop.permute.xlu0 %505
      %507 = vrot.lane.b32.xlu0 %v292, 16
      %v508 = vpop.permute.xlu0 %507
      %509 = vrot.lane.b32.xlu0 %v293, 16
      %v510 = vpop.permute.xlu0 %509
      %511 = vrot.lane.b32.xlu0 %v294, 16
      %v512 = vpop.permute.xlu0 %511
      %513 = vrot.lane.b32.xlu0 %v295, 16
      %v514 = vpop.permute.xlu0 %513
      %515 = vrot.lane.b32.xlu0 %v296, 16
      %v516 = vpop.permute.xlu0 %515
      %533 = vrot.lane.b32.xlu0 %v297, 32
      %v534 = vpop.permute.xlu0 %533
      %535 = vrot.lane.b32.xlu0 %v298, 32
      %v536 = vpop.permute.xlu0 %535
      %537 = vrot.lane.b32.xlu0 %v299, 32
      %v538 = vpop.permute.xlu0 %537
      %539 = vrot.lane.b32.xlu0 %v300, 32
      %v540 = vpop.permute.xlu0 %539
      %541 = vrot.lane.b32.xlu0 %v301, 32
      %v542 = vpop.permute.xlu0 %541
      %543 = vrot.lane.b32.xlu0 %v302, 32
      %v544 = vpop.permute.xlu0 %543
      %545 = vrot.lane.b32.xlu0 %v303, 32
      %v546 = vpop.permute.xlu0 %545
      %547 = vrot.lane.b32.xlu0 %v304, 32
      %v548 = vpop.permute.xlu0 %547
      %565 = vrot.lane.b32.xlu0 %v305, 48
      %v566 = vpop.permute.xlu0 %565
      %567 = vrot.lane.b32.xlu0 %v306, 48
      %v568 = vpop.permute.xlu0 %567
      %569 = vrot.lane.b32.xlu0 %v307, 48
      %v570 = vpop.permute.xlu0 %569
      %571 = vrot.lane.b32.xlu0 %v308, 48
      %v572 = vpop.permute.xlu0 %571
      %573 = vrot.lane.b32.xlu0 %v309, 48
      %v574 = vpop.permute.xlu0 %573
      %575 = vrot.lane.b32.xlu0 %v310, 48
      %v576 = vpop.permute.xlu0 %575
      %577 = vrot.lane.b32.xlu0 %v311, 48
      %v578 = vpop.permute.xlu0 %577
      %579 = vrot.lane.b32.xlu0 %v312, 48
      %v580 = vpop.permute.xlu0 %579
      %597 = vrot.lane.b32.xlu0 %v313, 64
      %v598 = vpop.permute.xlu0 %597
      %599 = vrot.lane.b32.xlu0 %v314, 64
      %v600 = vpop.permute.xlu0 %599
      %601 = vrot.lane.b32.xlu0 %v315, 64
      %v602 = vpop.permute.xlu0 %601
      %603 = vrot.lane.b32.xlu0 %v316, 64
      %v604 = vpop.permute.xlu0 %603
      %605 = vrot.lane.b32.xlu0 %v317, 64
      %v606 = vpop.permute.xlu0 %605
      %607 = vrot.lane.b32.xlu0 %v318, 64
      %v608 = vpop.permute.xlu0 %607
      %609 = vrot.lane.b32.xlu0 %v319, 64
      %v610 = vpop.permute.xlu0 %609
      %611 = vrot.lane.b32.xlu0 %v320, 64
      %v612 = vpop.permute.xlu0 %611
      %629 = vrot.lane.b32.xlu0 %v324, 80
      %v630 = vpop.permute.xlu0 %629
      %631 = vrot.lane.b32.xlu0 %v325, 80
      %v632 = vpop.permute.xlu0 %631
      %633 = vrot.lane.b32.xlu0 %v326, 80
      %v634 = vpop.permute.xlu0 %633
      %635 = vrot.lane.b32.xlu0 %v327, 80
      %v636 = vpop.permute.xlu0 %635
      %637 = vrot.lane.b32.xlu0 %v328, 80
      %v638 = vpop.permute.xlu0 %637
      %639 = vrot.lane.b32.xlu0 %v329, 80
      %v640 = vpop.permute.xlu0 %639
      %641 = vrot.lane.b32.xlu0 %v330, 80
      %v642 = vpop.permute.xlu0 %641
      %643 = vrot.lane.b32.xlu0 %v331, 80
      %v644 = vpop.permute.xlu0 %643
      %661 = vrot.lane.b32.xlu0 %v332, 96
      %v662 = vpop.permute.xlu0 %661
      %663 = vrot.lane.b32.xlu0 %v333, 96
      %v664 = vpop.permute.xlu0 %663
      %665 = vrot.lane.b32.xlu0 %v334, 96
      %v666 = vpop.permute.xlu0 %665
      %667 = vrot.lane.b32.xlu0 %v335, 96
      %v668 = vpop.permute.xlu0 %667
      %669 = vrot.lane.b32.xlu0 %v336, 96
      %v670 = vpop.permute.xlu0 %669
      %671 = vrot.lane.b32.xlu0 %v337, 96
      %v672 = vpop.permute.xlu0 %671
      %673 = vrot.lane.b32.xlu0 %v338, 96
      %v674 = vpop.permute.xlu0 %673
      %675 = vrot.lane.b32.xlu0 %v339, 96
      %v676 = vpop.permute.xlu0 %675
      %693 = vrot.lane.b32.xlu0 %v340, 112
      %v694 = vpop.permute.xlu0 %693
      %695 = vrot.lane.b32.xlu0 %v341, 112
      %v696 = vpop.permute.xlu0 %695
      %697 = vrot.lane.b32.xlu0 %v342, 112
      %v698 = vpop.permute.xlu0 %697
      %699 = vrot.lane.b32.xlu0 %v343, 112
      %v700 = vpop.permute.xlu0 %699
      %701 = vrot.lane.b32.xlu0 %v344, 112
      %v702 = vpop.permute.xlu0 %701
      %703 = vrot.lane.b32.xlu0 %v345, 112
      %v704 = vpop.permute.xlu0 %703
      %705 = vrot.lane.b32.xlu0 %v346, 112
      %v706 = vpop.permute.xlu0 %705
      %707 = vrot.lane.b32.xlu0 %v347, 112
      %v708 = vpop.permute.xlu0 %707
      %725 = vrot.lane.b32.xlu0 %v356, 16
      %v726 = vpop.permute.xlu0 %725
      %727 = vrot.lane.b32.xlu0 %v357, 16
      %v728 = vpop.permute.xlu0 %727
      %729 = vrot.lane.b32.xlu0 %v358, 16
      %v730 = vpop.permute.xlu0 %729
      %731 = vrot.lane.b32.xlu0 %v359, 16
      %v732 = vpop.permute.xlu0 %731
      %733 = vrot.lane.b32.xlu0 %v360, 16
      %v734 = vpop.permute.xlu0 %733
      %735 = vrot.lane.b32.xlu0 %v361, 16
      %v736 = vpop.permute.xlu0 %735
      %737 = vrot.lane.b32.xlu0 %v362, 16
      %v738 = vpop.permute.xlu0 %737
      %739 = vrot.lane.b32.xlu0 %v363, 16
      %v740 = vpop.permute.xlu0 %739
      %757 = vrot.lane.b32.xlu0 %v367, 32
      %v758 = vpop.permute.xlu0 %757
      %759 = vrot.lane.b32.xlu0 %v368, 32
      %v760 = vpop.permute.xlu0 %759
      %761 = vrot.lane.b32.xlu0 %v369, 32
      %v762 = vpop.permute.xlu0 %761
      %763 = vrot.lane.b32.xlu0 %v370, 32
      %v764 = vpop.permute.xlu0 %763
      %765 = vrot.lane.b32.xlu0 %v371, 32
      %v766 = vpop.permute.xlu0 %765
      %767 = vrot.lane.b32.xlu0 %v372, 32
      %v768 = vpop.permute.xlu0 %767
      %769 = vrot.lane.b32.xlu0 %v373, 32
      %v770 = vpop.permute.xlu0 %769
      %771 = vrot.lane.b32.xlu0 %v374, 32
      %v772 = vpop.permute.xlu0 %771
      %789 = vrot.lane.b32.xlu0 %v375, 48
      %v790 = vpop.permute.xlu0 %789
      %791 = vrot.lane.b32.xlu0 %v376, 48
      %v792 = vpop.permute.xlu0 %791
      %793 = vrot.lane.b32.xlu0 %v377, 48
      %v794 = vpop.permute.xlu0 %793
      %795 = vrot.lane.b32.xlu0 %v378, 48
      %v796 = vpop.permute.xlu0 %795
      %797 = vrot.lane.b32.xlu0 %v379, 48
      %v798 = vpop.permute.xlu0 %797
      %799 = vrot.lane.b32.xlu0 %v380, 48
      %v800 = vpop.permute.xlu0 %799
      %801 = vrot.lane.b32.xlu0 %v381, 48
      %v802 = vpop.permute.xlu0 %801
      %803 = vrot.lane.b32.xlu0 %v382, 48
      %v804 = vpop.permute.xlu0 %803
      %821 = vrot.lane.b32.xlu0 %v383, 64
      %v822 = vpop.permute.xlu0 %821
      %823 = vrot.lane.b32.xlu0 %v384, 64
      %v824 = vpop.permute.xlu0 %823
      %825 = vrot.lane.b32.xlu0 %v385, 64
      %v826 = vpop.permute.xlu0 %825
      %827 = vrot.lane.b32.xlu0 %v386, 64
      %v828 = vpop.permute.xlu0 %827
      %829 = vrot.lane.b32.xlu0 %v387, 64
      %v830 = vpop.permute.xlu0 %829
      %831 = vrot.lane.b32.xlu0 %v388, 64
      %v832 = vpop.permute.xlu0 %831
      %833 = vrot.lane.b32.xlu0 %v389, 64
      %v834 = vpop.permute.xlu0 %833
      %835 = vrot.lane.b32.xlu0 %v390, 64
      %v836 = vpop.permute.xlu0 %835
      %853 = vrot.lane.b32.xlu0 %v391, 80
      %v854 = vpop.permute.xlu0 %853
      %855 = vrot.lane.b32.xlu0 %v392, 80
      %v856 = vpop.permute.xlu0 %855
      %857 = vrot.lane.b32.xlu0 %v393, 80
      %v858 = vpop.permute.xlu0 %857
      %859 = vrot.lane.b32.xlu0 %v394, 80
      %v860 = vpop.permute.xlu0 %859
      %861 = vrot.lane.b32.xlu0 %v395, 80
      %v862 = vpop.permute.xlu0 %861
      %863 = vrot.lane.b32.xlu0 %v396, 80
      %v864 = vpop.permute.xlu0 %863
      %865 = vrot.lane.b32.xlu0 %v397, 80
      %v866 = vpop.permute.xlu0 %865
      %867 = vrot.lane.b32.xlu0 %v398, 80
      %v868 = vpop.permute.xlu0 %867
      %885 = vrot.lane.b32.xlu0 %v399, 96
      %v886 = vpop.permute.xlu0 %885
      %887 = vrot.lane.b32.xlu0 %v400, 96
      %v888 = vpop.permute.xlu0 %887
      %889 = vrot.lane.b32.xlu0 %v401, 96
      %v890 = vpop.permute.xlu0 %889
      %891 = vrot.lane.b32.xlu0 %v402, 96
      %v892 = vpop.permute.xlu0 %891
      %893 = vrot.lane.b32.xlu0 %v403, 96
      %v894 = vpop.permute.xlu0 %893
      %895 = vrot.lane.b32.xlu0 %v404, 96
      %v896 = vpop.permute.xlu0 %895
      %897 = vrot.lane.b32.xlu0 %v405, 96
      %v898 = vpop.permute.xlu0 %897
      %899 = vrot.lane.b32.xlu0 %v406, 96
      %v900 = vpop.permute.xlu0 %899
      %917 = vrot.lane.b32.xlu0 %v410, 112
      %v918 = vpop.permute.xlu0 %917
      %919 = vrot.lane.b32.xlu0 %v411, 112
      %v920 = vpop.permute.xlu0 %919
      %921 = vrot.lane.b32.xlu0 %v412, 112
      %v922 = vpop.permute.xlu0 %921
      %923 = vrot.lane.b32.xlu0 %v413, 112
      %v924 = vpop.permute.xlu0 %923
      %925 = vrot.lane.b32.xlu0 %v414, 112
      %v926 = vpop.permute.xlu0 %925
      %927 = vrot.lane.b32.xlu0 %v415, 112
      %v928 = vpop.permute.xlu0 %927
      %929 = vrot.lane.b32.xlu0 %v416, 112
      %v930 = vpop.permute.xlu0 %929
      %931 = vrot.lane.b32.xlu0 %v417, 112
      %v932 = vpop.permute.xlu0 %931
      %vm941 = vcmask 130048
      %v942 = vsel %vm941, %v281, %v502
      %v943 = vsel %vm941, %v282, %v504
      %v944 = vsel %vm941, %v283, %v506
      %v945 = vsel %vm941, %v284, %v508
      %v946 = vsel %vm941, %v285, %v510
      %v947 = vsel %vm941, %v286, %v512
      %v948 = vsel %vm941, %v287, %v514
      %v949 = vsel %vm941, %v288, %v516
      %vm950 = vcmask 261120
      %v951 = vsel %vm950, %v942, %v534
      %v952 = vsel %vm950, %v943, %v536
      %v953 = vsel %vm950, %v944, %v538
      %v954 = vsel %vm950, %v945, %v540
      %v955 = vsel %vm950, %v946, %v542
      %v956 = vsel %vm950, %v947, %v544
      %v957 = vsel %vm950, %v948, %v546
      %v958 = vsel %vm950, %v949, %v548
      %vm959 = vcmask 392192
      %v960 = vsel %vm959, %v951, %v566
      %v961 = vsel %vm959, %v952, %v568
      %v962 = vsel %vm959, %v953, %v570
      %v963 = vsel %vm959, %v954, %v572
      %v964 = vsel %vm959, %v955, %v574
      %v965 = vsel %vm959, %v956, %v576
      %v966 = vsel %vm959, %v957, %v578
      %v967 = vsel %vm959, %v958, %v580
      %vm968 = vcmask 523264
      %v969 = vsel %vm968, %v960, %v598
      %v970 = vsel %vm968, %v961, %v600
      %v971 = vsel %vm968, %v962, %v602
      %v972 = vsel %vm968, %v963, %v604
      %v973 = vsel %vm968, %v964, %v606
      %v974 = vsel %vm968, %v965, %v608
      %v975 = vsel %vm968, %v966, %v610
      %v976 = vsel %vm968, %v967, %v612
      %vm977 = vcmask 654336
      %v978 = vsel %vm977, %v969, %v630
      %v979 = vsel %vm977, %v970, %v632
      %v980 = vsel %vm977, %v971, %v634
      %v981 = vsel %vm977, %v972, %v636
      %v982 = vsel %vm977, %v973, %v638
      %v983 = vsel %vm977, %v974, %v640
      %v984 = vsel %vm977, %v975, %v642
      %v985 = vsel %vm977, %v976, %v644
      %vm986 = vcmask 785408
      %v987 = vsel %vm986, %v978, %v662
      %v988 = vsel %vm986, %v979, %v664
      %v989 = vsel %vm986, %v980, %v666
      %v990 = vsel %vm986, %v981, %v668
      %v991 = vsel %vm986, %v982, %v670
      %v992 = vsel %vm986, %v983, %v672
      %v993 = vsel %vm986, %v984, %v674
      %v994 = vsel %vm986, %v985, %v676
      %vm995 = vcmask 916480
      %v996 = vsel %vm995, %v987, %v694
      %v997 = vsel %vm995, %v988, %v696
      %v998 = vsel %vm995, %v989, %v698
      %v999 = vsel %vm995, %v990, %v700
      %v1000 = vsel %vm995, %v991, %v702
      %v1001 = vsel %vm995, %v992, %v704
      %v1002 = vsel %vm995, %v993, %v706
      %v1003 = vsel %vm995, %v994, %v708
      %v1004 = vsel %vm941, %v348, %v726
      %v1005 = vsel %vm941, %v349, %v728
      %v1006 = vsel %vm941, %v350, %v730
      %v1007 = vsel %vm941, %v351, %v732
      %v1008 = vsel %vm941, %v352, %v734
      %v1009 = vsel %vm941, %v353, %v736
      %v1010 = vsel %vm941, %v354, %v738
      %v1011 = vsel %vm941, %v355, %v740
      %v1012 = vsel %vm950, %v1004, %v758
      %v1013 = vsel %vm950, %v1005, %v760
      %v1014 = vsel %vm950, %v1006, %v762
      %v1015 = vsel %vm950, %v1007, %v764
      %v1016 = vsel %vm950, %v1008, %v766
      %v1017 = vsel %vm950, %v1009, %v768
      %v1018 = vsel %vm950, %v1010, %v770
      %v1019 = vsel %vm950, %v1011, %v772
      %v1020 = vsel %vm959, %v1012, %v790
      %v1021 = vsel %vm959, %v1013, %v792
      %v1022 = vsel %vm959, %v1014, %v794
      %v1023 = vsel %vm959, %v1015, %v796
      %v1024 = vsel %vm959, %v1016, %v798
      %v1025 = vsel %vm959, %v1017, %v800
      %v1026 = vsel %vm959, %v1018, %v802
      %v1027 = vsel %vm959, %v1019, %v804
      %v1028 = vsel %vm968, %v1020, %v822
      %v1029 = vsel %vm968, %v1021, %v824
      %v1030 = vsel %vm968, %v1022, %v826
      %v1031 = vsel %vm968, %v1023, %v828
      %v1032 = vsel %vm968, %v1024, %v830
      %v1033 = vsel %vm968, %v1025, %v832
      %v1034 = vsel %vm968, %v1026, %v834
      %v1035 = vsel %vm968, %v1027, %v836
      %v1036 = vsel %vm977, %v1028, %v854
      %v1037 = vsel %vm977, %v1029, %v856
      %v1038 = vsel %vm977, %v1030, %v858
      %v1039 = vsel %vm977, %v1031, %v860
      %v1040 = vsel %vm977, %v1032, %v862
      %v1041 = vsel %vm977, %v1033, %v864
      %v1042 = vsel %vm977, %v1034, %v866
      %v1043 = vsel %vm977, %v1035, %v868
      %v1044 = vsel %vm986, %v1036, %v886
      %v1045 = vsel %vm986, %v1037, %v888
      %v1046 = vsel %vm986, %v1038, %v890
      %v1047 = vsel %vm986, %v1039, %v892
      %v1048 = vsel %vm986, %v1040, %v894
      %v1049 = vsel %vm986, %v1041, %v896
      %v1050 = vsel %vm986, %v1042, %v898
      %v1051 = vsel %vm986, %v1043, %v900
      %v1052 = vsel %vm995, %v1044, %v918
      %v1053 = vsel %vm995, %v1045, %v920
      %v1054 = vsel %vm995, %v1046, %v922
      %v1055 = vsel %vm995, %v1047, %v924
      %v1056 = vsel %vm995, %v1048, %v926
      %v1057 = vsel %vm995, %v1049, %v928
      %v1058 = vsel %vm995, %v1050, %v930
      %v1059 = vsel %vm995, %v1051, %v932
      %1068 = vrot.lane.b32.xlu0 %v426, 16
      %v1069 = vpop.permute.xlu0 %1068
      %1070 = vrot.lane.b32.xlu0 %v427, 16
      %v1071 = vpop.permute.xlu0 %1070
      %1072 = vrot.lane.b32.xlu0 %v428, 16
      %v1073 = vpop.permute.xlu0 %1072
      %1074 = vrot.lane.b32.xlu0 %v429, 16
      %v1075 = vpop.permute.xlu0 %1074
      %1076 = vrot.lane.b32.xlu0 %v430, 16
      %v1077 = vpop.permute.xlu0 %1076
      %1078 = vrot.lane.b32.xlu0 %v431, 16
      %v1079 = vpop.permute.xlu0 %1078
      %1080 = vrot.lane.b32.xlu0 %v432, 16
      %v1081 = vpop.permute.xlu0 %1080
      %1082 = vrot.lane.b32.xlu0 %v433, 16
      %v1083 = vpop.permute.xlu0 %1082
      %1100 = vrot.lane.b32.xlu0 %v434, 32
      %v1101 = vpop.permute.xlu0 %1100
      %1102 = vrot.lane.b32.xlu0 %v435, 32
      %v1103 = vpop.permute.xlu0 %1102
      %1104 = vrot.lane.b32.xlu0 %v436, 32
      %v1105 = vpop.permute.xlu0 %1104
      %1106 = vrot.lane.b32.xlu0 %v437, 32
      %v1107 = vpop.permute.xlu0 %1106
      %1108 = vrot.lane.b32.xlu0 %v438, 32
      %v1109 = vpop.permute.xlu0 %1108
      %1110 = vrot.lane.b32.xlu0 %v439, 32
      %v1111 = vpop.permute.xlu0 %1110
      %1112 = vrot.lane.b32.xlu0 %v440, 32
      %v1113 = vpop.permute.xlu0 %1112
      %1114 = vrot.lane.b32.xlu0 %v441, 32
      %v1115 = vpop.permute.xlu0 %1114
      %1132 = vrot.lane.b32.xlu0 %v442, 48
      %v1133 = vpop.permute.xlu0 %1132
      %1134 = vrot.lane.b32.xlu0 %v443, 48
      %v1135 = vpop.permute.xlu0 %1134
      %1136 = vrot.lane.b32.xlu0 %v444, 48
      %v1137 = vpop.permute.xlu0 %1136
      %1138 = vrot.lane.b32.xlu0 %v445, 48
      %v1139 = vpop.permute.xlu0 %1138
      %1140 = vrot.lane.b32.xlu0 %v446, 48
      %v1141 = vpop.permute.xlu0 %1140
      %1142 = vrot.lane.b32.xlu0 %v447, 48
      %v1143 = vpop.permute.xlu0 %1142
      %1144 = vrot.lane.b32.xlu0 %v448, 48
      %v1145 = vpop.permute.xlu0 %1144
      %1146 = vrot.lane.b32.xlu0 %v449, 48
      %v1147 = vpop.permute.xlu0 %1146
      %1164 = vrot.lane.b32.xlu0 %v453, 64
      %v1165 = vpop.permute.xlu0 %1164
      %1166 = vrot.lane.b32.xlu0 %v454, 64
      %v1167 = vpop.permute.xlu0 %1166
      %1168 = vrot.lane.b32.xlu0 %v455, 64
      %v1169 = vpop.permute.xlu0 %1168
      %1170 = vrot.lane.b32.xlu0 %v456, 64
      %v1171 = vpop.permute.xlu0 %1170
      %1172 = vrot.lane.b32.xlu0 %v457, 64
      %v1173 = vpop.permute.xlu0 %1172
      %1174 = vrot.lane.b32.xlu0 %v458, 64
      %v1175 = vpop.permute.xlu0 %1174
      %1176 = vrot.lane.b32.xlu0 %v459, 64
      %v1177 = vpop.permute.xlu0 %1176
      %1178 = vrot.lane.b32.xlu0 %v460, 64
      %v1179 = vpop.permute.xlu0 %1178
      %1196 = vrot.lane.b32.xlu0 %v461, 80
      %v1197 = vpop.permute.xlu0 %1196
      %1198 = vrot.lane.b32.xlu0 %v462, 80
      %v1199 = vpop.permute.xlu0 %1198
      %1200 = vrot.lane.b32.xlu0 %v463, 80
      %v1201 = vpop.permute.xlu0 %1200
      %1202 = vrot.lane.b32.xlu0 %v464, 80
      %v1203 = vpop.permute.xlu0 %1202
      %1204 = vrot.lane.b32.xlu0 %v465, 80
      %v1205 = vpop.permute.xlu0 %1204
      %1206 = vrot.lane.b32.xlu0 %v466, 80
      %v1207 = vpop.permute.xlu0 %1206
      %1208 = vrot.lane.b32.xlu0 %v467, 80
      %v1209 = vpop.permute.xlu0 %1208
      %1210 = vrot.lane.b32.xlu0 %v468, 80
      %v1211 = vpop.permute.xlu0 %1210
      %1228 = vrot.lane.b32.xlu0 %v469, 96
      %v1229 = vpop.permute.xlu0 %1228
      %1230 = vrot.lane.b32.xlu0 %v470, 96
      %v1231 = vpop.permute.xlu0 %1230
      %1232 = vrot.lane.b32.xlu0 %v471, 96
      %v1233 = vpop.permute.xlu0 %1232
      %1234 = vrot.lane.b32.xlu0 %v472, 96
      %v1235 = vpop.permute.xlu0 %1234
      %1236 = vrot.lane.b32.xlu0 %v473, 96
      %v1237 = vpop.permute.xlu0 %1236
      %1238 = vrot.lane.b32.xlu0 %v474, 96
      %v1239 = vpop.permute.xlu0 %1238
      %1240 = vrot.lane.b32.xlu0 %v475, 96
      %v1241 = vpop.permute.xlu0 %1240
      %1242 = vrot.lane.b32.xlu0 %v476, 96
      %v1243 = vpop.permute.xlu0 %1242
      %1260 = vrot.lane.b32.xlu0 %v477, 112
      %v1261 = vpop.permute.xlu0 %1260
      %1262 = vrot.lane.b32.xlu0 %v478, 112
      %v1263 = vpop.permute.xlu0 %1262
      %1264 = vrot.lane.b32.xlu0 %v479, 112
      %v1265 = vpop.permute.xlu0 %1264
      %1266 = vrot.lane.b32.xlu0 %v480, 112
      %v1267 = vpop.permute.xlu0 %1266
      %1268 = vrot.lane.b32.xlu0 %v481, 112
      %v1269 = vpop.permute.xlu0 %1268
      %1270 = vrot.lane.b32.xlu0 %v482, 112
      %v1271 = vpop.permute.xlu0 %1270
      %1272 = vrot.lane.b32.xlu0 %v483, 112
      %v1273 = vpop.permute.xlu0 %1272
      %1274 = vrot.lane.b32.xlu0 %v484, 112
      %v1275 = vpop.permute.xlu0 %1274
      %v1284 = vsel %vm941, %v418, %v1069
      %v1285 = vsel %vm941, %v419, %v1071
      %v1286 = vsel %vm941, %v420, %v1073
      %v1287 = vsel %vm941, %v421, %v1075
      %v1288 = vsel %vm941, %v422, %v1077
      %v1289 = vsel %vm941, %v423, %v1079
      %v1290 = vsel %vm941, %v424, %v1081
      %v1291 = vsel %vm941, %v425, %v1083
      %v1292 = vsel %vm950, %v1284, %v1101
      %v1293 = vsel %vm950, %v1285, %v1103
      %v1294 = vsel %vm950, %v1286, %v1105
      %v1295 = vsel %vm950, %v1287, %v1107
      %v1296 = vsel %vm950, %v1288, %v1109
      %v1297 = vsel %vm950, %v1289, %v1111
      %v1298 = vsel %vm950, %v1290, %v1113
      %v1299 = vsel %vm950, %v1291, %v1115
      %v1300 = vsel %vm959, %v1292, %v1133
      %v1301 = vsel %vm959, %v1293, %v1135
      %v1302 = vsel %vm959, %v1294, %v1137
      %v1303 = vsel %vm959, %v1295, %v1139
      %v1304 = vsel %vm959, %v1296, %v1141
      %v1305 = vsel %vm959, %v1297, %v1143
      %v1306 = vsel %vm959, %v1298, %v1145
      %v1307 = vsel %vm959, %v1299, %v1147
      %v1308 = vsel %vm968, %v1300, %v1165
      %v1309 = vsel %vm968, %v1301, %v1167
      %v1310 = vsel %vm968, %v1302, %v1169
      %v1311 = vsel %vm968, %v1303, %v1171
      %v1312 = vsel %vm968, %v1304, %v1173
      %v1313 = vsel %vm968, %v1305, %v1175
      %v1314 = vsel %vm968, %v1306, %v1177
      %v1315 = vsel %vm968, %v1307, %v1179
      %v1316 = vsel %vm977, %v1308, %v1197
      %v1317 = vsel %vm977, %v1309, %v1199
      %v1318 = vsel %vm977, %v1310, %v1201
      %v1319 = vsel %vm977, %v1311, %v1203
      %v1320 = vsel %vm977, %v1312, %v1205
      %v1321 = vsel %vm977, %v1313, %v1207
      %v1322 = vsel %vm977, %v1314, %v1209
      %v1323 = vsel %vm977, %v1315, %v1211
      %v1324 = vsel %vm986, %v1316, %v1229
      %v1325 = vsel %vm986, %v1317, %v1231
      %v1326 = vsel %vm986, %v1318, %v1233
      %v1327 = vsel %vm986, %v1319, %v1235
      %v1328 = vsel %vm986, %v1320, %v1237
      %v1329 = vsel %vm986, %v1321, %v1239
      %v1330 = vsel %vm986, %v1322, %v1241
      %v1331 = vsel %vm986, %v1323, %v1243
      %v1332 = vsel %vm995, %v1324, %v1261
      %v1333 = vsel %vm995, %v1325, %v1263
      %v1334 = vsel %vm995, %v1326, %v1265
      %v1335 = vsel %vm995, %v1327, %v1267
      %v1336 = vsel %vm995, %v1328, %v1269
      %v1337 = vsel %vm995, %v1329, %v1271
      %v1338 = vsel %vm995, %v1330, %v1273
      %v1339 = vsel %vm995, %v1331, %v1275
      %v1340 = vld [vmem:[%s1] sm:$0xff]
      %v1341 = vld [vmem:[%s1 + $0x8] sm:$0xff]
      %v1342 = vld [vmem:[%s1 + $0x10] sm:$0xff]
      %v1343 = vld [vmem:[%s1 + $0x18] sm:$0xff]
      %v1344 = vld [vmem:[%s1 + $0x20] sm:$0xff]
      %v1345 = vld [vmem:[%s1 + $0x28] sm:$0xff]
      %v1346 = vld [vmem:[%s1 + $0x30] sm:$0xff]
      %v1347 = vld [vmem:[%s1 + $0x38] sm:$0xff]
      %v1348 = vld [vmem:[%s1 + $0x40] sm:$0xff]
      %v1349 = vld [vmem:[%s1 + $0x48] sm:$0xff]
      %v1350 = vld [vmem:[%s1 + $0x50] sm:$0xff]
      %v1351 = vld [vmem:[%s1 + $0x58] sm:$0xff]
      %v1352 = vld [vmem:[%s1 + $0x60] sm:$0xff]
      %v1353 = vld [vmem:[%s1 + $0x68] sm:$0xff]
      %v1354 = vld [vmem:[%s1 + $0x70] sm:$0xff]
      %v1355 = vld [vmem:[%s1 + $0x78] sm:$0xff]
      %v1356 = vld [vmem:[%s1 + $0x80] sm:$0xff]
      %v1357 = vld [vmem:[%s1 + $0x88] sm:$0xff]
      %v1358 = vld [vmem:[%s1 + $0x90] sm:$0xff]
      %v1359 = vld [vmem:[%s1 + $0x98] sm:$0xff]
      %v1360 = vld [vmem:[%s1 + $0xa0] sm:$0xff]
      %v1361 = vld [vmem:[%s1 + $0xa8] sm:$0xff]
      %v1362 = vld [vmem:[%s1 + $0xb0] sm:$0xff]
      %v1363 = vld [vmem:[%s1 + $0xb8] sm:$0xff]
      %v1364 = vld [vmem:[%s1 + $0xc0] sm:$0xff]
      %v1365 = vld [vmem:[%s1 + $0xc8] sm:$0xff]
      %v1366 = vld [vmem:[%s1 + $0xd0] sm:$0xff]
      %v1367 = vld [vmem:[%s1 + $0xd8] sm:$0xff]
      %v1368 = vld [vmem:[%s1 + $0xe0] sm:$0xff]
      %v1369 = vld [vmem:[%s1 + $0xe8] sm:$0xff]
      %v1370 = vld [vmem:[%s1 + $0xf0] sm:$0xff]
      %v1371 = vld [vmem:[%s1 + $0xf8] sm:$0xff]
      %v1372 = vld [vmem:[%s1 + $0x100] sm:$0xff]
      %v1373 = vld [vmem:[%s1 + $0x108] sm:$0xff]
      %v1374 = vld [vmem:[%s1 + $0x110] sm:$0xff]
      %v1375 = vld [vmem:[%s1 + $0x118] sm:$0xff]
      %v1376 = vld [vmem:[%s1 + $0x120] sm:$0xff]
      %v1377 = vld [vmem:[%s1 + $0x128] sm:$0xff]
      %v1378 = vld [vmem:[%s1 + $0x130] sm:$0xff]
      %v1379 = vld [vmem:[%s1 + $0x138] sm:$0xff]
      %v1380 = vld [vmem:[%s1 + $0x140] sm:$0xff]
      %v1381 = vld [vmem:[%s1 + $0x148] sm:$0xff]
      %v1382 = vld [vmem:[%s1 + $0x150] sm:$0xff]
      %v1383 = vld [vmem:[%s1 + $0x158] sm:$0xff]
      %v1384 = vld [vmem:[%s1 + $0x160] sm:$0xff]
      %v1385 = vld [vmem:[%s1 + $0x168] sm:$0xff]
      %v1386 = vld [vmem:[%s1 + $0x170] sm:$0xff]
      %v1387 = vld [vmem:[%s1 + $0x178] sm:$0xff]
      %v1388 = vld [vmem:[%s1 + $0x180] sm:$0xff]
      %v1389 = vld [vmem:[%s1 + $0x188] sm:$0xff]
      %v1390 = vld [vmem:[%s2] sm:$0x1]
      %v1392 = vperm.slane %v1390, 0
      %v1395 = vsel %vm941, %v485, 0
      %v1398 = vsel %vm941, %v486, 0
      %v1401 = vsel %vm941, %v487, 0
      %v1404 = vsel %vm941, %v488, 0
      %v1407 = vsel %vm941, %v489, 0
      %v1410 = vsel %vm941, %v490, 0
      %v1413 = vsel %vm941, %v491, 0
      %v1416 = vsel %vm941, %v492, 0
      %1418 = vmatpush.msra.mxu0 %v1355
      %1419 = vmatpush.msra.mxu0 %v1354
      %1420 = vmatpush.msra.mxu0 %v1353
      %1421 = vmatpush.msra.mxu0 %v1352
      %1422 = vmatpush.msra.mxu0 %v1351
      %1423 = vmatpush.msra.mxu0 %v1350
      %1424 = vmatpush.msra.mxu0 %v1349
      %1425 = vmatpush.msra.mxu0 %v1348
      %1426 = vmatpush.msra.mxu0 %v1347
      %1427 = vmatpush.msra.mxu0 %v1346
      %1428 = vmatpush.msra.mxu0 %v1345
      %1429 = vmatpush.msra.mxu0 %v1344
      %1430 = vmatpush.msra.mxu0 %v1343
      %1431 = vmatpush.msra.mxu0 %v1342
      %1432 = vmatpush.msra.mxu0 %v1341
      %1433 = vmatpush.msra.mxu0 %v1340
      %1434 = vmatmul.f32.gmra.mxu0 %v996
      %v1435 = vpop.f32.mrf.mxu0
      %v1436 = vadd.f32 %v1392, %v1435
      %1437 = vmatmul.f32.gmra.mxu0 %v997
      %v1438 = vpop.f32.mrf.mxu0
      %v1439 = vadd.f32 %v1392, %v1438
      %1440 = vmatmul.f32.gmra.mxu0 %v998
      %v1441 = vpop.f32.mrf.mxu0
      %v1442 = vadd.f32 %v1392, %v1441
      %1443 = vmatmul.f32.gmra.mxu0 %v999
      %v1444 = vpop.f32.mrf.mxu0
      %v1445 = vadd.f32 %v1392, %v1444
      %1446 = vmatmul.f32.gmra.mxu0 %v1000
      %v1447 = vpop.f32.mrf.mxu0
      %v1448 = vadd.f32 %v1392, %v1447
      %1449 = vmatmul.f32.gmra.mxu0 %v1001
      %v1450 = vpop.f32.mrf.mxu0
      %v1451 = vadd.f32 %v1392, %v1450
      %1452 = vmatmul.f32.gmra.mxu0 %v1002
      %v1453 = vpop.f32.mrf.mxu0
      %v1454 = vadd.f32 %v1392, %v1453
      %1455 = vmatmul.f32.gmra.mxu0 %v1003
      %v1456 = vpop.f32.mrf.mxu0
      %v1457 = vadd.f32 %v1392, %v1456
      %1458 = vdwg.mxu0
      %1459 = vmatpush.msra.mxu0 %v1371
      %1460 = vmatpush.msra.mxu0 %v1370
      %1461 = vmatpush.msra.mxu0 %v1369
      %1462 = vmatpush.msra.mxu0 %v1368
      %1463 = vmatpush.msra.mxu0 %v1367
      %1464 = vmatpush.msra.mxu0 %v1366
      %1465 = vmatpush.msra.mxu0 %v1365
      %1466 = vmatpush.msra.mxu0 %v1364
      %1467 = vmatpush.msra.mxu0 %v1363
      %1468 = vmatpush.msra.mxu0 %v1362
      %1469 = vmatpush.msra.mxu0 %v1361
      %1470 = vmatpush.msra.mxu0 %v1360
      %1471 = vmatpush.msra.mxu0 %v1359
      %1472 = vmatpush.msra.mxu0 %v1358
      %1473 = vmatpush.msra.mxu0 %v1357
      %1474 = vmatpush.msra.mxu0 %v1356
      %1475 = vmatmul.f32.gmra.mxu0 %v1052
      %v1476 = vpop.f32.mrf.mxu0
      %v1477 = vadd.f32 %v1436, %v1476
      %1478 = vmatmul.f32.gmra.mxu0 %v1053
      %v1479 = vpop.f32.mrf.mxu0
      %v1480 = vadd.f32 %v1439, %v1479
      %1481 = vmatmul.f32.gmra.mxu0 %v1054
      %v1482 = vpop.f32.mrf.mxu0
      %v1483 = vadd.f32 %v1442, %v1482
      %1484 = vmatmul.f32.gmra.mxu0 %v1055
      %v1485 = vpop.f32.mrf.mxu0
      %v1486 = vadd.f32 %v1445, %v1485
      %1487 = vmatmul.f32.gmra.mxu0 %v1056
      %v1488 = vpop.f32.mrf.mxu0
      %v1489 = vadd.f32 %v1448, %v1488
      %1490 = vmatmul.f32.gmra.mxu0 %v1057
      %v1491 = vpop.f32.mrf.mxu0
      %v1492 = vadd.f32 %v1451, %v1491
      %1493 = vmatmul.f32.gmra.mxu0 %v1058
      %v1494 = vpop.f32.mrf.mxu0
      %v1495 = vadd.f32 %v1454, %v1494
      %1496 = vmatmul.f32.gmra.mxu0 %v1059
      %v1497 = vpop.f32.mrf.mxu0
      %v1498 = vadd.f32 %v1457, %v1497
      %1499 = vdwg.mxu0
      %1500 = vmatpush.msra.mxu0 %v1387
      %1501 = vmatpush.msra.mxu0 %v1386
      %1502 = vmatpush.msra.mxu0 %v1385
      %1503 = vmatpush.msra.mxu0 %v1384
      %1504 = vmatpush.msra.mxu0 %v1383
      %1505 = vmatpush.msra.mxu0 %v1382
      %1506 = vmatpush.msra.mxu0 %v1381
      %1507 = vmatpush.msra.mxu0 %v1380
      %1508 = vmatpush.msra.mxu0 %v1379
      %1509 = vmatpush.msra.mxu0 %v1378
      %1510 = vmatpush.msra.mxu0 %v1377
      %1511 = vmatpush.msra.mxu0 %v1376
      %1512 = vmatpush.msra.mxu0 %v1375
      %1513 = vmatpush.msra.mxu0 %v1374
      %1514 = vmatpush.msra.mxu0 %v1373
      %1515 = vmatpush.msra.mxu0 %v1372
      %1516 = vmatmul.f32.gmra.mxu0 %v1332
      %v1517 = vpop.f32.mrf.mxu0
      %v1518 = vadd.f32 %v1477, %v1517
      %1519 = vmatmul.f32.gmra.mxu0 %v1333
      %v1520 = vpop.f32.mrf.mxu0
      %v1521 = vadd.f32 %v1480, %v1520
      %1522 = vmatmul.f32.gmra.mxu0 %v1334
      %v1523 = vpop.f32.mrf.mxu0
      %v1524 = vadd.f32 %v1483, %v1523
      %1525 = vmatmul.f32.gmra.mxu0 %v1335
      %v1526 = vpop.f32.mrf.mxu0
      %v1527 = vadd.f32 %v1486, %v1526
      %1528 = vmatmul.f32.gmra.mxu0 %v1336
      %v1529 = vpop.f32.mrf.mxu0
      %v1530 = vadd.f32 %v1489, %v1529
      %1531 = vmatmul.f32.gmra.mxu0 %v1337
      %v1532 = vpop.f32.mrf.mxu0
      %v1533 = vadd.f32 %v1492, %v1532
      %1534 = vmatmul.f32.gmra.mxu0 %v1338
      %v1535 = vpop.f32.mrf.mxu0
      %v1536 = vadd.f32 %v1495, %v1535
      %1537 = vmatmul.f32.gmra.mxu0 %v1339
      %v1538 = vpop.f32.mrf.mxu0
      %v1539 = vadd.f32 %v1498, %v1538
      %1540 = vdwg.mxu0
      %1541 = vmatpush.msra.mxu0 0.0
      %1542 = vmatpush.msra.mxu0 0.0
      %1543 = vmatpush.msra.mxu0 0.0
      %1544 = vmatpush.msra.mxu0 0.0
      %1545 = vmatpush.msra.mxu0 0.0
      %1546 = vmatpush.msra.mxu0 0.0
      %1547 = vmatpush.msra.mxu0 0.0
      %1548 = vmatpush.msra.mxu0 0.0
      %1549 = vmatpush.msra.mxu0 0.0
      %1550 = vmatpush.msra.mxu0 0.0
      %1551 = vmatpush.msra.mxu0 0.0
      %1552 = vmatpush.msra.mxu0 0.0
      %1553 = vmatpush.msra.mxu0 0.0
      %1554 = vmatpush.msra.mxu0 0.0
      %1555 = vmatpush.msra.mxu0 %v1389
      %1556 = vmatpush.msra.mxu0 %v1388
      %1557 = vmatmul.f32.gmra.mxu0 %v1395
      %v1558 = vpop.f32.mrf.mxu0
      %v1559 = vadd.f32 %v1518, %v1558
      %1560 = vmatmul.f32.gmra.mxu0 %v1398
      %v1561 = vpop.f32.mrf.mxu0
      %v1562 = vadd.f32 %v1521, %v1561
      %1563 = vmatmul.f32.gmra.mxu0 %v1401
      %v1564 = vpop.f32.mrf.mxu0
      %v1565 = vadd.f32 %v1524, %v1564
      %1566 = vmatmul.f32.gmra.mxu0 %v1404
      %v1567 = vpop.f32.mrf.mxu0
      %v1568 = vadd.f32 %v1527, %v1567
      %1569 = vmatmul.f32.gmra.mxu0 %v1407
      %v1570 = vpop.f32.mrf.mxu0
      %v1571 = vadd.f32 %v1530, %v1570
      %1572 = vmatmul.f32.gmra.mxu0 %v1410
      %v1573 = vpop.f32.mrf.mxu0
      %v1574 = vadd.f32 %v1533, %v1573
      %1575 = vmatmul.f32.gmra.mxu0 %v1413
      %v1576 = vpop.f32.mrf.mxu0
      %v1577 = vadd.f32 %v1536, %v1576
      %1578 = vmatmul.f32.gmra.mxu0 %v1416
      %v1579 = vpop.f32.mrf.mxu0
      %v1580 = vadd.f32 %v1539, %v1579
      %1581 = vdwg.mxu0
      %v1582 = vmax.f32 %v1559, 0.0
      %v1583 = vmax.f32 %v1562, 0.0
      %v1584 = vmax.f32 %v1565, 0.0
      %v1585 = vmax.f32 %v1568, 0.0
      %v1586 = vmax.f32 %v1571, 0.0
      %v1587 = vmax.f32 %v1574, 0.0
      %v1588 = vmax.f32 %v1577, 0.0
      %v1589 = vmax.f32 %v1580, 0.0
      %1590 = vst.msk [vmem:[#allocation2] sm:$0xff] %vm950, %v1582
      %1591 = vst.msk [vmem:[#allocation2 + $0x8] sm:$0xff] %vm950, %v1583
      %1592 = vst.msk [vmem:[#allocation2 + $0x10] sm:$0xff] %vm950, %v1584
      %1593 = vst.msk [vmem:[#allocation2 + $0x18] sm:$0xff] %vm950, %v1585
      %1594 = vst.msk [vmem:[#allocation2 + $0x20] sm:$0xff] %vm950, %v1586
      %1595 = vst.msk [vmem:[#allocation2 + $0x28] sm:$0xff] %vm950, %v1587
      %1596 = vst.msk [vmem:[#allocation2 + $0x30] sm:$0xff] %vm950, %v1588
      %1597 = vst.msk [vmem:[#allocation2 + $0x38] sm:$0xff] %vm950, %v1589
      %v1598 = vsel %vm950, %v1582, 0.0
      %v1599 = vsel %vm950, %v1583, 0.0
      %v1600 = vadd.f32 %v1598, %v1599
      %v1601 = vsel %vm950, %v1584, 0.0
      %v1602 = vadd.f32 %v1600, %v1601
      %v1603 = vsel %vm950, %v1585, 0.0
      %v1604 = vadd.f32 %v1602, %v1603
      %v1605 = vsel %vm950, %v1586, 0.0
      %v1606 = vadd.f32 %v1604, %v1605
      %v1607 = vsel %vm950, %v1587, 0.0
      %v1608 = vadd.f32 %v1606, %v1607
      %v1609 = vsel %vm950, %v1588, 0.0
      %v1610 = vadd.f32 %v1608, %v1609
      %v1611 = vsel %vm950, %v1589, 0.0
      %v1612 = vadd.f32 %v1610, %v1611
      %v1613 = vrot.slane %v1612, 4
      %v1614 = vadd.f32 %v1612, %v1613
      %v1615 = vrot.slane %v1614, 2
      %v1616 = vadd.f32 %v1614, %v1615
      %v1617 = vrot.slane %v1616, 1
      %v1618 = vadd.f32 %v1616, %v1617
      %v1619 = vadd.f32 %v1618, 0.0
      %1621 = vrot.lane.b32.xlu0 %v1619, 112
      %v1622 = vpop.permute.xlu0 %1621
      %v1624 = vadd.f32 %v1619, %v1622
      %v1625 = vmul.f32 %v1624, 0.015625
      %v1626 = vld [vmem:[%s3] sm:$0xff]
      %v1627 = vld [vmem:[%s3 + $0x8] sm:$0xff]
      %v1628 = vld [vmem:[%s4] sm:$0x1]
      %v1630 = vsel %vm941, %v1625, 0
      %1632 = vmatpush.msra.mxu0 0.0
      %1633 = vmatpush.msra.mxu0 0.0
      %1634 = vmatpush.msra.mxu0 0.0
      %1635 = vmatpush.msra.mxu0 0.0
      %1636 = vmatpush.msra.mxu0 0.0
      %1637 = vmatpush.msra.mxu0 0.0
      %1638 = vmatpush.msra.mxu0 0.0
      %1639 = vmatpush.msra.mxu0 0.0
      %1640 = vmatpush.msra.mxu0 0.0
      %1641 = vmatpush.msra.mxu0 0.0
      %1642 = vmatpush.msra.mxu0 0.0
      %1643 = vmatpush.msra.mxu0 0.0
      %1644 = vmatpush.msra.mxu0 0.0
      %1645 = vmatpush.msra.mxu0 0.0
      %1646 = vmatpush.msra.mxu0 %v1627
      %1647 = vmatpush.msra.mxu0 %v1626
      %1648 = vmatmul.f32.gmra.mxu0 %v1630
      %v1649 = vpop.f32.mrf.mxu0
      %v1650 = vadd.f32 %v1628, %v1649
      %1651 = vdwg.mxu0
      %v1652 = vld [vmem:[%s5] sm:$0xff]
      %v1653 = vld [vmem:[%s6] sm:$0x1]
      %vm1654 = vcmask 64512
      %v1656 = vsel %vm1654, %v1650, 0
      %1658 = vmatpush.msra.mxu0 0.0
      %1659 = vmatpush.msra.mxu0 0.0
      %1660 = vmatpush.msra.mxu0 0.0
      %1661 = vmatpush.msra.mxu0 0.0
      %1662 = vmatpush.msra.mxu0 0.0
      %1663 = vmatpush.msra.mxu0 0.0
      %1664 = vmatpush.msra.mxu0 0.0
      %1665 = vmatpush.msra.mxu0 0.0
      %1666 = vmatpush.msra.mxu0 0.0
      %1667 = vmatpush.msra.mxu0 0.0
      %1668 = vmatpush.msra.mxu0 0.0
      %1669 = vmatpush.msra.mxu0 0.0
      %1670 = vmatpush.msra.mxu0 0.0
      %1671 = vmatpush.msra.mxu0 0.0
      %1672 = vmatpush.msra.mxu0 0.0
      %1673 = vmatpush.msra.mxu0 %v1652
      %1674 = vmatmul.f32.gmra.mxu0 %v1656
      %v1675 = vpop.f32.mrf.mxu0
      %v1676 = vadd.f32 %v1653, %v1675
      %1677 = vdwg.mxu0
      %1679 = vrot.lane.b32.xlu0 %v1676, 112
      %v1680 = vpop.permute.xlu0 %1679
      %v1682 = vmax.f32 %v1676, %v1680
      %v1683 = vsub.f32 %v1676, %v1682
      %v1684 = vmul.f32 %v1683, 1.442695
      %v1685 = vpow.pop %v1684
      %1687 = vrot.lane.b32.xlu0 %v1682, 16
      %v1688 = vpop.permute.xlu0 %1687
      %v1690 = vsub.f32 %v1676, %v1688
      %v1691 = vmul.f32 %v1690, 1.442695
      %v1692 = vpow.pop %v1691
      %1694 = vrot.lane.b32.xlu0 %v1692, 112
      %v1695 = vpop.permute.xlu0 %1694
      %v1697 = vadd.f32 %v1685, %v1695
      %v1698 = vrcp.pop %v1697
      %v1699 = vmul.f32 %v1697, %v1698
      %v1700 = vsub.f32 2.0, %v1699
      %v1701 = vmul.f32 %v1698, %v1700
      %v1702 = vld [vmem:[#allocation2] sm:$0xff]
      %v1703 = vld [vmem:[#allocation2 + $0x8] sm:$0xff]
      %v1704 = vld [vmem:[#allocation2 + $0x10] sm:$0xff]
      %v1705 = vld [vmem:[#allocation2 + $0x18] sm:$0xff]
      %v1706 = vld [vmem:[#allocation2 + $0x20] sm:$0xff]
      %v1707 = vld [vmem:[#allocation2 + $0x28] sm:$0xff]
      %v1708 = vld [vmem:[#allocation2 + $0x30] sm:$0xff]
      %v1709 = vld [vmem:[#allocation2 + $0x38] sm:$0xff]
      %v1710 = vmul.f32 %v1685, %v1701
      %v1711 = vperm.slane %v1710, 0
      %v1712 = vmul.f32 %v1702, %v1711
      %v1713 = vmul.f32 %v1703, %v1711
      %v1714 = vmul.f32 %v1704, %v1711
      %v1715 = vmul.f32 %v1705, %v1711
      %v1716 = vmul.f32 %v1706, %v1711
      %v1717 = vmul.f32 %v1707, %v1711
      %v1718 = vmul.f32 %v1708, %v1711
      %v1719 = vmul.f32 %v1709, %v1711
      %1721 = vrot.lane.b32.xlu0 %v1701, 16
      %v1722 = vpop.permute.xlu0 %1721
      %v1724 = vmul.f32 %v1692, %v1722
      %v1725 = vperm.slane %v1724, 0
      %v1726 = vmul.f32 %v1702, %v1725
      %v1727 = vmul.f32 %v1703, %v1725
      %v1728 = vmul.f32 %v1704, %v1725
      %v1729 = vmul.f32 %v1705, %v1725
      %v1730 = vmul.f32 %v1706, %v1725
      %v1731 = vmul.f32 %v1707, %v1725
      %v1732 = vmul.f32 %v1708, %v1725
      %v1733 = vmul.f32 %v1709, %v1725
      %1742 = vrot.lane.b32.xlu0 %v1726, 112
      %v1743 = vpop.permute.xlu0 %1742
      %1744 = vrot.lane.b32.xlu0 %v1727, 112
      %v1745 = vpop.permute.xlu0 %1744
      %1746 = vrot.lane.b32.xlu0 %v1728, 112
      %v1747 = vpop.permute.xlu0 %1746
      %1748 = vrot.lane.b32.xlu0 %v1729, 112
      %v1749 = vpop.permute.xlu0 %1748
      %1750 = vrot.lane.b32.xlu0 %v1730, 112
      %v1751 = vpop.permute.xlu0 %1750
      %1752 = vrot.lane.b32.xlu0 %v1731, 112
      %v1753 = vpop.permute.xlu0 %1752
      %1754 = vrot.lane.b32.xlu0 %v1732, 112
      %v1755 = vpop.permute.xlu0 %1754
      %1756 = vrot.lane.b32.xlu0 %v1733, 112
      %v1757 = vpop.permute.xlu0 %1756
      %v1766 = vadd.f32 %v1712, %v1743
      %v1767 = vadd.f32 %v1713, %v1745
      %v1768 = vadd.f32 %v1714, %v1747
      %v1769 = vadd.f32 %v1715, %v1749
      %v1770 = vadd.f32 %v1716, %v1751
      %v1771 = vadd.f32 %v1717, %v1753
      %v1772 = vadd.f32 %v1718, %v1755
      %v1773 = vadd.f32 %v1719, %v1757
      %1774 = vst.msk [vmem:[%s278] sm:$0xff] %vm941, %v1766
      %1775 = vst.msk [vmem:[%s278 + $0x8] sm:$0xff] %vm941, %v1767
      %1776 = vst.msk [vmem:[%s278 + $0x10] sm:$0xff] %vm941, %v1768
      %1777 = vst.msk [vmem:[%s278 + $0x18] sm:$0xff] %vm941, %v1769
      %1778 = vst.msk [vmem:[%s278 + $0x20] sm:$0xff] %vm941, %v1770
      %1779 = vst.msk [vmem:[%s278 + $0x28] sm:$0xff] %vm941, %v1771
      %1780 = vst.msk [vmem:[%s278 + $0x30] sm:$0xff] %vm941, %v1772
      %1781 = vst.msk [vmem:[%s278 + $0x38] sm:$0xff] %vm941, %v1773
      %p1782 = scmp.lt.s32.totalorder %s18, 1
      %s1783 = scalar_select %p1782, %s18, 1
      %s1784 = smul.addr %s1783, 8
      %s1785 = smul.addr %s1784, 8
      %s1786 = scalar_lea.vmem %s7, %s1785
      // Predicated region
      $region49: #{tpu_custom_call.1} parent=47 // pred_check
        %p1787 = pneg %p188
      $region50: #{tpu_custom_call.1} parent=47 // pred_check_branch
        %1789 = sbr.rel (%p1787) target = $region52
      $region51: #{tpu_custom_call.1} parent=47 // pred_region
        _
      $region52: #{tpu_custom_call.1} parent=47 // pred_fallthru
        _
    $region48: #{tpu_custom_call.1} parent=5 // pred_fallthru
      _
    %p1790 = scmp.le.s32.totalorder 2, %s13
    // Predicated region
    $region53: #{tpu_custom_call.1} parent=5 // pred_check
      %p1791 = pneg %p1790
    $region54: #{tpu_custom_call.1} parent=5 // pred_check_branch
      %1793 = sbr.rel (%p1791) target = $region56
    $region55: #{tpu_custom_call.1} parent=5 // pred_region
      %s1794 = ssub.s32 %s13, 2
      // Predicated region
      $region57: #{tpu_custom_call.1} parent=55 // pred_check
        %p1795 = pneg %p194
      $region58: #{tpu_custom_call.1} parent=55 // pred_check_branch
        %1797 = sbr.rel (%p1795) target = $region60
      $region59: #{tpu_custom_call.1} parent=55 // pred_region
        %p1798 = scmp.lt.s32.totalorder %s19, 1
        %s1799 = scalar_select %p1798, %s19, 1
        %s1800 = smul.addr %s1799, 8
        %s1801 = smul.addr %s1800, 8
        %s1802 = scalar_lea.vmem %s7, %s1801
      $region60: #{tpu_custom_call.1} parent=55 // pred_fallthru
        _
    $region56: #{tpu_custom_call.1} parent=5 // pred_fallthru
      _
  $region6: #{tpu_custom_call.1} parent=0 // loop_footer
    %s17 = sadd.s32 1, %s13
  $region7: #{tpu_custom_call.1} parent=0 // loop_footer_branch
    %12 = sbr.rel target = $region3
  $region8: #{tpu_custom_call.1} parent=0 // loop_exit
    _

// kernel: tpu_custom_call.1
$region0: #{tpu_custom_call.1}
  #allocation0 [shape = 'u32[]', space=smem, size = 0x4, offset = 0x4, fixed_abs, tag = 'smem constant byte address 0x4 - core index']
  #allocation1 [shape = 'u32[72,128]{1,0:T(1,128)}', space=vmem, size = 0x9000, scoped, tag = 'internal scratch']
  #allocation2 [shape = 'f32[1,64,32]{2,1,0:T(8,128)}', space=vmem, size = 0x8000, scoped, tag = 'scratch operand']
  %s0 = inlined_call_operand.vmem [shape: f32[2,12,12,16], index: 0, kind: input, shape index: {}]
  %s1 = inlined_call_operand.vmem [shape: f32[400,32], index: 1, kind: input, shape index: {}]
  %s2 = inlined_call_operand.vmem [shape: f32[1,32], index: 2, kind: input, shape index: {}]
  %s3 = inlined_call_operand.vmem [shape: f32[16,8], index: 3, kind: input, shape index: {}]
  %s4 = inlined_call_operand.vmem [shape: f32[1,8], index: 4, kind: input, shape index: {}]
  %s5 = inlined_call_operand.vmem [shape: f32[8,32], index: 5, kind: input, shape index: {}]
  %s6 = inlined_call_operand.vmem [shape: f32[1,32], index: 6, kind: input, shape index: {}]
  %s7 = inlined_call_operand.vmem [shape: f32[2,1,64,16], index: 7, kind: output, shape index: {}]
  %s8 = sld [smem:[#allocation0]]
  $region61: #{tpu_custom_call.1} parent=0
    _
  %s10 = ssub.s32 1, %s8
  %s11 = scalar_select 0, %s10, %s8
  loop: start=0, step=1, limit=4
  $region2: #{tpu_custom_call.1} parent=0 // loop_pre_header
    _
  $region3: #{tpu_custom_call.1} parent=0 // loop_header
    %s13 = sphi 0, %s17
    %p14 = scmp.ge.s32.totalorder %s13, 4
    %s23 = sphi 0, %s25
    %s26 = sphi 0, %s23
    %s27 = sphi 0, %s26
    %s43 = sphi 0, %s27
    %s47 = sphi 0, %s47
    %s49 = sphi 0, %s47
    %s50 = sphi 0, %s49
    %s64 = sphi 0, %s50
    %s68 = sphi 0, %s68
    %s70 = sphi 0, %s68
    %s71 = sphi 0, %s70
    %s85 = sphi 0, %s71
    %s89 = sphi 0, %s89
    %s91 = sphi 0, %s89
    %s92 = sphi 0, %s91
    %s106 = sphi 0, %s92
    %s110 = sphi 0, %s110
    %s112 = sphi 0, %s110
    %s113 = sphi 0, %s112
    %s127 = sphi 0, %s113
    %s131 = sphi 0, %s131
    %s133 = sphi 0, %s131
    %s134 = sphi 0, %s133
    %s148 = sphi 0, %s134
    %s152 = sphi 0, %s152
    %s154 = sphi 0, %s152
    %s155 = sphi 0, %s154
    %s169 = sphi 0, %s155
    %s175 = sphi 0, %s177
    %s178 = sphi 0, %s175
    %s179 = sphi 0, %s178
    %s195 = sphi 0, %s179
  $region4: #{tpu_custom_call.1} parent=0 // loop_header_branch
    %16 = sbr.rel (%p14) target = $region8
  $region5: #{tpu_custom_call.1} parent=0 // loop_body
    %s18 = ssub.s32 %s13, 1
    %s19 = ssub.s32 %s13, 2
    %s20 = sadd.s32 %s13, 1
    %s21 = ssub.s32 %s13, %s20
    %p22 = scmp.eq.s32.totalorder %s21, 0
    %s24 = sadd.s32 %s23, 1
    %s25 = scalar_select %p22, %s23, %s24
    %p28 = pneg %p22
    %p29 = scmp.eq.s32.totalorder %s13, 1
    %p30 = por %p28, %p29
    %p31 = scmp.ne.s32.totalorder %s23, %s26
    %p32 = scmp.eq.s32.totalorder %s13, 0
    %p33 = por %p31, %p32
    %p34 = scmp.ne.s32.totalorder %s23, %s26
    %p35 = scmp.eq.s32.totalorder %s18, 1
    %p36 = por %p34, %p35
    %p37 = scmp.ne.s32.totalorder %s26, %s27
    %p38 = scmp.eq.s32.totalorder %s18, 0
    %p39 = por %p37, %p38
    %p40 = scmp.ne.s32.totalorder %s26, %s27
    %p41 = scmp.eq.s32.totalorder %s19, 1
    %p42 = por %p40, %p41
    %p44 = scmp.ne.s32.totalorder %s27, %s43
    %p45 = scmp.eq.s32.totalorder %s19, 0
    %p46 = por %p44, %p45
    %s48 = sadd.s32 %s47, 1
    %p51 = scmp.eq.s32.totalorder %s13, 1
    %p52 = scmp.ne.s32.totalorder %s47, %s49
    %p53 = scmp.eq.s32.totalorder %s13, 0
    %p54 = por %p52, %p53
    %p55 = scmp.ne.s32.totalorder %s47, %s49
    %p56 = scmp.eq.s32.totalorder %s18, 1
    %p57 = por %p55, %p56
    %p58 = scmp.ne.s32.totalorder %s49, %s50
    %p59 = scmp.eq.s32.totalorder %s18, 0
    %p60 = por %p58, %p59
    %p61 = scmp.ne.s32.totalorder %s49, %s50
    %p62 = scmp.eq.s32.totalorder %s19, 1
    %p63 = por %p61, %p62
    %p65 = scmp.ne.s32.totalorder %s50, %s64
    %p66 = scmp.eq.s32.totalorder %s19, 0
    %p67 = por %p65, %p66
    %s69 = sadd.s32 %s68, 1
    %p72 = scmp.eq.s32.totalorder %s13, 1
    %p73 = scmp.ne.s32.totalorder %s68, %s70
    %p74 = scmp.eq.s32.totalorder %s13, 0
    %p75 = por %p73, %p74
    %p76 = scmp.ne.s32.totalorder %s68, %s70
    %p77 = scmp.eq.s32.totalorder %s18, 1
    %p78 = por %p76, %p77
    %p79 = scmp.ne.s32.totalorder %s70, %s71
    %p80 = scmp.eq.s32.totalorder %s18, 0
    %p81 = por %p79, %p80
    %p82 = scmp.ne.s32.totalorder %s70, %s71
    %p83 = scmp.eq.s32.totalorder %s19, 1
    %p84 = por %p82, %p83
    %p86 = scmp.ne.s32.totalorder %s71, %s85
    %p87 = scmp.eq.s32.totalorder %s19, 0
    %p88 = por %p86, %p87
    %s90 = sadd.s32 %s89, 1
    %p93 = scmp.eq.s32.totalorder %s13, 1
    %p94 = scmp.ne.s32.totalorder %s89, %s91
    %p95 = scmp.eq.s32.totalorder %s13, 0
    %p96 = por %p94, %p95
    %p97 = scmp.ne.s32.totalorder %s89, %s91
    %p98 = scmp.eq.s32.totalorder %s18, 1
    %p99 = por %p97, %p98
    %p100 = scmp.ne.s32.totalorder %s91, %s92
    %p101 = scmp.eq.s32.totalorder %s18, 0
    %p102 = por %p100, %p101
    %p103 = scmp.ne.s32.totalorder %s91, %s92
    %p104 = scmp.eq.s32.totalorder %s19, 1
    %p105 = por %p103, %p104
    %p107 = scmp.ne.s32.totalorder %s92, %s106
    %p108 = scmp.eq.s32.totalorder %s19, 0
    %p109 = por %p107, %p108
    %s111 = sadd.s32 %s110, 1
    %p114 = scmp.eq.s32.totalorder %s13, 1
    %p115 = scmp.ne.s32.totalorder %s110, %s112
    %p116 = scmp.eq.s32.totalorder %s13, 0
    %p117 = por %p115, %p116
    %p118 = scmp.ne.s32.totalorder %s110, %s112
    %p119 = scmp.eq.s32.totalorder %s18, 1
    %p120 = por %p118, %p119
    %p121 = scmp.ne.s32.totalorder %s112, %s113
    %p122 = scmp.eq.s32.totalorder %s18, 0
    %p123 = por %p121, %p122
    %p124 = scmp.ne.s32.totalorder %s112, %s113
    %p125 = scmp.eq.s32.totalorder %s19, 1
    %p126 = por %p124, %p125
    %p128 = scmp.ne.s32.totalorder %s113, %s127
    %p129 = scmp.eq.s32.totalorder %s19, 0
    %p130 = por %p128, %p129
    %s132 = sadd.s32 %s131, 1
    %p135 = scmp.eq.s32.totalorder %s13, 1
    %p136 = scmp.ne.s32.totalorder %s131, %s133
    %p137 = scmp.eq.s32.totalorder %s13, 0
    %p138 = por %p136, %p137
    %p139 = scmp.ne.s32.totalorder %s131, %s133
    %p140 = scmp.eq.s32.totalorder %s18, 1
    %p141 = por %p139, %p140
    %p142 = scmp.ne.s32.totalorder %s133, %s134
    %p143 = scmp.eq.s32.totalorder %s18, 0
    %p144 = por %p142, %p143
    %p145 = scmp.ne.s32.totalorder %s133, %s134
    %p146 = scmp.eq.s32.totalorder %s19, 1
    %p147 = por %p145, %p146
    %p149 = scmp.ne.s32.totalorder %s134, %s148
    %p150 = scmp.eq.s32.totalorder %s19, 0
    %p151 = por %p149, %p150
    %s153 = sadd.s32 %s152, 1
    %p156 = scmp.eq.s32.totalorder %s13, 1
    %p157 = scmp.ne.s32.totalorder %s152, %s154
    %p158 = scmp.eq.s32.totalorder %s13, 0
    %p159 = por %p157, %p158
    %p160 = scmp.ne.s32.totalorder %s152, %s154
    %p161 = scmp.eq.s32.totalorder %s18, 1
    %p162 = por %p160, %p161
    %p163 = scmp.ne.s32.totalorder %s154, %s155
    %p164 = scmp.eq.s32.totalorder %s18, 0
    %p165 = por %p163, %p164
    %p166 = scmp.ne.s32.totalorder %s154, %s155
    %p167 = scmp.eq.s32.totalorder %s19, 1
    %p168 = por %p166, %p167
    %p170 = scmp.ne.s32.totalorder %s155, %s169
    %p171 = scmp.eq.s32.totalorder %s19, 0
    %p172 = por %p170, %p171
    %s173 = ssub.s32 %s13, %s20
    %p174 = scmp.eq.s32.totalorder %s173, 0
    %s176 = sadd.s32 %s175, 1
    %s177 = scalar_select %p174, %s175, %s176
    %p180 = pneg %p174
    %p181 = scmp.eq.s32.totalorder %s13, 1
    %p182 = por %p180, %p181
    %p183 = scmp.ne.s32.totalorder %s175, %s178
    %p184 = scmp.eq.s32.totalorder %s13, 0
    %p185 = por %p183, %p184
    %p186 = scmp.ne.s32.totalorder %s175, %s178
    %p187 = scmp.eq.s32.totalorder %s18, 1
    %p188 = por %p186, %p187
    %p189 = scmp.ne.s32.totalorder %s178, %s179
    %p190 = scmp.eq.s32.totalorder %s18, 0
    %p191 = por %p189, %p190
    %p192 = scmp.ne.s32.totalorder %s178, %s179
    %p193 = scmp.eq.s32.totalorder %s19, 1
    %p194 = por %p192, %p193
    %p196 = scmp.ne.s32.totalorder %s179, %s195
    %p197 = scmp.eq.s32.totalorder %s19, 0
    %p198 = por %p196, %p197
    %p199 = scmp.le.s32.totalorder 1, %s13
    %p200 = scmp.lt.s32.totalorder %s13, 3
    %p201 = pnand %p199, %p200
    %p202 = pneg %p201
    // Predicated region
    $region9: #{tpu_custom_call.1} parent=5 // pred_check
      _
    $region10: #{tpu_custom_call.1} parent=5 // pred_check_branch
      %204 = sbr.rel (%p201) target = $region12
    $region11: #{tpu_custom_call.1} parent=5 // pred_region
      %s205 = ssub.s32 %s13, 1
      // Predicated region
      $region13: #{tpu_custom_call.1} parent=11 // pred_check
        %p206 = pneg %p60
      $region14: #{tpu_custom_call.1} parent=11 // pred_check_branch
        %208 = sbr.rel (%p206) target = $region16
      $region15: #{tpu_custom_call.1} parent=11 // pred_region
        _
      $region16: #{tpu_custom_call.1} parent=11 // pred_fallthru
        _
      // Predicated region
      $region17: #{tpu_custom_call.1} parent=11 // pred_check
        %p209 = pneg %p81
      $region18: #{tpu_custom_call.1} parent=11 // pred_check_branch
        %211 = sbr.rel (%p209) target = $region20
      $region19: #{tpu_custom_call.1} parent=11 // pred_region
        _
      $region20: #{tpu_custom_call.1} parent=11 // pred_fallthru
        _
      // Predicated region
      $region21: #{tpu_custom_call.1} parent=11 // pred_check
        %p212 = pneg %p102
      $region22: #{tpu_custom_call.1} parent=11 // pred_check_branch
        %214 = sbr.rel (%p212) target = $region24
      $region23: #{tpu_custom_call.1} parent=11 // pred_region
        _
      $region24: #{tpu_custom_call.1} parent=11 // pred_fallthru
        _
      // Predicated region
      $region25: #{tpu_custom_call.1} parent=11 // pred_check
        %p215 = pneg %p123
      $region26: #{tpu_custom_call.1} parent=11 // pred_check_branch
        %217 = sbr.rel (%p215) target = $region28
      $region27: #{tpu_custom_call.1} parent=11 // pred_region
        _
      $region28: #{tpu_custom_call.1} parent=11 // pred_fallthru
        _
      // Predicated region
      $region29: #{tpu_custom_call.1} parent=11 // pred_check
        %p218 = pneg %p144
      $region30: #{tpu_custom_call.1} parent=11 // pred_check_branch
        %220 = sbr.rel (%p218) target = $region32
      $region31: #{tpu_custom_call.1} parent=11 // pred_region
        _
      $region32: #{tpu_custom_call.1} parent=11 // pred_fallthru
        _
      // Predicated region
      $region33: #{tpu_custom_call.1} parent=11 // pred_check
        %p221 = pneg %p165
      $region34: #{tpu_custom_call.1} parent=11 // pred_check_branch
        %223 = sbr.rel (%p221) target = $region36
      $region35: #{tpu_custom_call.1} parent=11 // pred_region
        _
      $region36: #{tpu_custom_call.1} parent=11 // pred_fallthru
        _
    $region12: #{tpu_custom_call.1} parent=5 // pred_fallthru
      _
    %p224 = scmp.lt.s32.totalorder %s13, 2
    // Predicated region
    $region37: #{tpu_custom_call.1} parent=5 // pred_check
      %p225 = pneg %p224
    $region38: #{tpu_custom_call.1} parent=5 // pred_check_branch
      %227 = sbr.rel (%p225) target = $region40
    $region39: #{tpu_custom_call.1} parent=5 // pred_region
      // Predicated region
      $region41: #{tpu_custom_call.1} parent=39 // pred_check
        %p228 = pneg %p33
      $region42: #{tpu_custom_call.1} parent=39 // pred_check_branch
        %230 = sbr.rel (%p228) target = $region44
      $region43: #{tpu_custom_call.1} parent=39 // pred_region
        %p231 = scmp.lt.s32.totalorder %s13, 1
        %s232 = scalar_select %p231, %s13, 1
        %s233 = smul.addr %s232, 24
        %s234 = smul.addr %s233, 8
        %s235 = scalar_lea.vmem %s0, %s234
      $region44: #{tpu_custom_call.1} parent=39 // pred_fallthru
        _
    $region40: #{tpu_custom_call.1} parent=5 // pred_fallthru
      _
    %p236 = scmp.le.s32.totalorder 1, %s13
    %p237 = scmp.lt.s32.totalorder %s13, 3
    %p238 = pnand %p236, %p237
    %p239 = pneg %p238
    // Predicated region
    $region45: #{tpu_custom_call.1} parent=5 // pred_check
      _
    $region46: #{tpu_custom_call.1} parent=5 // pred_check_branch
      %241 = sbr.rel (%p238) target = $region48
    $region47: #{tpu_custom_call.1} parent=5 // pred_region
      %s242 = ssub.s32 %s13, 1
      %p243 = scmp.lt.s32.totalorder %s18, 1
      %s244 = scalar_select %p243, %s18, 1
      %s245 = smul.addr %s244, 24
      %s246 = smul.addr %s245, 8
      %s247 = scalar_lea.vmem %s0, %s246
      %p248 = pneg %p39
      %p249 = pneg %p36
      %p250 = pneg %p60
      %p251 = pneg %p57
      %p252 = pneg %p81
      %p253 = pneg %p78
      %p254 = pneg %p102
      %p255 = pneg %p99
      %p256 = pneg %p123
      %p257 = pneg %p120
      %p258 = pneg %p144
      %p259 = pneg %p141
      %p260 = pneg %p165
      %p261 = pneg %p162
      %p262 = pneg %p191
      %p263 = pneg %p188
      %p264 = scmp.lt.s32.totalorder %s18, 1
      %s265 = scalar_select %p264, %s18, 1
      %s266 = smul.addr %s265, 8
      %s267 = smul.addr %s266, 8
      %s268 = scalar_lea.vmem %s7, %s267
      %p269 = scmp.lt.s32.totalorder %s18, 1
      %s270 = scalar_select %p269, %s18, 1
      %s271 = smul.addr %s270, 24
      %s272 = smul.addr %s271, 8
      %s273 = scalar_lea.vmem %s0, %s272
      %p274 = scmp.lt.s32.totalorder %s18, 1
      %s275 = scalar_select %p274, %s18, 1
      %s276 = smul.addr %s275, 8
      %s277 = smul.addr %s276, 8
      %s278 = scalar_lea.vmem %s7, %s277
      %s279 = smul.u32 0, 16
      %s280 = scalar_lea.vmem %s273, %s279
      %v281 = vld [vmem:[%s280] sm:$0xff]
      %v282 = vld [vmem:[%s280 + $0x10] sm:$0xff]
      %v283 = vld [vmem:[%s280 + $0x20] sm:$0xff]
      %v284 = vld [vmem:[%s280 + $0x30] sm:$0xff]
      %v285 = vld [vmem:[%s280 + $0x40] sm:$0xff]
      %v286 = vld [vmem:[%s280 + $0x50] sm:$0xff]
      %v287 = vld [vmem:[%s280 + $0x60] sm:$0xff]
      %v288 = vld [vmem:[%s280 + $0x70] sm:$0xff]
      %v289 = vld [vmem:[%s280 + $0x1] sm:$0xff]
      %v290 = vld [vmem:[%s280 + $0x11] sm:$0xff]
      %v291 = vld [vmem:[%s280 + $0x21] sm:$0xff]
      %v292 = vld [vmem:[%s280 + $0x31] sm:$0xff]
      %v293 = vld [vmem:[%s280 + $0x41] sm:$0xff]
      %v294 = vld [vmem:[%s280 + $0x51] sm:$0xff]
      %v295 = vld [vmem:[%s280 + $0x61] sm:$0xff]
      %v296 = vld [vmem:[%s280 + $0x71] sm:$0xff]
      %v297 = vld [vmem:[%s280 + $0x2] sm:$0xff]
      %v298 = vld [vmem:[%s280 + $0x12] sm:$0xff]
      %v299 = vld [vmem:[%s280 + $0x22] sm:$0xff]
      %v300 = vld [vmem:[%s280 + $0x32] sm:$0xff]
      %v301 = vld [vmem:[%s280 + $0x42] sm:$0xff]
      %v302 = vld [vmem:[%s280 + $0x52] sm:$0xff]
      %v303 = vld [vmem:[%s280 + $0x62] sm:$0xff]
      %v304 = vld [vmem:[%s280 + $0x72] sm:$0xff]
      %v305 = vld [vmem:[%s280 + $0x3] sm:$0xff]
      %v306 = vld [vmem:[%s280 + $0x13] sm:$0xff]
      %v307 = vld [vmem:[%s280 + $0x23] sm:$0xff]
      %v308 = vld [vmem:[%s280 + $0x33] sm:$0xff]
      %v309 = vld [vmem:[%s280 + $0x43] sm:$0xff]
      %v310 = vld [vmem:[%s280 + $0x53] sm:$0xff]
      %v311 = vld [vmem:[%s280 + $0x63] sm:$0xff]
      %v312 = vld [vmem:[%s280 + $0x73] sm:$0xff]
      %v313 = vld [vmem:[%s280 + $0x4] sm:$0xff]
      %v314 = vld [vmem:[%s280 + $0x14] sm:$0xff]
      %v315 = vld [vmem:[%s280 + $0x24] sm:$0xff]
      %v316 = vld [vmem:[%s280 + $0x34] sm:$0xff]
      %v317 = vld [vmem:[%s280 + $0x44] sm:$0xff]
      %v318 = vld [vmem:[%s280 + $0x54] sm:$0xff]
      %v319 = vld [vmem:[%s280 + $0x64] sm:$0xff]
      %v320 = vld [vmem:[%s280 + $0x74] sm:$0xff]
      %s321 = sadd.s32 0, 1
      %s322 = smul.u32 %s321, 16
      %s323 = scalar_lea.vmem %s273, %s322
      %v324 = vld [vmem:[%s323] sm:$0xff]
      %v325 = vld [vmem:[%s323 + $0x10] sm:$0xff]
      %v326 = vld [vmem:[%s323 + $0x20] sm:$0xff]
      %v327 = vld [vmem:[%s323 + $0x30] sm:$0xff]
      %v328 = vld [vmem:[%s323 + $0x40] sm:$0xff]
      %v329 = vld [vmem:[%s323 + $0x50] sm:$0xff]
      %v330 = vld [vmem:[%s323 + $0x60] sm:$0xff]
      %v331 = vld [vmem:[%s323 + $0x70] sm:$0xff]
      %v332 = vld [vmem:[%s323 + $0x1] sm:$0xff]
      %v333 = vld [vmem:[%s323 + $0x11] sm:$0xff]
      %v334 = vld [vmem:[%s323 + $0x21] sm:$0xff]
      %v335 = vld [vmem:[%s323 + $0x31] sm:$0xff]
      %v336 = vld [vmem:[%s323 + $0x41] sm:$0xff]
      %v337 = vld [vmem:[%s323 + $0x51] sm:$0xff]
      %v338 = vld [vmem:[%s323 + $0x61] sm:$0xff]
      %v339 = vld [vmem:[%s323 + $0x71] sm:$0xff]
      %v340 = vld [vmem:[%s323 + $0x2] sm:$0xff]
      %v341 = vld [vmem:[%s323 + $0x12] sm:$0xff]
      %v342 = vld [vmem:[%s323 + $0x22] sm:$0xff]
      %v343 = vld [vmem:[%s323 + $0x32] sm:$0xff]
      %v344 = vld [vmem:[%s323 + $0x42] sm:$0xff]
      %v345 = vld [vmem:[%s323 + $0x52] sm:$0xff]
      %v346 = vld [vmem:[%s323 + $0x62] sm:$0xff]
      %v347 = vld [vmem:[%s323 + $0x72] sm:$0xff]
      %v348 = vld [vmem:[%s323 + $0x3] sm:$0xff]
      %v349 = vld [vmem:[%s323 + $0x13] sm:$0xff]
      %v350 = vld [vmem:[%s323 + $0x23] sm:$0xff]
      %v351 = vld [vmem:[%s323 + $0x33] sm:$0xff]
      %v352 = vld [vmem:[%s323 + $0x43] sm:$0xff]
      %v353 = vld [vmem:[%s323 + $0x53] sm:$0xff]
      %v354 = vld [vmem:[%s323 + $0x63] sm:$0xff]
      %v355 = vld [vmem:[%s323 + $0x73] sm:$0xff]
      %v356 = vld [vmem:[%s323 + $0x4] sm:$0xff]
      %v357 = vld [vmem:[%s323 + $0x14] sm:$0xff]
      %v358 = vld [vmem:[%s323 + $0x24] sm:$0xff]
      %v359 = vld [vmem:[%s323 + $0x34] sm:$0xff]
      %v360 = vld [vmem:[%s323 + $0x44] sm:$0xff]
      %v361 = vld [vmem:[%s323 + $0x54] sm:$0xff]
      %v362 = vld [vmem:[%s323 + $0x64] sm:$0xff]
      %v363 = vld [vmem:[%s323 + $0x74] sm:$0xff]
      %s364 = sadd.s32 0, 2
      %s365 = smul.u32 %s364, 16
      %s366 = scalar_lea.vmem %s273, %s365
      %v367 = vld [vmem:[%s366] sm:$0xff]
      %v368 = vld [vmem:[%s366 + $0x10] sm:$0xff]
      %v369 = vld [vmem:[%s366 + $0x20] sm:$0xff]
      %v370 = vld [vmem:[%s366 + $0x30] sm:$0xff]
      %v371 = vld [vmem:[%s366 + $0x40] sm:$0xff]
      %v372 = vld [vmem:[%s366 + $0x50] sm:$0xff]
      %v373 = vld [vmem:[%s366 + $0x60] sm:$0xff]
      %v374 = vld [vmem:[%s366 + $0x70] sm:$0xff]
      %v375 = vld [vmem:[%s366 + $0x1] sm:$0xff]
      %v376 = vld [vmem:[%s366 + $0x11] sm:$0xff]
      %v377 = vld [vmem:[%s366 + $0x21] sm:$0xff]
      %v378 = vld [vmem:[%s366 + $0x31] sm:$0xff]
      %v379 = vld [vmem:[%s366 + $0x41] sm:$0xff]
      %v380 = vld [vmem:[%s366 + $0x51] sm:$0xff]
      %v381 = vld [vmem:[%s366 + $0x61] sm:$0xff]
      %v382 = vld [vmem:[%s366 + $0x71] sm:$0xff]
      %v383 = vld [vmem:[%s366 + $0x2] sm:$0xff]
      %v384 = vld [vmem:[%s366 + $0x12] sm:$0xff]
      %v385 = vld [vmem:[%s366 + $0x22] sm:$0xff]
      %v386 = vld [vmem:[%s366 + $0x32] sm:$0xff]
      %v387 = vld [vmem:[%s366 + $0x42] sm:$0xff]
      %v388 = vld [vmem:[%s366 + $0x52] sm:$0xff]
      %v389 = vld [vmem:[%s366 + $0x62] sm:$0xff]
      %v390 = vld [vmem:[%s366 + $0x72] sm:$0xff]
      %v391 = vld [vmem:[%s366 + $0x3] sm:$0xff]
      %v392 = vld [vmem:[%s366 + $0x13] sm:$0xff]
      %v393 = vld [vmem:[%s366 + $0x23] sm:$0xff]
      %v394 = vld [vmem:[%s366 + $0x33] sm:$0xff]
      %v395 = vld [vmem:[%s366 + $0x43] sm:$0xff]
      %v396 = vld [vmem:[%s366 + $0x53] sm:$0xff]
      %v397 = vld [vmem:[%s366 + $0x63] sm:$0xff]
      %v398 = vld [vmem:[%s366 + $0x73] sm:$0xff]
      %v399 = vld [vmem:[%s366 + $0x4] sm:$0xff]
      %v400 = vld [vmem:[%s366 + $0x14] sm:$0xff]
      %v401 = vld [vmem:[%s366 + $0x24] sm:$0xff]
      %v402 = vld [vmem:[%s366 + $0x34] sm:$0xff]
      %v403 = vld [vmem:[%s366 + $0x44] sm:$0xff]
      %v404 = vld [vmem:[%s366 + $0x54] sm:$0xff]
      %v405 = vld [vmem:[%s366 + $0x64] sm:$0xff]
      %v406 = vld [vmem:[%s366 + $0x74] sm:$0xff]
      %s407 = sadd.s32 0, 3
      %s408 = smul.u32 %s407, 16
      %s409 = scalar_lea.vmem %s273, %s408
      %v410 = vld [vmem:[%s409] sm:$0xff]
      %v411 = vld [vmem:[%s409 + $0x10] sm:$0xff]
      %v412 = vld [vmem:[%s409 + $0x20] sm:$0xff]
      %v413 = vld [vmem:[%s409 + $0x30] sm:$0xff]
      %v414 = vld [vmem:[%s409 + $0x40] sm:$0xff]
      %v415 = vld [vmem:[%s409 + $0x50] sm:$0xff]
      %v416 = vld [vmem:[%s409 + $0x60] sm:$0xff]
      %v417 = vld [vmem:[%s409 + $0x70] sm:$0xff]
      %v418 = vld [vmem:[%s409 + $0x1] sm:$0xff]
      %v419 = vld [vmem:[%s409 + $0x11] sm:$0xff]
      %v420 = vld [vmem:[%s409 + $0x21] sm:$0xff]
      %v421 = vld [vmem:[%s409 + $0x31] sm:$0xff]
      %v422 = vld [vmem:[%s409 + $0x41] sm:$0xff]
      %v423 = vld [vmem:[%s409 + $0x51] sm:$0xff]
      %v424 = vld [vmem:[%s409 + $0x61] sm:$0xff]
      %v425 = vld [vmem:[%s409 + $0x71] sm:$0xff]
      %v426 = vld [vmem:[%s409 + $0x2] sm:$0xff]
      %v427 = vld [vmem:[%s409 + $0x12] sm:$0xff]
      %v428 = vld [vmem:[%s409 + $0x22] sm:$0xff]
      %v429 = vld [vmem:[%s409 + $0x32] sm:$0xff]
      %v430 = vld [vmem:[%s409 + $0x42] sm:$0xff]
      %v431 = vld [vmem:[%s409 + $0x52] sm:$0xff]
      %v432 = vld [vmem:[%s409 + $0x62] sm:$0xff]
      %v433 = vld [vmem:[%s409 + $0x72] sm:$0xff]
      %v434 = vld [vmem:[%s409 + $0x3] sm:$0xff]
      %v435 = vld [vmem:[%s409 + $0x13] sm:$0xff]
      %v436 = vld [vmem:[%s409 + $0x23] sm:$0xff]
      %v437 = vld [vmem:[%s409 + $0x33] sm:$0xff]
      %v438 = vld [vmem:[%s409 + $0x43] sm:$0xff]
      %v439 = vld [vmem:[%s409 + $0x53] sm:$0xff]
      %v440 = vld [vmem:[%s409 + $0x63] sm:$0xff]
      %v441 = vld [vmem:[%s409 + $0x73] sm:$0xff]
      %v442 = vld [vmem:[%s409 + $0x4] sm:$0xff]
      %v443 = vld [vmem:[%s409 + $0x14] sm:$0xff]
      %v444 = vld [vmem:[%s409 + $0x24] sm:$0xff]
      %v445 = vld [vmem:[%s409 + $0x34] sm:$0xff]
      %v446 = vld [vmem:[%s409 + $0x44] sm:$0xff]
      %v447 = vld [vmem:[%s409 + $0x54] sm:$0xff]
      %v448 = vld [vmem:[%s409 + $0x64] sm:$0xff]
      %v449 = vld [vmem:[%s409 + $0x74] sm:$0xff]
      %s450 = sadd.s32 0, 4
      %s451 = smul.u32 %s450, 16
      %s452 = scalar_lea.vmem %s273, %s451
      %v453 = vld [vmem:[%s452] sm:$0xff]
      %v454 = vld [vmem:[%s452 + $0x10] sm:$0xff]
      %v455 = vld [vmem:[%s452 + $0x20] sm:$0xff]
      %v456 = vld [vmem:[%s452 + $0x30] sm:$0xff]
      %v457 = vld [vmem:[%s452 + $0x40] sm:$0xff]
      %v458 = vld [vmem:[%s452 + $0x50] sm:$0xff]
      %v459 = vld [vmem:[%s452 + $0x60] sm:$0xff]
      %v460 = vld [vmem:[%s452 + $0x70] sm:$0xff]
      %v461 = vld [vmem:[%s452 + $0x1] sm:$0xff]
      %v462 = vld [vmem:[%s452 + $0x11] sm:$0xff]
      %v463 = vld [vmem:[%s452 + $0x21] sm:$0xff]
      %v464 = vld [vmem:[%s452 + $0x31] sm:$0xff]
      %v465 = vld [vmem:[%s452 + $0x41] sm:$0xff]
      %v466 = vld [vmem:[%s452 + $0x51] sm:$0xff]
      %v467 = vld [vmem:[%s452 + $0x61] sm:$0xff]
      %v468 = vld [vmem:[%s452 + $0x71] sm:$0xff]
      %v469 = vld [vmem:[%s452 + $0x2] sm:$0xff]
      %v470 = vld [vmem:[%s452 + $0x12] sm:$0xff]
      %v471 = vld [vmem:[%s452 + $0x22] sm:$0xff]
      %v472 = vld [vmem:[%s452 + $0x32] sm:$0xff]
      %v473 = vld [vmem:[%s452 + $0x42] sm:$0xff]
      %v474 = vld [vmem:[%s452 + $0x52] sm:$0xff]
      %v475 = vld [vmem:[%s452 + $0x62] sm:$0xff]
      %v476 = vld [vmem:[%s452 + $0x72] sm:$0xff]
      %v477 = vld [vmem:[%s452 + $0x3] sm:$0xff]
      %v478 = vld [vmem:[%s452 + $0x13] sm:$0xff]
      %v479 = vld [vmem:[%s452 + $0x23] sm:$0xff]
      %v480 = vld [vmem:[%s452 + $0x33] sm:$0xff]
      %v481 = vld [vmem:[%s452 + $0x43] sm:$0xff]
      %v482 = vld [vmem:[%s452 + $0x53] sm:$0xff]
      %v483 = vld [vmem:[%s452 + $0x63] sm:$0xff]
      %v484 = vld [vmem:[%s452 + $0x73] sm:$0xff]
      %v485 = vld [vmem:[%s452 + $0x4] sm:$0xff]
      %v486 = vld [vmem:[%s452 + $0x14] sm:$0xff]
      %v487 = vld [vmem:[%s452 + $0x24] sm:$0xff]
      %v488 = vld [vmem:[%s452 + $0x34] sm:$0xff]
      %v489 = vld [vmem:[%s452 + $0x44] sm:$0xff]
      %v490 = vld [vmem:[%s452 + $0x54] sm:$0xff]
      %v491 = vld [vmem:[%s452 + $0x64] sm:$0xff]
      %v492 = vld [vmem:[%s452 + $0x74] sm:$0xff]
      %501 = vrot.lane.b32.xlu0 %v289, 16
      %v502 = vpop.permute.xlu0 %501
      %503 = vrot.lane.b32.xlu0 %v290, 16
      %v504 = vpop.permute.xlu0 %503
      %505 = vrot.lane.b32.xlu0 %v291, 16
      %v506 = vpop.permute.xlu0 %505
      %507 = vrot.lane.b32.xlu0 %v292, 16
      %v508 = vpop.permute.xlu0 %507
      %509 = vrot.lane.b32.xlu0 %v293, 16
      %v510 = vpop.permute.xlu0 %509
      %511 = vrot.lane.b32.xlu0 %v294, 16
      %v512 = vpop.permute.xlu0 %511
      %513 = vrot.lane.b32.xlu0 %v295, 16
      %v514 = vpop.permute.xlu0 %513
      %515 = vrot.lane.b32.xlu0 %v296, 16
      %v516 = vpop.permute.xlu0 %515
      %533 = vrot.lane.b32.xlu0 %v297, 32
      %v534 = vpop.permute.xlu0 %533
      %535 = vrot.lane.b32.xlu0 %v298, 32
      %v536 = vpop.permute.xlu0 %535
      %537 = vrot.lane.b32.xlu0 %v299, 32
      %v538 = vpop.permute.xlu0 %537
      %539 = vrot.lane.b32.xlu0 %v300, 32
      %v540 = vpop.permute.xlu0 %539
      %541 = vrot.lane.b32.xlu0 %v301, 32
      %v542 = vpop.permute.xlu0 %541
      %543 = vrot.lane.b32.xlu0 %v302, 32
      %v544 = vpop.permute.xlu0 %543
      %545 = vrot.lane.b32.xlu0 %v303, 32
      %v546 = vpop.permute.xlu0 %545
      %547 = vrot.lane.b32.xlu0 %v304, 32
      %v548 = vpop.permute.xlu0 %547
      %565 = vrot.lane.b32.xlu0 %v305, 48
      %v566 = vpop.permute.xlu0 %565
      %567 = vrot.lane.b32.xlu0 %v306, 48
      %v568 = vpop.permute.xlu0 %567
      %569 = vrot.lane.b32.xlu0 %v307, 48
      %v570 = vpop.permute.xlu0 %569
      %571 = vrot.lane.b32.xlu0 %v308, 48
      %v572 = vpop.permute.xlu0 %571
      %573 = vrot.lane.b32.xlu0 %v309, 48
      %v574 = vpop.permute.xlu0 %573
      %575 = vrot.lane.b32.xlu0 %v310, 48
      %v576 = vpop.permute.xlu0 %575
      %577 = vrot.lane.b32.xlu0 %v311, 48
      %v578 = vpop.permute.xlu0 %577
      %579 = vrot.lane.b32.xlu0 %v312, 48
      %v580 = vpop.permute.xlu0 %579
      %597 = vrot.lane.b32.xlu0 %v313, 64
      %v598 = vpop.permute.xlu0 %597
      %599 = vrot.lane.b32.xlu0 %v314, 64
      %v600 = vpop.permute.xlu0 %599
      %601 = vrot.lane.b32.xlu0 %v315, 64
      %v602 = vpop.permute.xlu0 %601
      %603 = vrot.lane.b32.xlu0 %v316, 64
      %v604 = vpop.permute.xlu0 %603
      %605 = vrot.lane.b32.xlu0 %v317, 64
      %v606 = vpop.permute.xlu0 %605
      %607 = vrot.lane.b32.xlu0 %v318, 64
      %v608 = vpop.permute.xlu0 %607
      %609 = vrot.lane.b32.xlu0 %v319, 64
      %v610 = vpop.permute.xlu0 %609
      %611 = vrot.lane.b32.xlu0 %v320, 64
      %v612 = vpop.permute.xlu0 %611
      %629 = vrot.lane.b32.xlu0 %v324, 80
      %v630 = vpop.permute.xlu0 %629
      %631 = vrot.lane.b32.xlu0 %v325, 80
      %v632 = vpop.permute.xlu0 %631
      %633 = vrot.lane.b32.xlu0 %v326, 80
      %v634 = vpop.permute.xlu0 %633
      %635 = vrot.lane.b32.xlu0 %v327, 80
      %v636 = vpop.permute.xlu0 %635
      %637 = vrot.lane.b32.xlu0 %v328, 80
      %v638 = vpop.permute.xlu0 %637
      %639 = vrot.lane.b32.xlu0 %v329, 80
      %v640 = vpop.permute.xlu0 %639
      %641 = vrot.lane.b32.xlu0 %v330, 80
      %v642 = vpop.permute.xlu0 %641
      %643 = vrot.lane.b32.xlu0 %v331, 80
      %v644 = vpop.permute.xlu0 %643
      %661 = vrot.lane.b32.xlu0 %v332, 96
      %v662 = vpop.permute.xlu0 %661
      %663 = vrot.lane.b32.xlu0 %v333, 96
      %v664 = vpop.permute.xlu0 %663
      %665 = vrot.lane.b32.xlu0 %v334, 96
      %v666 = vpop.permute.xlu0 %665
      %667 = vrot.lane.b32.xlu0 %v335, 96
      %v668 = vpop.permute.xlu0 %667
      %669 = vrot.lane.b32.xlu0 %v336, 96
      %v670 = vpop.permute.xlu0 %669
      %671 = vrot.lane.b32.xlu0 %v337, 96
      %v672 = vpop.permute.xlu0 %671
      %673 = vrot.lane.b32.xlu0 %v338, 96
      %v674 = vpop.permute.xlu0 %673
      %675 = vrot.lane.b32.xlu0 %v339, 96
      %v676 = vpop.permute.xlu0 %675
      %693 = vrot.lane.b32.xlu0 %v340, 112
      %v694 = vpop.permute.xlu0 %693
      %695 = vrot.lane.b32.xlu0 %v341, 112
      %v696 = vpop.permute.xlu0 %695
      %697 = vrot.lane.b32.xlu0 %v342, 112
      %v698 = vpop.permute.xlu0 %697
      %699 = vrot.lane.b32.xlu0 %v343, 112
      %v700 = vpop.permute.xlu0 %699
      %701 = vrot.lane.b32.xlu0 %v344, 112
      %v702 = vpop.permute.xlu0 %701
      %703 = vrot.lane.b32.xlu0 %v345, 112
      %v704 = vpop.permute.xlu0 %703
      %705 = vrot.lane.b32.xlu0 %v346, 112
      %v706 = vpop.permute.xlu0 %705
      %707 = vrot.lane.b32.xlu0 %v347, 112
      %v708 = vpop.permute.xlu0 %707
      %725 = vrot.lane.b32.xlu0 %v356, 16
      %v726 = vpop.permute.xlu0 %725
      %727 = vrot.lane.b32.xlu0 %v357, 16
      %v728 = vpop.permute.xlu0 %727
      %729 = vrot.lane.b32.xlu0 %v358, 16
      %v730 = vpop.permute.xlu0 %729
      %731 = vrot.lane.b32.xlu0 %v359, 16
      %v732 = vpop.permute.xlu0 %731
      %733 = vrot.lane.b32.xlu0 %v360, 16
      %v734 = vpop.permute.xlu0 %733
      %735 = vrot.lane.b32.xlu0 %v361, 16
      %v736 = vpop.permute.xlu0 %735
      %737 = vrot.lane.b32.xlu0 %v362, 16
      %v738 = vpop.permute.xlu0 %737
      %739 = vrot.lane.b32.xlu0 %v363, 16
      %v740 = vpop.permute.xlu0 %739
      %757 = vrot.lane.b32.xlu0 %v367, 32
      %v758 = vpop.permute.xlu0 %757
      %759 = vrot.lane.b32.xlu0 %v368, 32
      %v760 = vpop.permute.xlu0 %759
      %761 = vrot.lane.b32.xlu0 %v369, 32
      %v762 = vpop.permute.xlu0 %761
      %763 = vrot.lane.b32.xlu0 %v370, 32
      %v764 = vpop.permute.xlu0 %763
      %765 = vrot.lane.b32.xlu0 %v371, 32
      %v766 = vpop.permute.xlu0 %765
      %767 = vrot.lane.b32.xlu0 %v372, 32
      %v768 = vpop.permute.xlu0 %767
      %769 = vrot.lane.b32.xlu0 %v373, 32
      %v770 = vpop.permute.xlu0 %769
      %771 = vrot.lane.b32.xlu0 %v374, 32
      %v772 = vpop.permute.xlu0 %771
      %789 = vrot.lane.b32.xlu0 %v375, 48
      %v790 = vpop.permute.xlu0 %789
      %791 = vrot.lane.b32.xlu0 %v376, 48
      %v792 = vpop.permute.xlu0 %791
      %793 = vrot.lane.b32.xlu0 %v377, 48
      %v794 = vpop.permute.xlu0 %793
      %795 = vrot.lane.b32.xlu0 %v378, 48
      %v796 = vpop.permute.xlu0 %795
      %797 = vrot.lane.b32.xlu0 %v379, 48
      %v798 = vpop.permute.xlu0 %797
      %799 = vrot.lane.b32.xlu0 %v380, 48
      %v800 = vpop.permute.xlu0 %799
      %801 = vrot.lane.b32.xlu0 %v381, 48
      %v802 = vpop.permute.xlu0 %801
      %803 = vrot.lane.b32.xlu0 %v382, 48
      %v804 = vpop.permute.xlu0 %803
      %821 = vrot.lane.b32.xlu0 %v383, 64
      %v822 = vpop.permute.xlu0 %821
      %823 = vrot.lane.b32.xlu0 %v384, 64
      %v824 = vpop.permute.xlu0 %823
      %825 = vrot.lane.b32.xlu0 %v385, 64
      %v826 = vpop.permute.xlu0 %825
      %827 = vrot.lane.b32.xlu0 %v386, 64
      %v828 = vpop.permute.xlu0 %827
      %829 = vrot.lane.b32.xlu0 %v387, 64
      %v830 = vpop.permute.xlu0 %829
      %831 = vrot.lane.b32.xlu0 %v388, 64
      %v832 = vpop.permute.xlu0 %831
      %833 = vrot.lane.b32.xlu0 %v389, 64
      %v834 = vpop.permute.xlu0 %833
      %835 = vrot.lane.b32.xlu0 %v390, 64
      %v836 = vpop.permute.xlu0 %835
      %853 = vrot.lane.b32.xlu0 %v391, 80
      %v854 = vpop.permute.xlu0 %853
      %855 = vrot.lane.b32.xlu0 %v392, 80
      %v856 = vpop.permute.xlu0 %855
      %857 = vrot.lane.b32.xlu0 %v393, 80
      %v858 = vpop.permute.xlu0 %857
      %859 = vrot.lane.b32.xlu0 %v394, 80
      %v860 = vpop.permute.xlu0 %859
      %861 = vrot.lane.b32.xlu0 %v395, 80
      %v862 = vpop.permute.xlu0 %861
      %863 = vrot.lane.b32.xlu0 %v396, 80
      %v864 = vpop.permute.xlu0 %863
      %865 = vrot.lane.b32.xlu0 %v397, 80
      %v866 = vpop.permute.xlu0 %865
      %867 = vrot.lane.b32.xlu0 %v398, 80
      %v868 = vpop.permute.xlu0 %867
      %885 = vrot.lane.b32.xlu0 %v399, 96
      %v886 = vpop.permute.xlu0 %885
      %887 = vrot.lane.b32.xlu0 %v400, 96
      %v888 = vpop.permute.xlu0 %887
      %889 = vrot.lane.b32.xlu0 %v401, 96
      %v890 = vpop.permute.xlu0 %889
      %891 = vrot.lane.b32.xlu0 %v402, 96
      %v892 = vpop.permute.xlu0 %891
      %893 = vrot.lane.b32.xlu0 %v403, 96
      %v894 = vpop.permute.xlu0 %893
      %895 = vrot.lane.b32.xlu0 %v404, 96
      %v896 = vpop.permute.xlu0 %895
      %897 = vrot.lane.b32.xlu0 %v405, 96
      %v898 = vpop.permute.xlu0 %897
      %899 = vrot.lane.b32.xlu0 %v406, 96
      %v900 = vpop.permute.xlu0 %899
      %917 = vrot.lane.b32.xlu0 %v410, 112
      %v918 = vpop.permute.xlu0 %917
      %919 = vrot.lane.b32.xlu0 %v411, 112
      %v920 = vpop.permute.xlu0 %919
      %921 = vrot.lane.b32.xlu0 %v412, 112
      %v922 = vpop.permute.xlu0 %921
      %923 = vrot.lane.b32.xlu0 %v413, 112
      %v924 = vpop.permute.xlu0 %923
      %925 = vrot.lane.b32.xlu0 %v414, 112
      %v926 = vpop.permute.xlu0 %925
      %927 = vrot.lane.b32.xlu0 %v415, 112
      %v928 = vpop.permute.xlu0 %927
      %929 = vrot.lane.b32.xlu0 %v416, 112
      %v930 = vpop.permute.xlu0 %929
      %931 = vrot.lane.b32.xlu0 %v417, 112
      %v932 = vpop.permute.xlu0 %931
      %vm941 = vcmask 130048
      %v942 = vsel %vm941, %v281, %v502
      %v943 = vsel %vm941, %v282, %v504
      %v944 = vsel %vm941, %v283, %v506
      %v945 = vsel %vm941, %v284, %v508
      %v946 = vsel %vm941, %v285, %v510
      %v947 = vsel %vm941, %v286, %v512
      %v948 = vsel %vm941, %v287, %v514
      %v949 = vsel %vm941, %v288, %v516
      %vm950 = vcmask 261120
      %v951 = vsel %vm950, %v942, %v534
      %v952 = vsel %vm950, %v943, %v536
      %v953 = vsel %vm950, %v944, %v538
      %v954 = vsel %vm950, %v945, %v540
      %v955 = vsel %vm950, %v946, %v542
      %v956 = vsel %vm950, %v947, %v544
      %v957 = vsel %vm950, %v948, %v546
      %v958 = vsel %vm950, %v949, %v548
      %vm959 = vcmask 392192
      %v960 = vsel %vm959, %v951, %v566
      %v961 = vsel %vm959, %v952, %v568
      %v962 = vsel %vm959, %v953, %v570
      %v963 = vsel %vm959, %v954, %v572
      %v964 = vsel %vm959, %v955, %v574
      %v965 = vsel %vm959, %v956, %v576
      %v966 = vsel %vm959, %v957, %v578
      %v967 = vsel %vm959, %v958, %v580
      %vm968 = vcmask 523264
      %v969 = vsel %vm968, %v960, %v598
      %v970 = vsel %vm968, %v961, %v600
      %v971 = vsel %vm968, %v962, %v602
      %v972 = vsel %vm968, %v963, %v604
      %v973 = vsel %vm968, %v964, %v606
      %v974 = vsel %vm968, %v965, %v608
      %v975 = vsel %vm968, %v966, %v610
      %v976 = vsel %vm968, %v967, %v612
      %vm977 = vcmask 654336
      %v978 = vsel %vm977, %v969, %v630
      %v979 = vsel %vm977, %v970, %v632
      %v980 = vsel %vm977, %v971, %v634
      %v981 = vsel %vm977, %v972, %v636
      %v982 = vsel %vm977, %v973, %v638
      %v983 = vsel %vm977, %v974, %v640
      %v984 = vsel %vm977, %v975, %v642
      %v985 = vsel %vm977, %v976, %v644
      %vm986 = vcmask 785408
      %v987 = vsel %vm986, %v978, %v662
      %v988 = vsel %vm986, %v979, %v664
      %v989 = vsel %vm986, %v980, %v666
      %v990 = vsel %vm986, %v981, %v668
      %v991 = vsel %vm986, %v982, %v670
      %v992 = vsel %vm986, %v983, %v672
      %v993 = vsel %vm986, %v984, %v674
      %v994 = vsel %vm986, %v985, %v676
      %vm995 = vcmask 916480
      %v996 = vsel %vm995, %v987, %v694
      %v997 = vsel %vm995, %v988, %v696
      %v998 = vsel %vm995, %v989, %v698
      %v999 = vsel %vm995, %v990, %v700
      %v1000 = vsel %vm995, %v991, %v702
      %v1001 = vsel %vm995, %v992, %v704
      %v1002 = vsel %vm995, %v993, %v706
      %v1003 = vsel %vm995, %v994, %v708
      %v1004 = vsel %vm941, %v348, %v726
      %v1005 = vsel %vm941, %v349, %v728
      %v1006 = vsel %vm941, %v350, %v730
      %v1007 = vsel %vm941, %v351, %v732
      %v1008 = vsel %vm941, %v352, %v734
      %v1009 = vsel %vm941, %v353, %v736
      %v1010 = vsel %vm941, %v354, %v738
      %v1011 = vsel %vm941, %v355, %v740
      %v1012 = vsel %vm950, %v1004, %v758
      %v1013 = vsel %vm950, %v1005, %v760
      %v1014 = vsel %vm950, %v1006, %v762
      %v1015 = vsel %vm950, %v1007, %v764
      %v1016 = vsel %vm950, %v1008, %v766
      %v1017 = vsel %vm950, %v1009, %v768
      %v1018 = vsel %vm950, %v1010, %v770
      %v1019 = vsel %vm950, %v1011, %v772
      %v1020 = vsel %vm959, %v1012, %v790
      %v1021 = vsel %vm959, %v1013, %v792
      %v1022 = vsel %vm959, %v1014, %v794
      %v1023 = vsel %vm959, %v1015, %v796
      %v1024 = vsel %vm959, %v1016, %v798
      %v1025 = vsel %vm959, %v1017, %v800
      %v1026 = vsel %vm959, %v1018, %v802
      %v1027 = vsel %vm959, %v1019, %v804
      %v1028 = vsel %vm968, %v1020, %v822
      %v1029 = vsel %vm968, %v1021, %v824
      %v1030 = vsel %vm968, %v1022, %v826
      %v1031 = vsel %vm968, %v1023, %v828
      %v1032 = vsel %vm968, %v1024, %v830
      %v1033 = vsel %vm968, %v1025, %v832
      %v1034 = vsel %vm968, %v1026, %v834
      %v1035 = vsel %vm968, %v1027, %v836
      %v1036 = vsel %vm977, %v1028, %v854
      %v1037 = vsel %vm977, %v1029, %v856
      %v1038 = vsel %vm977, %v1030, %v858
      %v1039 = vsel %vm977, %v1031, %v860
      %v1040 = vsel %vm977, %v1032, %v862
      %v1041 = vsel %vm977, %v1033, %v864
      %v1042 = vsel %vm977, %v1034, %v866
      %v1043 = vsel %vm977, %v1035, %v868
      %v1044 = vsel %vm986, %v1036, %v886
      %v1045 = vsel %vm986, %v1037, %v888
      %v1046 = vsel %vm986, %v1038, %v890
      %v1047 = vsel %vm986, %v1039, %v892
      %v1048 = vsel %vm986, %v1040, %v894
      %v1049 = vsel %vm986, %v1041, %v896
      %v1050 = vsel %vm986, %v1042, %v898
      %v1051 = vsel %vm986, %v1043, %v900
      %v1052 = vsel %vm995, %v1044, %v918
      %v1053 = vsel %vm995, %v1045, %v920
      %v1054 = vsel %vm995, %v1046, %v922
      %v1055 = vsel %vm995, %v1047, %v924
      %v1056 = vsel %vm995, %v1048, %v926
      %v1057 = vsel %vm995, %v1049, %v928
      %v1058 = vsel %vm995, %v1050, %v930
      %v1059 = vsel %vm995, %v1051, %v932
      %1068 = vrot.lane.b32.xlu0 %v426, 16
      %v1069 = vpop.permute.xlu0 %1068
      %1070 = vrot.lane.b32.xlu0 %v427, 16
      %v1071 = vpop.permute.xlu0 %1070
      %1072 = vrot.lane.b32.xlu0 %v428, 16
      %v1073 = vpop.permute.xlu0 %1072
      %1074 = vrot.lane.b32.xlu0 %v429, 16
      %v1075 = vpop.permute.xlu0 %1074
      %1076 = vrot.lane.b32.xlu0 %v430, 16
      %v1077 = vpop.permute.xlu0 %1076
      %1078 = vrot.lane.b32.xlu0 %v431, 16
      %v1079 = vpop.permute.xlu0 %1078
      %1080 = vrot.lane.b32.xlu0 %v432, 16
      %v1081 = vpop.permute.xlu0 %1080
      %1082 = vrot.lane.b32.xlu0 %v433, 16
      %v1083 = vpop.permute.xlu0 %1082
      %1100 = vrot.lane.b32.xlu0 %v434, 32
      %v1101 = vpop.permute.xlu0 %1100
      %1102 = vrot.lane.b32.xlu0 %v435, 32
      %v1103 = vpop.permute.xlu0 %1102
      %1104 = vrot.lane.b32.xlu0 %v436, 32
      %v1105 = vpop.permute.xlu0 %1104
      %1106 = vrot.lane.b32.xlu0 %v437, 32
      %v1107 = vpop.permute.xlu0 %1106
      %1108 = vrot.lane.b32.xlu0 %v438, 32
      %v1109 = vpop.permute.xlu0 %1108
      %1110 = vrot.lane.b32.xlu0 %v439, 32
      %v1111 = vpop.permute.xlu0 %1110
      %1112 = vrot.lane.b32.xlu0 %v440, 32
      %v1113 = vpop.permute.xlu0 %1112
      %1114 = vrot.lane.b32.xlu0 %v441, 32
      %v1115 = vpop.permute.xlu0 %1114
      %1132 = vrot.lane.b32.xlu0 %v442, 48
      %v1133 = vpop.permute.xlu0 %1132
      %1134 = vrot.lane.b32.xlu0 %v443, 48
      %v1135 = vpop.permute.xlu0 %1134
      %1136 = vrot.lane.b32.xlu0 %v444, 48
      %v1137 = vpop.permute.xlu0 %1136
      %1138 = vrot.lane.b32.xlu0 %v445, 48
      %v1139 = vpop.permute.xlu0 %1138
      %1140 = vrot.lane.b32.xlu0 %v446, 48
      %v1141 = vpop.permute.xlu0 %1140
      %1142 = vrot.lane.b32.xlu0 %v447, 48
      %v1143 = vpop.permute.xlu0 %1142
      %1144 = vrot.lane.b32.xlu0 %v448, 48
      %v1145 = vpop.permute.xlu0 %1144
      %1146 = vrot.lane.b32.xlu0 %v449, 48
      %v1147 = vpop.permute.xlu0 %1146
      %1164 = vrot.lane.b32.xlu0 %v453, 64
      %v1165 = vpop.permute.xlu0 %1164
      %1166 = vrot.lane.b32.xlu0 %v454, 64
      %v1167 = vpop.permute.xlu0 %1166
      %1168 = vrot.lane.b32.xlu0 %v455, 64
      %v1169 = vpop.permute.xlu0 %1168
      %1170 = vrot.lane.b32.xlu0 %v456, 64
      %v1171 = vpop.permute.xlu0 %1170
      %1172 = vrot.lane.b32.xlu0 %v457, 64
      %v1173 = vpop.permute.xlu0 %1172
      %1174 = vrot.lane.b32.xlu0 %v458, 64
      %v1175 = vpop.permute.xlu0 %1174
      %1176 = vrot.lane.b32.xlu0 %v459, 64
      %v1177 = vpop.permute.xlu0 %1176
      %1178 = vrot.lane.b32.xlu0 %v460, 64
      %v1179 = vpop.permute.xlu0 %1178
      %1196 = vrot.lane.b32.xlu0 %v461, 80
      %v1197 = vpop.permute.xlu0 %1196
      %1198 = vrot.lane.b32.xlu0 %v462, 80
      %v1199 = vpop.permute.xlu0 %1198
      %1200 = vrot.lane.b32.xlu0 %v463, 80
      %v1201 = vpop.permute.xlu0 %1200
      %1202 = vrot.lane.b32.xlu0 %v464, 80
      %v1203 = vpop.permute.xlu0 %1202
      %1204 = vrot.lane.b32.xlu0 %v465, 80
      %v1205 = vpop.permute.xlu0 %1204
      %1206 = vrot.lane.b32.xlu0 %v466, 80
      %v1207 = vpop.permute.xlu0 %1206
      %1208 = vrot.lane.b32.xlu0 %v467, 80
      %v1209 = vpop.permute.xlu0 %1208
      %1210 = vrot.lane.b32.xlu0 %v468, 80
      %v1211 = vpop.permute.xlu0 %1210
      %1228 = vrot.lane.b32.xlu0 %v469, 96
      %v1229 = vpop.permute.xlu0 %1228
      %1230 = vrot.lane.b32.xlu0 %v470, 96
      %v1231 = vpop.permute.xlu0 %1230
      %1232 = vrot.lane.b32.xlu0 %v471, 96
      %v1233 = vpop.permute.xlu0 %1232
      %1234 = vrot.lane.b32.xlu0 %v472, 96
      %v1235 = vpop.permute.xlu0 %1234
      %1236 = vrot.lane.b32.xlu0 %v473, 96
      %v1237 = vpop.permute.xlu0 %1236
      %1238 = vrot.lane.b32.xlu0 %v474, 96
      %v1239 = vpop.permute.xlu0 %1238
      %1240 = vrot.lane.b32.xlu0 %v475, 96
      %v1241 = vpop.permute.xlu0 %1240
      %1242 = vrot.lane.b32.xlu0 %v476, 96
      %v1243 = vpop.permute.xlu0 %1242
      %1260 = vrot.lane.b32.xlu0 %v477, 112
      %v1261 = vpop.permute.xlu0 %1260
      %1262 = vrot.lane.b32.xlu0 %v478, 112
      %v1263 = vpop.permute.xlu0 %1262
      %1264 = vrot.lane.b32.xlu0 %v479, 112
      %v1265 = vpop.permute.xlu0 %1264
      %1266 = vrot.lane.b32.xlu0 %v480, 112
      %v1267 = vpop.permute.xlu0 %1266
      %1268 = vrot.lane.b32.xlu0 %v481, 112
      %v1269 = vpop.permute.xlu0 %1268
      %1270 = vrot.lane.b32.xlu0 %v482, 112
      %v1271 = vpop.permute.xlu0 %1270
      %1272 = vrot.lane.b32.xlu0 %v483, 112
      %v1273 = vpop.permute.xlu0 %1272
      %1274 = vrot.lane.b32.xlu0 %v484, 112
      %v1275 = vpop.permute.xlu0 %1274
      %v1284 = vsel %vm941, %v418, %v1069
      %v1285 = vsel %vm941, %v419, %v1071
      %v1286 = vsel %vm941, %v420, %v1073
      %v1287 = vsel %vm941, %v421, %v1075
      %v1288 = vsel %vm941, %v422, %v1077
      %v1289 = vsel %vm941, %v423, %v1079
      %v1290 = vsel %vm941, %v424, %v1081
      %v1291 = vsel %vm941, %v425, %v1083
      %v1292 = vsel %vm950, %v1284, %v1101
      %v1293 = vsel %vm950, %v1285, %v1103
      %v1294 = vsel %vm950, %v1286, %v1105
      %v1295 = vsel %vm950, %v1287, %v1107
      %v1296 = vsel %vm950, %v1288, %v1109
      %v1297 = vsel %vm950, %v1289, %v1111
      %v1298 = vsel %vm950, %v1290, %v1113
      %v1299 = vsel %vm950, %v1291, %v1115
      %v1300 = vsel %vm959, %v1292, %v1133
      %v1301 = vsel %vm959, %v1293, %v1135
      %v1302 = vsel %vm959, %v1294, %v1137
      %v1303 = vsel %vm959, %v1295, %v1139
      %v1304 = vsel %vm959, %v1296, %v1141
      %v1305 = vsel %vm959, %v1297, %v1143
      %v1306 = vsel %vm959, %v1298, %v1145
      %v1307 = vsel %vm959, %v1299, %v1147
      %v1308 = vsel %vm968, %v1300, %v1165
      %v1309 = vsel %vm968, %v1301, %v1167
      %v1310 = vsel %vm968, %v1302, %v1169
      %v1311 = vsel %vm968, %v1303, %v1171
      %v1312 = vsel %vm968, %v1304, %v1173
      %v1313 = vsel %vm968, %v1305, %v1175
      %v1314 = vsel %vm968, %v1306, %v1177
      %v1315 = vsel %vm968, %v1307, %v1179
      %v1316 = vsel %vm977, %v1308, %v1197
      %v1317 = vsel %vm977, %v1309, %v1199
      %v1318 = vsel %vm977, %v1310, %v1201
      %v1319 = vsel %vm977, %v1311, %v1203
      %v1320 = vsel %vm977, %v1312, %v1205
      %v1321 = vsel %vm977, %v1313, %v1207
      %v1322 = vsel %vm977, %v1314, %v1209
      %v1323 = vsel %vm977, %v1315, %v1211
      %v1324 = vsel %vm986, %v1316, %v1229
      %v1325 = vsel %vm986, %v1317, %v1231
      %v1326 = vsel %vm986, %v1318, %v1233
      %v1327 = vsel %vm986, %v1319, %v1235
      %v1328 = vsel %vm986, %v1320, %v1237
      %v1329 = vsel %vm986, %v1321, %v1239
      %v1330 = vsel %vm986, %v1322, %v1241
      %v1331 = vsel %vm986, %v1323, %v1243
      %v1332 = vsel %vm995, %v1324, %v1261
      %v1333 = vsel %vm995, %v1325, %v1263
      %v1334 = vsel %vm995, %v1326, %v1265
      %v1335 = vsel %vm995, %v1327, %v1267
      %v1336 = vsel %vm995, %v1328, %v1269
      %v1337 = vsel %vm995, %v1329, %v1271
      %v1338 = vsel %vm995, %v1330, %v1273
      %v1339 = vsel %vm995, %v1331, %v1275
      %v1340 = vld [vmem:[%s1] sm:$0xff]
      %v1341 = vld [vmem:[%s1 + $0x8] sm:$0xff]
      %v1342 = vld [vmem:[%s1 + $0x10] sm:$0xff]
      %v1343 = vld [vmem:[%s1 + $0x18] sm:$0xff]
      %v1344 = vld [vmem:[%s1 + $0x20] sm:$0xff]
      %v1345 = vld [vmem:[%s1 + $0x28] sm:$0xff]
      %v1346 = vld [vmem:[%s1 + $0x30] sm:$0xff]
      %v1347 = vld [vmem:[%s1 + $0x38] sm:$0xff]
      %v1348 = vld [vmem:[%s1 + $0x40] sm:$0xff]
      %v1349 = vld [vmem:[%s1 + $0x48] sm:$0xff]
      %v1350 = vld [vmem:[%s1 + $0x50] sm:$0xff]
      %v1351 = vld [vmem:[%s1 + $0x58] sm:$0xff]
      %v1352 = vld [vmem:[%s1 + $0x60] sm:$0xff]
      %v1353 = vld [vmem:[%s1 + $0x68] sm:$0xff]
      %v1354 = vld [vmem:[%s1 + $0x70] sm:$0xff]
      %v1355 = vld [vmem:[%s1 + $0x78] sm:$0xff]
      %v1356 = vld [vmem:[%s1 + $0x80] sm:$0xff]
      %v1357 = vld [vmem:[%s1 + $0x88] sm:$0xff]
      %v1358 = vld [vmem:[%s1 + $0x90] sm:$0xff]
      %v1359 = vld [vmem:[%s1 + $0x98] sm:$0xff]
      %v1360 = vld [vmem:[%s1 + $0xa0] sm:$0xff]
      %v1361 = vld [vmem:[%s1 + $0xa8] sm:$0xff]
      %v1362 = vld [vmem:[%s1 + $0xb0] sm:$0xff]
      %v1363 = vld [vmem:[%s1 + $0xb8] sm:$0xff]
      %v1364 = vld [vmem:[%s1 + $0xc0] sm:$0xff]
      %v1365 = vld [vmem:[%s1 + $0xc8] sm:$0xff]
      %v1366 = vld [vmem:[%s1 + $0xd0] sm:$0xff]
      %v1367 = vld [vmem:[%s1 + $0xd8] sm:$0xff]
      %v1368 = vld [vmem:[%s1 + $0xe0] sm:$0xff]
      %v1369 = vld [vmem:[%s1 + $0xe8] sm:$0xff]
      %v1370 = vld [vmem:[%s1 + $0xf0] sm:$0xff]
      %v1371 = vld [vmem:[%s1 + $0xf8] sm:$0xff]
      %v1372 = vld [vmem:[%s1 + $0x100] sm:$0xff]
      %v1373 = vld [vmem:[%s1 + $0x108] sm:$0xff]
      %v1374 = vld [vmem:[%s1 + $0x110] sm:$0xff]
      %v1375 = vld [vmem:[%s1 + $0x118] sm:$0xff]
      %v1376 = vld [vmem:[%s1 + $0x120] sm:$0xff]
      %v1377 = vld [vmem:[%s1 + $0x128] sm:$0xff]
      %v1378 = vld [vmem:[%s1 + $0x130] sm:$0xff]
      %v1379 = vld [vmem:[%s1 + $0x138] sm:$0xff]
      %v1380 = vld [vmem:[%s1 + $0x140] sm:$0xff]
      %v1381 = vld [vmem:[%s1 + $0x148] sm:$0xff]
      %v1382 = vld [vmem:[%s1 + $0x150] sm:$0xff]
      %v1383 = vld [vmem:[%s1 + $0x158] sm:$0xff]
      %v1384 = vld [vmem:[%s1 + $0x160] sm:$0xff]
      %v1385 = vld [vmem:[%s1 + $0x168] sm:$0xff]
      %v1386 = vld [vmem:[%s1 + $0x170] sm:$0xff]
      %v1387 = vld [vmem:[%s1 + $0x178] sm:$0xff]
      %v1388 = vld [vmem:[%s1 + $0x180] sm:$0xff]
      %v1389 = vld [vmem:[%s1 + $0x188] sm:$0xff]
      %v1390 = vld [vmem:[%s2] sm:$0x1]
      %v1392 = vperm.slane %v1390, 0
      %v1395 = vsel %vm941, %v485, 0
      %v1398 = vsel %vm941, %v486, 0
      %v1401 = vsel %vm941, %v487, 0
      %v1404 = vsel %vm941, %v488, 0
      %v1407 = vsel %vm941, %v489, 0
      %v1410 = vsel %vm941, %v490, 0
      %v1413 = vsel %vm941, %v491, 0
      %v1416 = vsel %vm941, %v492, 0
      %1418 = vmatpush.msra.mxu0 %v1355
      %1419 = vmatpush.msra.mxu0 %v1354
      %1420 = vmatpush.msra.mxu0 %v1353
      %1421 = vmatpush.msra.mxu0 %v1352
      %1422 = vmatpush.msra.mxu0 %v1351
      %1423 = vmatpush.msra.mxu0 %v1350
      %1424 = vmatpush.msra.mxu0 %v1349
      %1425 = vmatpush.msra.mxu0 %v1348
      %1426 = vmatpush.msra.mxu0 %v1347
      %1427 = vmatpush.msra.mxu0 %v1346
      %1428 = vmatpush.msra.mxu0 %v1345
      %1429 = vmatpush.msra.mxu0 %v1344
      %1430 = vmatpush.msra.mxu0 %v1343
      %1431 = vmatpush.msra.mxu0 %v1342
      %1432 = vmatpush.msra.mxu0 %v1341
      %1433 = vmatpush.msra.mxu0 %v1340
      %1434 = vmatmul.f32.gmra.mxu0 %v996
      %v1435 = vpop.f32.mrf.mxu0
      %v1436 = vadd.f32 %v1392, %v1435
      %1437 = vmatmul.f32.gmra.mxu0 %v997
      %v1438 = vpop.f32.mrf.mxu0
      %v1439 = vadd.f32 %v1392, %v1438
      %1440 = vmatmul.f32.gmra.mxu0 %v998
      %v1441 = vpop.f32.mrf.mxu0
      %v1442 = vadd.f32 %v1392, %v1441
      %1443 = vmatmul.f32.gmra.mxu0 %v999
      %v1444 = vpop.f32.mrf.mxu0
      %v1445 = vadd.f32 %v1392, %v1444
      %1446 = vmatmul.f32.gmra.mxu0 %v1000
      %v1447 = vpop.f32.mrf.mxu0
      %v1448 = vadd.f32 %v1392, %v1447
      %1449 = vmatmul.f32.gmra.mxu0 %v1001
      %v1450 = vpop.f32.mrf.mxu0
      %v1451 = vadd.f32 %v1392, %v1450
      %1452 = vmatmul.f32.gmra.mxu0 %v1002
      %v1453 = vpop.f32.mrf.mxu0
      %v1454 = vadd.f32 %v1392, %v1453
      %1455 = vmatmul.f32.gmra.mxu0 %v1003
      %v1456 = vpop.f32.mrf.mxu0
      %v1457 = vadd.f32 %v1392, %v1456
      %1458 = vdwg.mxu0
      %1459 = vmatpush.msra.mxu0 %v1371
      %1460 = vmatpush.msra.mxu0 %v1370
      %1461 = vmatpush.msra.mxu0 %v1369
      %1462 = vmatpush.msra.mxu0 %v1368
      %1463 = vmatpush.msra.mxu0 %v1367
      %1464 = vmatpush.msra.mxu0 %v1366
      %1465 = vmatpush.msra.mxu0 %v1365
      %1466 = vmatpush.msra.mxu0 %v1364
      %1467 = vmatpush.msra.mxu0 %v1363
      %1468 = vmatpush.msra.mxu0 %v1362
      %1469 = vmatpush.msra.mxu0 %v1361
      %1470 = vmatpush.msra.mxu0 %v1360
      %1471 = vmatpush.msra.mxu0 %v1359
      %1472 = vmatpush.msra.mxu0 %v1358
      %1473 = vmatpush.msra.mxu0 %v1357
      %1474 = vmatpush.msra.mxu0 %v1356
      %1475 = vmatmul.f32.gmra.mxu0 %v1052
      %v1476 = vpop.f32.mrf.mxu0
      %v1477 = vadd.f32 %v1436, %v1476
      %1478 = vmatmul.f32.gmra.mxu0 %v1053
      %v1479 = vpop.f32.mrf.mxu0
      %v1480 = vadd.f32 %v1439, %v1479
      %1481 = vmatmul.f32.gmra.mxu0 %v1054
      %v1482 = vpop.f32.mrf.mxu0
      %v1483 = vadd.f32 %v1442, %v1482
      %1484 = vmatmul.f32.gmra.mxu0 %v1055
      %v1485 = vpop.f32.mrf.mxu0
      %v1486 = vadd.f32 %v1445, %v1485
      %1487 = vmatmul.f32.gmra.mxu0 %v1056
      %v1488 = vpop.f32.mrf.mxu0
      %v1489 = vadd.f32 %v1448, %v1488
      %1490 = vmatmul.f32.gmra.mxu0 %v1057
      %v1491 = vpop.f32.mrf.mxu0
      %v1492 = vadd.f32 %v1451, %v1491
      %1493 = vmatmul.f32.gmra.mxu0 %v1058
      %v1494 = vpop.f32.mrf.mxu0
      %v1495 = vadd.f32 %v1454, %v1494
      %1496 = vmatmul.f32.gmra.mxu0 %v1059
      %v1497 = vpop.f32.mrf.mxu0
      %v1498 = vadd.f32 %v1457, %v1497
      %1499 = vdwg.mxu0
      %1500 = vmatpush.msra.mxu0 %v1387
      %1501 = vmatpush.msra.mxu0 %v1386
      %1502 = vmatpush.msra.mxu0 %v1385
      %1503 = vmatpush.msra.mxu0 %v1384
      %1504 = vmatpush.msra.mxu0 %v1383
      %1505 = vmatpush.msra.mxu0 %v1382
      %1506 = vmatpush.msra.mxu0 %v1381
      %1507 = vmatpush.msra.mxu0 %v1380
      %1508 = vmatpush.msra.mxu0 %v1379
      %1509 = vmatpush.msra.mxu0 %v1378
      %1510 = vmatpush.msra.mxu0 %v1377
      %1511 = vmatpush.msra.mxu0 %v1376
      %1512 = vmatpush.msra.mxu0 %v1375
      %1513 = vmatpush.msra.mxu0 %v1374
      %1514 = vmatpush.msra.mxu0 %v1373
      %1515 = vmatpush.msra.mxu0 %v1372
      %1516 = vmatmul.f32.gmra.mxu0 %v1332
      %v1517 = vpop.f32.mrf.mxu0
      %v1518 = vadd.f32 %v1477, %v1517
      %1519 = vmatmul.f32.gmra.mxu0 %v1333
      %v1520 = vpop.f32.mrf.mxu0
      %v1521 = vadd.f32 %v1480, %v1520
      %1522 = vmatmul.f32.gmra.mxu0 %v1334
      %v1523 = vpop.f32.mrf.mxu0
      %v1524 = vadd.f32 %v1483, %v1523
      %1525 = vmatmul.f32.gmra.mxu0 %v1335
      %v1526 = vpop.f32.mrf.mxu0
      %v1527 = vadd.f32 %v1486, %v1526
      %1528 = vmatmul.f32.gmra.mxu0 %v1336
      %v1529 = vpop.f32.mrf.mxu0
      %v1530 = vadd.f32 %v1489, %v1529
      %1531 = vmatmul.f32.gmra.mxu0 %v1337
      %v1532 = vpop.f32.mrf.mxu0
      %v1533 = vadd.f32 %v1492, %v1532
      %1534 = vmatmul.f32.gmra.mxu0 %v1338
      %v1535 = vpop.f32.mrf.mxu0
      %v1536 = vadd.f32 %v1495, %v1535
      %1537 = vmatmul.f32.gmra.mxu0 %v1339
      %v1538 = vpop.f32.mrf.mxu0
      %v1539 = vadd.f32 %v1498, %v1538
      %1540 = vdwg.mxu0
      %1541 = vmatpush.msra.mxu0 0.0
      %1542 = vmatpush.msra.mxu0 0.0
      %1543 = vmatpush.msra.mxu0 0.0
      %1544 = vmatpush.msra.mxu0 0.0
      %1545 = vmatpush.msra.mxu0 0.0
      %1546 = vmatpush.msra.mxu0 0.0
      %1547 = vmatpush.msra.mxu0 0.0
      %1548 = vmatpush.msra.mxu0 0.0
      %1549 = vmatpush.msra.mxu0 0.0
      %1550 = vmatpush.msra.mxu0 0.0
      %1551 = vmatpush.msra.mxu0 0.0
      %1552 = vmatpush.msra.mxu0 0.0
      %1553 = vmatpush.msra.mxu0 0.0
      %1554 = vmatpush.msra.mxu0 0.0
      %1555 = vmatpush.msra.mxu0 %v1389
      %1556 = vmatpush.msra.mxu0 %v1388
      %1557 = vmatmul.f32.gmra.mxu0 %v1395
      %v1558 = vpop.f32.mrf.mxu0
      %v1559 = vadd.f32 %v1518, %v1558
      %1560 = vmatmul.f32.gmra.mxu0 %v1398
      %v1561 = vpop.f32.mrf.mxu0
      %v1562 = vadd.f32 %v1521, %v1561
      %1563 = vmatmul.f32.gmra.mxu0 %v1401
      %v1564 = vpop.f32.mrf.mxu0
      %v1565 = vadd.f32 %v1524, %v1564
      %1566 = vmatmul.f32.gmra.mxu0 %v1404
      %v1567 = vpop.f32.mrf.mxu0
      %v1568 = vadd.f32 %v1527, %v1567
      %1569 = vmatmul.f32.gmra.mxu0 %v1407
      %v1570 = vpop.f32.mrf.mxu0
      %v1571 = vadd.f32 %v1530, %v1570
      %1572 = vmatmul.f32.gmra.mxu0 %v1410
      %v1573 = vpop.f32.mrf.mxu0
      %v1574 = vadd.f32 %v1533, %v1573
      %1575 = vmatmul.f32.gmra.mxu0 %v1413
      %v1576 = vpop.f32.mrf.mxu0
      %v1577 = vadd.f32 %v1536, %v1576
      %1578 = vmatmul.f32.gmra.mxu0 %v1416
      %v1579 = vpop.f32.mrf.mxu0
      %v1580 = vadd.f32 %v1539, %v1579
      %1581 = vdwg.mxu0
      %v1582 = vmax.f32 %v1559, 0.0
      %v1583 = vmax.f32 %v1562, 0.0
      %v1584 = vmax.f32 %v1565, 0.0
      %v1585 = vmax.f32 %v1568, 0.0
      %v1586 = vmax.f32 %v1571, 0.0
      %v1587 = vmax.f32 %v1574, 0.0
      %v1588 = vmax.f32 %v1577, 0.0
      %v1589 = vmax.f32 %v1580, 0.0
      %1590 = vst.msk [vmem:[#allocation2] sm:$0xff] %vm950, %v1582
      %1591 = vst.msk [vmem:[#allocation2 + $0x8] sm:$0xff] %vm950, %v1583
      %1592 = vst.msk [vmem:[#allocation2 + $0x10] sm:$0xff] %vm950, %v1584
      %1593 = vst.msk [vmem:[#allocation2 + $0x18] sm:$0xff] %vm950, %v1585
      %1594 = vst.msk [vmem:[#allocation2 + $0x20] sm:$0xff] %vm950, %v1586
      %1595 = vst.msk [vmem:[#allocation2 + $0x28] sm:$0xff] %vm950, %v1587
      %1596 = vst.msk [vmem:[#allocation2 + $0x30] sm:$0xff] %vm950, %v1588
      %1597 = vst.msk [vmem:[#allocation2 + $0x38] sm:$0xff] %vm950, %v1589
      %v1598 = vsel %vm950, %v1582, 0.0
      %v1599 = vsel %vm950, %v1583, 0.0
      %v1600 = vadd.f32 %v1598, %v1599
      %v1601 = vsel %vm950, %v1584, 0.0
      %v1602 = vadd.f32 %v1600, %v1601
      %v1603 = vsel %vm950, %v1585, 0.0
      %v1604 = vadd.f32 %v1602, %v1603
      %v1605 = vsel %vm950, %v1586, 0.0
      %v1606 = vadd.f32 %v1604, %v1605
      %v1607 = vsel %vm950, %v1587, 0.0
      %v1608 = vadd.f32 %v1606, %v1607
      %v1609 = vsel %vm950, %v1588, 0.0
      %v1610 = vadd.f32 %v1608, %v1609
      %v1611 = vsel %vm950, %v1589, 0.0
      %v1612 = vadd.f32 %v1610, %v1611
      %v1613 = vrot.slane %v1612, 4
      %v1614 = vadd.f32 %v1612, %v1613
      %v1615 = vrot.slane %v1614, 2
      %v1616 = vadd.f32 %v1614, %v1615
      %v1617 = vrot.slane %v1616, 1
      %v1618 = vadd.f32 %v1616, %v1617
      %v1619 = vadd.f32 %v1618, 0.0
      %1621 = vrot.lane.b32.xlu0 %v1619, 112
      %v1622 = vpop.permute.xlu0 %1621
      %v1624 = vadd.f32 %v1619, %v1622
      %v1625 = vmul.f32 %v1624, 0.015625
      %v1626 = vld [vmem:[%s3] sm:$0xff]
      %v1627 = vld [vmem:[%s3 + $0x8] sm:$0xff]
      %v1628 = vld [vmem:[%s4] sm:$0x1]
      %v1630 = vsel %vm941, %v1625, 0
      %1632 = vmatpush.msra.mxu0 0.0
      %1633 = vmatpush.msra.mxu0 0.0
      %1634 = vmatpush.msra.mxu0 0.0
      %1635 = vmatpush.msra.mxu0 0.0
      %1636 = vmatpush.msra.mxu0 0.0
      %1637 = vmatpush.msra.mxu0 0.0
      %1638 = vmatpush.msra.mxu0 0.0
      %1639 = vmatpush.msra.mxu0 0.0
      %1640 = vmatpush.msra.mxu0 0.0
      %1641 = vmatpush.msra.mxu0 0.0
      %1642 = vmatpush.msra.mxu0 0.0
      %1643 = vmatpush.msra.mxu0 0.0
      %1644 = vmatpush.msra.mxu0 0.0
      %1645 = vmatpush.msra.mxu0 0.0
      %1646 = vmatpush.msra.mxu0 %v1627
      %1647 = vmatpush.msra.mxu0 %v1626
      %1648 = vmatmul.f32.gmra.mxu0 %v1630
      %v1649 = vpop.f32.mrf.mxu0
      %v1650 = vadd.f32 %v1628, %v1649
      %1651 = vdwg.mxu0
      %v1652 = vld [vmem:[%s5] sm:$0xff]
      %v1653 = vld [vmem:[%s6] sm:$0x1]
      %vm1654 = vcmask 64512
      %v1656 = vsel %vm1654, %v1650, 0
      %1658 = vmatpush.msra.mxu0 0.0
      %1659 = vmatpush.msra.mxu0 0.0
      %1660 = vmatpush.msra.mxu0 0.0
      %1661 = vmatpush.msra.mxu0 0.0
      %1662 = vmatpush.msra.mxu0 0.0
      %1663 = vmatpush.msra.mxu0 0.0
      %1664 = vmatpush.msra.mxu0 0.0
      %1665 = vmatpush.msra.mxu0 0.0
      %1666 = vmatpush.msra.mxu0 0.0
      %1667 = vmatpush.msra.mxu0 0.0
      %1668 = vmatpush.msra.mxu0 0.0
      %1669 = vmatpush.msra.mxu0 0.0
      %1670 = vmatpush.msra.mxu0 0.0
      %1671 = vmatpush.msra.mxu0 0.0
      %1672 = vmatpush.msra.mxu0 0.0
      %1673 = vmatpush.msra.mxu0 %v1652
      %1674 = vmatmul.f32.gmra.mxu0 %v1656
      %v1675 = vpop.f32.mrf.mxu0
      %v1676 = vadd.f32 %v1653, %v1675
      %1677 = vdwg.mxu0
      %1679 = vrot.lane.b32.xlu0 %v1676, 112
      %v1680 = vpop.permute.xlu0 %1679
      %v1682 = vmax.f32 %v1676, %v1680
      %v1683 = vsub.f32 %v1676, %v1682
      %v1684 = vmul.f32 %v1683, 1.442695
      %v1685 = vpow.pop %v1684
      %1687 = vrot.lane.b32.xlu0 %v1682, 16
      %v1688 = vpop.permute.xlu0 %1687
      %v1690 = vsub.f32 %v1676, %v1688
      %v1691 = vmul.f32 %v1690, 1.442695
      %v1692 = vpow.pop %v1691
      %1694 = vrot.lane.b32.xlu0 %v1692, 112
      %v1695 = vpop.permute.xlu0 %1694
      %v1697 = vadd.f32 %v1685, %v1695
      %v1698 = vrcp.pop %v1697
      %v1699 = vmul.f32 %v1697, %v1698
      %v1700 = vsub.f32 2.0, %v1699
      %v1701 = vmul.f32 %v1698, %v1700
      %v1702 = vld [vmem:[#allocation2] sm:$0xff]
      %v1703 = vld [vmem:[#allocation2 + $0x8] sm:$0xff]
      %v1704 = vld [vmem:[#allocation2 + $0x10] sm:$0xff]
      %v1705 = vld [vmem:[#allocation2 + $0x18] sm:$0xff]
      %v1706 = vld [vmem:[#allocation2 + $0x20] sm:$0xff]
      %v1707 = vld [vmem:[#allocation2 + $0x28] sm:$0xff]
      %v1708 = vld [vmem:[#allocation2 + $0x30] sm:$0xff]
      %v1709 = vld [vmem:[#allocation2 + $0x38] sm:$0xff]
      %v1710 = vmul.f32 %v1685, %v1701
      %v1711 = vperm.slane %v1710, 0
      %v1712 = vmul.f32 %v1702, %v1711
      %v1713 = vmul.f32 %v1703, %v1711
      %v1714 = vmul.f32 %v1704, %v1711
      %v1715 = vmul.f32 %v1705, %v1711
      %v1716 = vmul.f32 %v1706, %v1711
      %v1717 = vmul.f32 %v1707, %v1711
      %v1718 = vmul.f32 %v1708, %v1711
      %v1719 = vmul.f32 %v1709, %v1711
      %1721 = vrot.lane.b32.xlu0 %v1701, 16
      %v1722 = vpop.permute.xlu0 %1721
      %v1724 = vmul.f32 %v1692, %v1722
      %v1725 = vperm.slane %v1724, 0
      %v1726 = vmul.f32 %v1702, %v1725
      %v1727 = vmul.f32 %v1703, %v1725
      %v1728 = vmul.f32 %v1704, %v1725
      %v1729 = vmul.f32 %v1705, %v1725
      %v1730 = vmul.f32 %v1706, %v1725
      %v1731 = vmul.f32 %v1707, %v1725
      %v1732 = vmul.f32 %v1708, %v1725
      %v1733 = vmul.f32 %v1709, %v1725
      %1742 = vrot.lane.b32.xlu0 %v1726, 112
      %v1743 = vpop.permute.xlu0 %1742
      %1744 = vrot.lane.b32.xlu0 %v1727, 112
      %v1745 = vpop.permute.xlu0 %1744
      %1746 = vrot.lane.b32.xlu0 %v1728, 112
      %v1747 = vpop.permute.xlu0 %1746
      %1748 = vrot.lane.b32.xlu0 %v1729, 112
      %v1749 = vpop.permute.xlu0 %1748
      %1750 = vrot.lane.b32.xlu0 %v1730, 112
      %v1751 = vpop.permute.xlu0 %1750
      %1752 = vrot.lane.b32.xlu0 %v1731, 112
      %v1753 = vpop.permute.xlu0 %1752
      %1754 = vrot.lane.b32.xlu0 %v1732, 112
      %v1755 = vpop.permute.xlu0 %1754
      %1756 = vrot.lane.b32.xlu0 %v1733, 112
      %v1757 = vpop.permute.xlu0 %1756
      %v1766 = vadd.f32 %v1712, %v1743
      %v1767 = vadd.f32 %v1713, %v1745
      %v1768 = vadd.f32 %v1714, %v1747
      %v1769 = vadd.f32 %v1715, %v1749
      %v1770 = vadd.f32 %v1716, %v1751
      %v1771 = vadd.f32 %v1717, %v1753
      %v1772 = vadd.f32 %v1718, %v1755
      %v1773 = vadd.f32 %v1719, %v1757
      %1774 = vst.msk [vmem:[%s278] sm:$0xff] %vm941, %v1766
      %1775 = vst.msk [vmem:[%s278 + $0x8] sm:$0xff] %vm941, %v1767
      %1776 = vst.msk [vmem:[%s278 + $0x10] sm:$0xff] %vm941, %v1768
      %1777 = vst.msk [vmem:[%s278 + $0x18] sm:$0xff] %vm941, %v1769
      %1778 = vst.msk [vmem:[%s278 + $0x20] sm:$0xff] %vm941, %v1770
      %1779 = vst.msk [vmem:[%s278 + $0x28] sm:$0xff] %vm941, %v1771
      %1780 = vst.msk [vmem:[%s278 + $0x30] sm:$0xff] %vm941, %v1772
      %1781 = vst.msk [vmem:[%s278 + $0x38] sm:$0xff] %vm941, %v1773
      %p1782 = scmp.lt.s32.totalorder %s18, 1
      %s1783 = scalar_select %p1782, %s18, 1
      %s1784 = smul.addr %s1783, 8
      %s1785 = smul.addr %s1784, 8
      %s1786 = scalar_lea.vmem %s7, %s1785
      // Predicated region
      $region49: #{tpu_custom_call.1} parent=47 // pred_check
        %p1787 = pneg %p188
      $region50: #{tpu_custom_call.1} parent=47 // pred_check_branch
        %1789 = sbr.rel (%p1787) target = $region52
      $region51: #{tpu_custom_call.1} parent=47 // pred_region
        _
      $region52: #{tpu_custom_call.1} parent=47 // pred_fallthru
        _
    $region48: #{tpu_custom_call.1} parent=5 // pred_fallthru
      _
    %p1790 = scmp.le.s32.totalorder 2, %s13
    // Predicated region
    $region53: #{tpu_custom_call.1} parent=5 // pred_check
      %p1791 = pneg %p1790
    $region54: #{tpu_custom_call.1} parent=5 // pred_check_branch
      %1793 = sbr.rel (%p1791) target = $region56
    $region55: #{tpu_custom_call.1} parent=5 // pred_region
      %s1794 = ssub.s32 %s13, 2
      // Predicated region
      $region57: #{tpu_custom_call.1} parent=55 // pred_check
        %p1795 = pneg %p194
      $region58: #{tpu_custom_call.1} parent=55 // pred_check_branch
        %1797 = sbr.rel (%p1795) target = $region60
      $region59: #{tpu_custom_call.1} parent=55 // pred_region
        %p1798 = scmp.lt.s32.totalorder %s19, 1
        %s1799 = scalar_select %p1798, %s19, 1
        %s1800 = smul.addr %s1799, 8
        %s1801 = smul.addr %s1800, 8
        %s1802 = scalar_lea.vmem %s7, %s1801
      $region60: #{tpu_custom_call.1} parent=55 // pred_fallthru
        _
    $region56: #{tpu_custom_call.1} parent=5 // pred_fallthru
      _
  $region6: #{tpu_custom_call.1} parent=0 // loop_footer
    %s17 = sadd.s32 1, %s13
  $region7: #{tpu_custom_call.1} parent=0 // loop_footer_branch
    %12 = sbr.rel target = $region3
  $region8: #{tpu_custom_call.1} parent=0 // loop_exit
    _

</llo_original>
